<compile_context>
chip_gen: v7x
topology: tpu7x:2x2x1
jax: 0.10.0
libtpu: 0.0.40
codegen_flags: <defaults>
</compile_context>

<pallas_src>
import functools

import jax
import jax.numpy as jnp
import numpy as np
from jax import lax
from jax.experimental import pallas as pl
from jax.experimental.pallas import tpu as pltpu

_LN_EPS = 1e-5


# ----------------------------------------------------------------------------
# Fused kernel: full (T_BLK-blocked) T-step, L-layer recurrence.
# ----------------------------------------------------------------------------
def _fused_lstm_kernel(xproj_ref, w_hbm_ref, b_ref, g4_ref, be4_ref, g1_ref,
                       be1_ref, m_ref, y_ref, w_vmem, hx_scr, cx_scr, dma_sem,
                       *, num_layers, hidden_size, t_block, compute_dtype):
    H, L = hidden_size, num_layers

    @pl.when(pl.program_id(0) == 0)
    def _init():
        # Single-buffered weight residency: ONE HBM->VMEM DMA for the whole
        # sequence (constant-index BlockSpec inputs would be double-buffered).
        cp = pltpu.make_async_copy(w_hbm_ref, w_vmem, dma_sem)
        cp.start()
        cp.wait()
        hx_scr[...] = jnp.zeros_like(hx_scr)
        cx_scr[...] = jnp.zeros_like(cx_scr)

    # Per-layer constants loaded once per grid step (hoisted out of the time
    # loop and out of every LayerNorm call site).  (1,F) shapes broadcast
    # implicitly in the VPU ops -- no explicit broadcast_to.
    m = m_ref[...]                                    # (4H,4H) block-mean matrix
    w_l = [w_vmem[l] for l in range(L)]               # (B,H,4H) compute_dtype
    b_l = [b_ref[l] for l in range(L)]                # (B,4H)  f32
    g4_l = [g4_ref[l] for l in range(L)]              # (1,4H)  f32
    be4_l = [be4_ref[l] for l in range(L)]
    g1_l = [g1_ref[l] for l in range(L)]              # (1,H)   f32
    be1_l = [be1_ref[l] for l in range(L)]

    def cell(l, x_part, hx, cx):
        # Recurrent matvec on the MXU: narrow (bf16) operands, f32 accumulation.
        # (For very small B a VPU mul-reduce formulation may win; kept on MXU.)
        rec = jnp.einsum('bqh,bhg->bqg',
                         hx.astype(compute_dtype)[:, None, :], w_l[l],
                         preferred_element_type=jnp.float32)[:, 0]
        gates = rec + b_l[l]
        if x_part is not None:                         # layer 0 only
            gates = gates + x_part
        # Fused LayerNorm over all 4 gates: per-gate mean / variance via two
        # tiny matmuls against a block-diagonal averaging matrix (stats in f32)
        # instead of 8 cross-lane reduces on sub-lane gate slices.
        mu = jnp.dot(gates, m, preferred_element_type=jnp.float32)
        cen = gates - mu
        var = jnp.dot(cen * cen, m, preferred_element_type=jnp.float32)
        gn = cen * lax.rsqrt(var + _LN_EPS) * g4_l[l] + be4_l[l]
        sig = jax.nn.sigmoid(gn)
        i_g = sig[:, 0 * H:1 * H]
        f_g = sig[:, 1 * H:2 * H]
        o_g = sig[:, 3 * H:4 * H]
        g_g = jnp.tanh(gn[:, 2 * H:3 * H])
        cx = f_g * cx + i_g * g_g
        # Cell-state LayerNorm (same shared gamma/beta as the gates).
        cmu = jnp.mean(cx, axis=-1, keepdims=True)
        cc = cx - cmu
        cvar = jnp.mean(cc * cc, axis=-1, keepdims=True)
        hy = o_g * jnp.tanh(cc * lax.rsqrt(cvar + _LN_EPS) * g1_l[l] + be1_l[l])
        return hy, cx

    def step(tt, carry):
        hx, cx = carry
        # Layer-0 input projection was hoisted out of the recurrence and
        # precomputed for all T in the wrapper; only the hidden part stays in
        # the serial loop.
        x_part = xproj_ref[tt]                         # (B,4H) f32
        for l in range(L):
            # Layers >= 1: cell input == shared hidden state, so W_ih was
            # pre-summed into the recurrent weight and no x term is needed.
            hx, cx = cell(l, x_part if l == 0 else None, hx, cx)
        y_ref[tt] = hx.astype(y_ref.dtype)
        return hx, cx

    # T_BLK time steps per grid iteration (amortizes per-grid-step overhead).
    hx, cx = lax.fori_loop(0, t_block, step, (hx_scr[...], cx_scr[...]),
                           unroll=True)
    hx_scr[...] = hx
    cx_scr[...] = cx


# ----------------------------------------------------------------------------
# Wrapper-side parameter preparation (shared by the kernel and the mixed ref).
# ----------------------------------------------------------------------------
def _prepare_params(generated_weights, ln_params, hidden_size, num_layers,
                    compute_dtype):
    H, L = hidden_size, num_layers
    # Layer-0 input-projection weight, pre-transposed for (B,T,Fin)x(B,Fin,4H).
    w_x0 = jnp.transpose(generated_weights['weight_ih_l0'],
                         (0, 2, 1)).astype(compute_dtype)           # (B,Fin0,4H)
    w_rec, b, g4, be4, g1, be1 = [], [], [], [], [], []
    for l in range(L):
        wih = generated_weights[f'weight_ih_l{l}']                  # (B,4H,Fin_l)
        whh = generated_weights[f'weight_hh_l{l}']                  # (B,4H,H)
        # Layer 0: only the hidden part stays in the recurrence (x part hoisted).
        # Layers >= 1: cell input equals hidden state -> pre-sum the weights.
        w = whh if l == 0 else wih + whh
        w_rec.append(jnp.transpose(w, (0, 2, 1)).astype(compute_dtype))  # (B,H,4H)
        b.append((generated_weights[f'bias_ih_l{l}']
                  + generated_weights[f'bias_hh_l{l}']).astype(jnp.float32))
        gamma, beta = ln_params[l]                                  # (1,H) each
        g1.append(gamma.astype(jnp.float32))
        be1.append(beta.astype(jnp.float32))
        g4.append(jnp.tile(gamma.astype(jnp.float32), (1, 4)))      # (1,4H)
        be4.append(jnp.tile(beta.astype(jnp.float32), (1, 4)))
    return dict(w_x0=w_x0,
                w_rec=jnp.stack(w_rec),                 # (L,B,H,4H) compute_dtype
                b=jnp.stack(b),                         # (L,B,4H)   f32
                g4=jnp.stack(g4), be4=jnp.stack(be4),   # (L,1,4H)   f32
                g1=jnp.stack(g1), be1=jnp.stack(be1))   # (L,1,H)    f32


def _input_projection(x, w_x0):
    # Hoisted layer-0 input projection for ALL time steps: one big matmul at
    # full MXU utilization instead of T serial 1-row matvecs in the recurrence.
    return jnp.einsum('btf,bfg->btg', x.astype(w_x0.dtype), w_x0,
                      preferred_element_type=jnp.float32,
                      precision=lax.Precision.HIGHEST)              # (B,T,4H) f32


def _const_spec(shape):
    """Full-array block whose block index never changes (stays in VMEM)."""
    return pl.BlockSpec(shape, lambda i: (0,) * len(shape))


# ----------------------------------------------------------------------------
# Wrapper: one pallas_call for the whole (T, num_layers) recurrence.
# ----------------------------------------------------------------------------
def custom_lstm_forward(x, generated_weights, ln_params, *, hidden_size,
                        num_layers, compute_dtype=jnp.bfloat16, t_block=4):
    B, T, _ = x.shape
    H, L = hidden_size, num_layers
    assert T % t_block == 0, "seq_len must be divisible by t_block"

    p = _prepare_params(generated_weights, ln_params, H, L, compute_dtype)
    # Time-major input projection stream: (T, B, 4H) f32.
    x_proj = jnp.transpose(_input_projection(x, p['w_x0']), (1, 0, 2))
    # Block-diagonal averaging matrix for the fused 4-gate LayerNorm stats.
    m_mat = jnp.kron(jnp.eye(4, dtype=jnp.float32),
                     jnp.full((H, H), 1.0 / H, jnp.float32))         # (4H,4H)

    kernel = functools.partial(_fused_lstm_kernel, num_layers=L, hidden_size=H,
                               t_block=t_block, compute_dtype=compute_dtype)

    y = pl.pallas_call(
        kernel,
        out_shape=jax.ShapeDtypeStruct((T, B, H), x.dtype),
        grid_spec=pltpu.PrefetchScalarGridSpec(
            num_scalar_prefetch=0,
            grid=(T // t_block,),
            in_specs=[
                # Streamed, time-blocked input projection.
                pl.BlockSpec((t_block, B, 4 * H), lambda i: (i, 0, 0)),
                # Weights stay in HBM and are copied ONCE into single-buffered
                # VMEM scratch at grid step 0 (no default double-buffering).
                pl.BlockSpec(memory_space=pl.ANY),
                # Small per-layer constants (few KB): constant-index resident
                # blocks; double-buffering these is irrelevant at any scale.
                _const_spec((L, B, 4 * H)),        # bias_ih + bias_hh
                _const_spec((L, 1, 4 * H)),        # gamma tiled over gates
                _const_spec((L, 1, 4 * H)),        # beta tiled over gates
                _const_spec((L, 1, H)),            # gamma (cell LN)
                _const_spec((L, 1, H)),            # beta  (cell LN)
                _const_spec((4 * H, 4 * H)),       # block-mean matrix
            ],
            out_specs=pl.BlockSpec((t_block, B, H), lambda i: (i, 0, 0)),
            scratch_shapes=[
                pltpu.VMEM((L, B, H, 4 * H), compute_dtype),  # resident weights
                pltpu.VMEM((B, H), jnp.float32),              # hx carry
                pltpu.VMEM((B, H), jnp.float32),              # cx carry
                pltpu.SemaphoreType.DMA(()),                  # weight-copy sem
            ],
        ),
        compiler_params=pltpu.CompilerParams(
            # The time axis is a true recurrence -> sequential ("arbitrary").
            # TODO(synk): on v7x add a leading "parallel" batch axis (weights
            # are per-example) for the 2nd TensorCore and tile the 4H axis of
            # the resident weights against the 64 MiB VMEM budget.
            dimension_semantics=("arbitrary",),
            vmem_limit_bytes=32 * 1024 * 1024,
        ),
    )(x_proj, p['w_rec'], p['b'], p['g4'], p['be4'], p['g1'], p['be1'], m_mat)

    return jnp.transpose(y, (1, 0, 2))                                # (B,T,H)


# ----------------------------------------------------------------------------
# Pure-JAX references.
# ----------------------------------------------------------------------------
def custom_lstm_reference(x, generated_weights, ln_params, hidden_size,
                          num_layers):
    """Float32 mirror of the PyTorch CustomLSTM forward (exact semantics)."""
    B, T, _ = x.shape
    H = hidden_size
    hp = lax.Precision.HIGHEST

    def ln(v, gamma, beta):
        mu = jnp.mean(v, axis=-1, keepdims=True)
        var = jnp.mean(jnp.square(v - mu), axis=-1, keepdims=True)
        return (v - mu) / jnp.sqrt(var + _LN_EPS) * gamma + beta

    hx = jnp.zeros((B, H), x.dtype)
    cx = jnp.zeros((B, H), x.dtype)
    outputs = []
    for t in range(T):
        xt = x[:, t, :]
        for l in range(num_layers):
            gamma, beta = ln_params[l]
            wih = generated_weights[f'weight_ih_l{l}']
            whh = generated_weights[f'weight_hh_l{l}']
            bih = generated_weights[f'bias_ih_l{l}']
            bhh = generated_weights[f'bias_hh_l{l}']
            gates = (jnp.einsum('bgf,bf->bg', wih, xt, precision=hp)
                     + jnp.einsum('bgh,bh->bg', whh, hx, precision=hp)
                     + bih + bhh)
            i = jax.nn.sigmoid(ln(gates[:, 0 * H:1 * H], gamma, beta))
            f = jax.nn.sigmoid(ln(gates[:, 1 * H:2 * H], gamma, beta))
            g = jnp.tanh(ln(gates[:, 2 * H:3 * H], gamma, beta))
            o = jax.nn.sigmoid(ln(gates[:, 3 * H:4 * H], gamma, beta))
            cx = f * cx + i * g
            xt = o * jnp.tanh(ln(cx, gamma, beta))
            hx = xt
        outputs.append(xt)
    return jnp.stack(outputs, axis=1)


def custom_lstm_reference_mixed(x, generated_weights, ln_params, hidden_size,
                                num_layers, compute_dtype):
    """Pure-JAX model of the kernel's mixed-precision numerics (bf16 MXU
    operands, f32 accumulation/state, pre-summed weights, hoisted layer-0
    projection).  Used to check the bf16 kernel path tightly; vs. the exact
    f32 reference it differs only by bf16 operand rounding."""
    B, T, _ = x.shape
    H, L = hidden_size, num_layers
    p = _prepare_params(generated_weights, ln_params, H, L, compute_dtype)
    x_proj = _input_projection(x, p['w_x0'])                         # (B,T,4H)

    def ln(v, gamma, beta):
        mu = jnp.mean(v, axis=-1, keepdims=True)
        c = v - mu
        var = jnp.mean(c * c, axis=-1, keepdims=True)
        return c * lax.rsqrt(var + _LN_EPS) * gamma + beta

    hx = jnp.zeros((B, H), jnp.float32)
    cx = jnp.zeros((B, H), jnp.float32)
    outputs = []
    for t in range(T):
        for l in range(L):
            gates = jnp.einsum('bh,bhg->bg', hx.astype(compute_dtype),
                               p['w_rec'][l],
                               preferred_element_type=jnp.float32) + p['b'][l]
            if l == 0:
                gates = gates + x_proj[:, t]
            gn = ln(gates.reshape(B, 4, H), p['g1'][l], p['be1'][l])
            i = jax.nn.sigmoid(gn[:, 0])
            f = jax.nn.sigmoid(gn[:, 1])
            g = jnp.tanh(gn[:, 2])
            o = jax.nn.sigmoid(gn[:, 3])
            cx = f * cx + i * g
            hx = o * jnp.tanh(ln(cx, p['g1'][l], p['be1'][l]))
        outputs.append(hx)
    return jnp.stack(outputs, axis=1).astype(x.dtype)


if __name__ == "__main__":
    B, T, INPUT_SIZE, HIDDEN, NUM_LAYERS = 2, 8, 16, 32, 2

    key = jax.random.PRNGKey(0)
    key, kx = jax.random.split(key)
    x = jax.random.normal(kx, (B, T, INPUT_SIZE), jnp.float32)

    # Deterministic "generated" (hypernetwork-style, per-example) weights,
    # gate order [i, f, g, o] along the 4H axis.
    generated_weights = {}
    for l in range(NUM_LAYERS):
        fin = INPUT_SIZE if l == 0 else HIDDEN
        key, k1, k2, k3, k4 = jax.random.split(key, 5)
        generated_weights[f'weight_ih_l{l}'] = 0.1 * jax.random.normal(
            k1, (B, 4 * HIDDEN, fin), jnp.float32)
        generated_weights[f'weight_hh_l{l}'] = 0.1 * jax.random.normal(
            k2, (B, 4 * HIDDEN, HIDDEN), jnp.float32)
        generated_weights[f'bias_ih_l{l}'] = 0.1 * jax.random.normal(
            k3, (B, 4 * HIDDEN), jnp.float32)
        generated_weights[f'bias_hh_l{l}'] = 0.1 * jax.random.normal(
            k4, (B, 4 * HIDDEN), jnp.float32)

    # nn.LayerNorm default init: gamma=1, beta=0 (one LayerNorm per cell/layer).
    ln_params = [(jnp.ones((1, HIDDEN), jnp.float32),
                  jnp.zeros((1, HIDDEN), jnp.float32))
                 for _ in range(NUM_LAYERS)]

    ref = custom_lstm_reference(x, generated_weights, ln_params, HIDDEN,
                                NUM_LAYERS)

    # 1) Exact-semantics check: f32 compute path vs. PyTorch-mirroring ref.
    fwd_f32 = jax.jit(functools.partial(
        custom_lstm_forward, hidden_size=HIDDEN, num_layers=NUM_LAYERS,
        compute_dtype=jnp.float32, t_block=4))
    out_f32 = jax.block_until_ready(fwd_f32(x, generated_weights, ln_params))
    np.testing.assert_allclose(np.asarray(out_f32), np.asarray(ref),
                               rtol=3e-4, atol=3e-4)

    # 2) Performance configuration: bf16 MXU operands (per perf review),
    #    checked tightly against a pure-JAX model of the same mixed-precision
    #    numerics (vs. f32 it differs only by bf16 operand rounding).
    fwd_bf16 = jax.jit(functools.partial(
        custom_lstm_forward, hidden_size=HIDDEN, num_layers=NUM_LAYERS,
        compute_dtype=jnp.bfloat16, t_block=4))
    out_bf16 = jax.block_until_ready(fwd_bf16(x, generated_weights, ln_params))
    ref_mixed = custom_lstm_reference_mixed(x, generated_weights, ln_params,
                                            HIDDEN, NUM_LAYERS, jnp.bfloat16)
    np.testing.assert_allclose(np.asarray(out_bf16), np.asarray(ref_mixed),
                               rtol=1e-2, atol=1e-2)

    assert out_f32.shape == (B, T, HIDDEN) and out_bf16.shape == (B, T, HIDDEN)
    print("KERNEL_OK")
</pallas_src>

<mosaic_0001>
module attributes {stable_mosaic.version = 11 : i64} {
  func.func @_fused_lstm_kernel(%arg0: i32, %arg1: memref<4x2x128xf32, #tpu.memory_space<vmem>>, %arg2: memref<2x2x32x128xf32, #tpu.memory_space<any>>, %arg3: memref<2x2x128xf32, #tpu.memory_space<vmem>>, %arg4: memref<2x1x128xf32, #tpu.memory_space<vmem>>, %arg5: memref<2x1x128xf32, #tpu.memory_space<vmem>>, %arg6: memref<2x1x32xf32, #tpu.memory_space<vmem>>, %arg7: memref<2x1x32xf32, #tpu.memory_space<vmem>>, %arg8: memref<128x128xf32, #tpu.memory_space<vmem>>, %arg9: memref<4x2x32xf32, #tpu.memory_space<vmem>>, %arg10: memref<2x2x32x128xf32, #tpu.memory_space<vmem>>, %arg11: memref<2x32xf32, #tpu.memory_space<vmem>>, %arg12: memref<2x32xf32, #tpu.memory_space<vmem>>, %arg13: memref<!tpu.dma_semaphore, #tpu.memory_space<semaphore_mem>>) attributes {dimension_semantics = [#tpu.dimension_semantics<arbitrary>], iteration_bounds = array<i64: 2>, scalar_prefetch = 0 : i64, scratch_operands = 4 : i64, tpu.core_type = #tpu.core_type<tc>, window_params = [{transform_indices = @transform_0, window_bounds = array<i64: 4, 2, 128>}, {}, {pipeline_mode = #tpu.pipeline_mode<synchronous>, transform_indices = @transform_2, window_bounds = array<i64: 2, 2, 128>}, {pipeline_mode = #tpu.pipeline_mode<synchronous>, transform_indices = @transform_3, window_bounds = array<i64: 2, 1, 128>}, {pipeline_mode = #tpu.pipeline_mode<synchronous>, transform_indices = @transform_4, window_bounds = array<i64: 2, 1, 128>}, {pipeline_mode = #tpu.pipeline_mode<synchronous>, transform_indices = @transform_5, window_bounds = array<i64: 2, 1, 32>}, {pipeline_mode = #tpu.pipeline_mode<synchronous>, transform_indices = @transform_6, window_bounds = array<i64: 2, 1, 32>}, {pipeline_mode = #tpu.pipeline_mode<synchronous>, transform_indices = @transform_7, window_bounds = array<i64: 128, 128>}, {transform_indices = @transform_8, window_bounds = array<i64: 4, 2, 32>}]} {
    %c0_i32 = arith.constant 0 : i32
    %0 = arith.cmpi eq, %arg0, %c0_i32 : i32
    %1 = arith.extui %0 : i1 to i32
    %c0_i32_0 = arith.constant 0 : i32
    %2 = arith.cmpi ne, %1, %c0_i32_0 : i32
    scf.if %2 {
      tpu.enqueue_dma source(%arg2 : memref<2x2x32x128xf32, #tpu.memory_space<any>>) target(%arg10 : memref<2x2x32x128xf32, #tpu.memory_space<vmem>>) target_semaphore(%arg13 : memref<!tpu.dma_semaphore, #tpu.memory_space<semaphore_mem>>)
      tpu.wait_dma2 semaphore(%arg13 : memref<!tpu.dma_semaphore, #tpu.memory_space<semaphore_mem>>) src(%arg2 : memref<2x2x32x128xf32, #tpu.memory_space<any>>) dst(%arg10 : memref<2x2x32x128xf32, #tpu.memory_space<vmem>>)
      %cst_143 = arith.constant 0.000000e+00 : f32
      %472 = vector.broadcast %cst_143 : f32 to vector<2x32xf32>
      %c0_144 = arith.constant 0 : index
      %c0_145 = arith.constant 0 : index
      %473 = vector.load %arg11[%c0_144, %c0_145] : memref<2x32xf32, #tpu.memory_space<vmem>>, vector<2x32xf32>
      tpu.vector_store %arg11[%c0_144, %c0_145], %472 {strides = array<i32>} : memref<2x32xf32, #tpu.memory_space<vmem>>, vector<2x32xf32>,
      %cst_146 = arith.constant 0.000000e+00 : f32
      %474 = vector.broadcast %cst_146 : f32 to vector<2x32xf32>
      %c0_147 = arith.constant 0 : index
      %c0_148 = arith.constant 0 : index
      %475 = vector.load %arg12[%c0_147, %c0_148] : memref<2x32xf32, #tpu.memory_space<vmem>>, vector<2x32xf32>
      tpu.vector_store %arg12[%c0_147, %c0_148], %474 {strides = array<i32>} : memref<2x32xf32, #tpu.memory_space<vmem>>, vector<2x32xf32>,
    } else {
    }
    %c0 = arith.constant 0 : index
    %c0_1 = arith.constant 0 : index
    %3 = vector.load %arg8[%c0, %c0_1] : memref<128x128xf32, #tpu.memory_space<vmem>>, vector<128x128xf32>
    %c0_2 = arith.constant 0 : index
    %c0_3 = arith.constant 0 : index
    %c0_4 = arith.constant 0 : index
    %c0_5 = arith.constant 0 : index
    %4 = vector.load %arg10[%c0_2, %c0_3, %c0_4, %c0_5] : memref<2x2x32x128xf32, #tpu.memory_space<vmem>>, vector<1x2x32x128xf32>
    %5 = vector.shape_cast %4 : vector<1x2x32x128xf32> to vector<2x32x128xf32>
    %c1 = arith.constant 1 : index
    %c0_6 = arith.constant 0 : index
    %c0_7 = arith.constant 0 : index
    %c0_8 = arith.constant 0 : index
    %6 = vector.load %arg10[%c1, %c0_6, %c0_7, %c0_8] : memref<2x2x32x128xf32, #tpu.memory_space<vmem>>, vector<1x2x32x128xf32>
    %7 = vector.shape_cast %6 : vector<1x2x32x128xf32> to vector<2x32x128xf32>
    %c0_9 = arith.constant 0 : index
    %c0_10 = arith.constant 0 : index
    %c0_11 = arith.constant 0 : index
    %8 = vector.load %arg3[%c0_9, %c0_10, %c0_11] : memref<2x2x128xf32, #tpu.memory_space<vmem>>, vector<1x2x128xf32>
    %9 = vector.shape_cast %8 : vector<1x2x128xf32> to vector<2x128xf32>
    %c1_12 = arith.constant 1 : index
    %c0_13 = arith.constant 0 : index
    %c0_14 = arith.constant 0 : index
    %10 = vector.load %arg3[%c1_12, %c0_13, %c0_14] : memref<2x2x128xf32, #tpu.memory_space<vmem>>, vector<1x2x128xf32>
    %11 = vector.shape_cast %10 : vector<1x2x128xf32> to vector<2x128xf32>
    %c0_15 = arith.constant 0 : index
    %c0_16 = arith.constant 0 : index
    %c0_17 = arith.constant 0 : index
    %12 = vector.load %arg4[%c0_15, %c0_16, %c0_17] : memref<2x1x128xf32, #tpu.memory_space<vmem>>, vector<1x1x128xf32>
    %13 = vector.shape_cast %12 : vector<1x1x128xf32> to vector<1x128xf32>
    %c1_18 = arith.constant 1 : index
    %c0_19 = arith.constant 0 : index
    %c0_20 = arith.constant 0 : index
    %14 = vector.load %arg4[%c1_18, %c0_19, %c0_20] : memref<2x1x128xf32, #tpu.memory_space<vmem>>, vector<1x1x128xf32>
    %15 = vector.shape_cast %14 : vector<1x1x128xf32> to vector<1x128xf32>
    %c0_21 = arith.constant 0 : index
    %c0_22 = arith.constant 0 : index
    %c0_23 = arith.constant 0 : index
    %16 = vector.load %arg5[%c0_21, %c0_22, %c0_23] : memref<2x1x128xf32, #tpu.memory_space<vmem>>, vector<1x1x128xf32>
    %17 = vector.shape_cast %16 : vector<1x1x128xf32> to vector<1x128xf32>
    %c1_24 = arith.constant 1 : index
    %c0_25 = arith.constant 0 : index
    %c0_26 = arith.constant 0 : index
    %18 = vector.load %arg5[%c1_24, %c0_25, %c0_26] : memref<2x1x128xf32, #tpu.memory_space<vmem>>, vector<1x1x128xf32>
    %19 = vector.shape_cast %18 : vector<1x1x128xf32> to vector<1x128xf32>
    %c0_27 = arith.constant 0 : index
    %c0_28 = arith.constant 0 : index
    %c0_29 = arith.constant 0 : index
    %20 = vector.load %arg6[%c0_27, %c0_28, %c0_29] : memref<2x1x32xf32, #tpu.memory_space<vmem>>, vector<1x1x32xf32>
    %21 = vector.shape_cast %20 : vector<1x1x32xf32> to vector<1x32xf32>
    %c1_30 = arith.constant 1 : index
    %c0_31 = arith.constant 0 : index
    %c0_32 = arith.constant 0 : index
    %22 = vector.load %arg6[%c1_30, %c0_31, %c0_32] : memref<2x1x32xf32, #tpu.memory_space<vmem>>, vector<1x1x32xf32>
    %23 = vector.shape_cast %22 : vector<1x1x32xf32> to vector<1x32xf32>
    %c0_33 = arith.constant 0 : index
    %c0_34 = arith.constant 0 : index
    %c0_35 = arith.constant 0 : index
    %24 = vector.load %arg7[%c0_33, %c0_34, %c0_35] : memref<2x1x32xf32, #tpu.memory_space<vmem>>, vector<1x1x32xf32>
    %25 = vector.shape_cast %24 : vector<1x1x32xf32> to vector<1x32xf32>
    %c1_36 = arith.constant 1 : index
    %c0_37 = arith.constant 0 : index
    %c0_38 = arith.constant 0 : index
    %26 = vector.load %arg7[%c1_36, %c0_37, %c0_38] : memref<2x1x32xf32, #tpu.memory_space<vmem>>, vector<1x1x32xf32>
    %27 = vector.shape_cast %26 : vector<1x1x32xf32> to vector<1x32xf32>
    %c0_39 = arith.constant 0 : index
    %c0_40 = arith.constant 0 : index
    %28 = vector.load %arg11[%c0_39, %c0_40] : memref<2x32xf32, #tpu.memory_space<vmem>>, vector<2x32xf32>
    %c0_41 = arith.constant 0 : index
    %c0_42 = arith.constant 0 : index
    %29 = vector.load %arg12[%c0_41, %c0_42] : memref<2x32xf32, #tpu.memory_space<vmem>>, vector<2x32xf32>
    %c0_i32_43 = arith.constant 0 : i32
    %30 = arith.index_cast %c0_i32_43 : i32 to index
    %c0_44 = arith.constant 0 : index
    %c0_45 = arith.constant 0 : index
    %31 = vector.load %arg1[%30, %c0_44, %c0_45] : memref<4x2x128xf32, #tpu.memory_space<vmem>>, vector<1x2x128xf32>
    %32 = vector.shape_cast %31 : vector<1x2x128xf32> to vector<2x128xf32>
    %33 = vector.shape_cast %28 : vector<2x32xf32> to vector<2x1x32xf32>
    "tpu.trace_start"() <{level = 10 : i32, message = "bqh,bhg->bqg"}> : () -> ()
    %cst = arith.constant dense<0.000000e+00> : vector<2x1x128xf32>
    %34 = tpu.matmul %33, %5, %cst {dimension_numbers = #tpu.dot_dimension_numbers<[2], [1], [1], [2], [0, 0, 0, 1, 1, 2], [0], [0]>} : vector<2x1x32xf32>, vector<2x32x128xf32>, vector<2x1x128xf32> -> vector<2x1x128xf32>
    "tpu.trace_stop"() : () -> ()
    %35 = vector.shape_cast %34 : vector<2x1x128xf32> to vector<2x128xf32>
    %36 = arith.addf %35, %9 : vector<2x128xf32>
    %37 = arith.addf %36, %32 : vector<2x128xf32>
    %cst_46 = arith.constant dense<0.000000e+00> : vector<2x128xf32>
    %38 = tpu.matmul %37, %3, %cst_46 {dimension_numbers = #tpu.dot_dimension_numbers<[1], [0], [0], [1], [0, 0, 1, 1], [], []>} : vector<2x128xf32>, vector<128x128xf32>, vector<2x128xf32> -> vector<2x128xf32>
    %39 = arith.subf %37, %38 : vector<2x128xf32>
    %40 = arith.mulf %39, %39 : vector<2x128xf32>
    %cst_47 = arith.constant dense<0.000000e+00> : vector<2x128xf32>
    %41 = tpu.matmul %40, %3, %cst_47 {dimension_numbers = #tpu.dot_dimension_numbers<[1], [0], [0], [1], [0, 0, 1, 1], [], []>} : vector<2x128xf32>, vector<128x128xf32>, vector<2x128xf32> -> vector<2x128xf32>
    %cst_48 = arith.constant 9.99999974E-6 : f32
    %42 = vector.broadcast %cst_48 : f32 to vector<2x128xf32>
    %43 = arith.addf %41, %42 : vector<2x128xf32>
    %44 = math.rsqrt %43 : vector<2x128xf32>
    %45 = arith.mulf %39, %44 : vector<2x128xf32>
    %46 = vector.broadcast %13 : vector<1x128xf32> to vector<2x128xf32>
    %47 = arith.mulf %45, %46 : vector<2x128xf32>
    %48 = vector.broadcast %17 : vector<1x128xf32> to vector<2x128xf32>
    %49 = arith.addf %47, %48 : vector<2x128xf32>
    %50 = arith.negf %49 : vector<2x128xf32>
    %51 = math.exp %50 : vector<2x128xf32>
    %cst_49 = arith.constant 1.000000e+00 : f32
    %52 = vector.broadcast %cst_49 : f32 to vector<2x128xf32>
    %53 = arith.addf %52, %51 : vector<2x128xf32>
    %54 = arith.divf %52, %53 : vector<2x128xf32>
    %55 = vector.extract_strided_slice %54 {offsets = [0, 0], sizes = [2, 32], strides = [1, 1]} : vector<2x128xf32> to vector<2x32xf32>
    %56 = vector.extract_strided_slice %54 {offsets = [0, 32], sizes = [2, 32], strides = [1, 1]} : vector<2x128xf32> to vector<2x32xf32>
    %57 = vector.extract_strided_slice %54 {offsets = [0, 96], sizes = [2, 32], strides = [1, 1]} : vector<2x128xf32> to vector<2x32xf32>
    %58 = vector.extract_strided_slice %49 {offsets = [0, 64], sizes = [2, 32], strides = [1, 1]} : vector<2x128xf32> to vector<2x32xf32>
    %59 = math.tanh %58 : vector<2x32xf32>
    %60 = arith.mulf %56, %29 : vector<2x32xf32>
    %61 = arith.mulf %55, %59 : vector<2x32xf32>
    %62 = arith.addf %60, %61 : vector<2x32xf32>
    %cst_50 = arith.constant dense<0.000000e+00> : vector<2xf32>
    %63 = vector.multi_reduction <add>, %62, %cst_50 [1] : vector<2x32xf32> to vector<2xf32>
    %64 = vector.shape_cast %63 : vector<2xf32> to vector<2x1xf32>
    %cst_51 = arith.constant 3.200000e+01 : f32
    %65 = vector.broadcast %cst_51 : f32 to vector<2x1xf32>
    %66 = arith.divf %64, %65 : vector<2x1xf32>
    %67 = vector.broadcast %66 : vector<2x1xf32> to vector<2x32xf32>
    %68 = arith.subf %62, %67 : vector<2x32xf32>
    %69 = arith.mulf %68, %68 : vector<2x32xf32>
    %cst_52 = arith.constant dense<0.000000e+00> : vector<2xf32>
    %70 = vector.multi_reduction <add>, %69, %cst_52 [1] : vector<2x32xf32> to vector<2xf32>
    %71 = vector.shape_cast %70 : vector<2xf32> to vector<2x1xf32>
    %cst_53 = arith.constant 3.200000e+01 : f32
    %72 = vector.broadcast %cst_53 : f32 to vector<2x1xf32>
    %73 = arith.divf %71, %72 : vector<2x1xf32>
    %cst_54 = arith.constant 9.99999974E-6 : f32
    %74 = vector.broadcast %cst_54 : f32 to vector<2x1xf32>
    %75 = arith.addf %73, %74 : vector<2x1xf32>
    %76 = math.rsqrt %75 : vector<2x1xf32>
    %77 = vector.broadcast %76 : vector<2x1xf32> to vector<2x32xf32>
    %78 = arith.mulf %68, %77 : vector<2x32xf32>
    %79 = vector.broadcast %21 : vector<1x32xf32> to vector<2x32xf32>
    %80 = arith.mulf %78, %79 : vector<2x32xf32>
    %81 = vector.broadcast %25 : vector<1x32xf32> to vector<2x32xf32>
    %82 = arith.addf %80, %81 : vector<2x32xf32>
    %83 = math.tanh %82 : vector<2x32xf32>
    %84 = arith.mulf %57, %83 : vector<2x32xf32>
    %85 = vector.shape_cast %84 : vector<2x32xf32> to vector<2x1x32xf32>
    "tpu.trace_start"() <{level = 10 : i32, message = "bqh,bhg->bqg"}> : () -> ()
    %cst_55 = arith.constant dense<0.000000e+00> : vector<2x1x128xf32>
    %86 = tpu.matmul %85, %7, %cst_55 {dimension_numbers = #tpu.dot_dimension_numbers<[2], [1], [1], [2], [0, 0, 0, 1, 1, 2], [0], [0]>} : vector<2x1x32xf32>, vector<2x32x128xf32>, vector<2x1x128xf32> -> vector<2x1x128xf32>
    "tpu.trace_stop"() : () -> ()
    %87 = vector.shape_cast %86 : vector<2x1x128xf32> to vector<2x128xf32>
    %88 = arith.addf %87, %11 : vector<2x128xf32>
    %cst_56 = arith.constant dense<0.000000e+00> : vector<2x128xf32>
    %89 = tpu.matmul %88, %3, %cst_56 {dimension_numbers = #tpu.dot_dimension_numbers<[1], [0], [0], [1], [0, 0, 1, 1], [], []>} : vector<2x128xf32>, vector<128x128xf32>, vector<2x128xf32> -> vector<2x128xf32>
    %90 = arith.subf %88, %89 : vector<2x128xf32>
    %91 = arith.mulf %90, %90 : vector<2x128xf32>
    %cst_57 = arith.constant dense<0.000000e+00> : vector<2x128xf32>
    %92 = tpu.matmul %91, %3, %cst_57 {dimension_numbers = #tpu.dot_dimension_numbers<[1], [0], [0], [1], [0, 0, 1, 1], [], []>} : vector<2x128xf32>, vector<128x128xf32>, vector<2x128xf32> -> vector<2x128xf32>
    %cst_58 = arith.constant 9.99999974E-6 : f32
    %93 = vector.broadcast %cst_58 : f32 to vector<2x128xf32>
    %94 = arith.addf %92, %93 : vector<2x128xf32>
    %95 = math.rsqrt %94 : vector<2x128xf32>
    %96 = arith.mulf %90, %95 : vector<2x128xf32>
    %97 = vector.broadcast %15 : vector<1x128xf32> to vector<2x128xf32>
    %98 = arith.mulf %96, %97 : vector<2x128xf32>
    %99 = vector.broadcast %19 : vector<1x128xf32> to vector<2x128xf32>
    %100 = arith.addf %98, %99 : vector<2x128xf32>
    %101 = arith.negf %100 : vector<2x128xf32>
    %102 = math.exp %101 : vector<2x128xf32>
    %cst_59 = arith.constant 1.000000e+00 : f32
    %103 = vector.broadcast %cst_59 : f32 to vector<2x128xf32>
    %104 = arith.addf %103, %102 : vector<2x128xf32>
    %105 = arith.divf %103, %104 : vector<2x128xf32>
    %106 = vector.extract_strided_slice %105 {offsets = [0, 0], sizes = [2, 32], strides = [1, 1]} : vector<2x128xf32> to vector<2x32xf32>
    %107 = vector.extract_strided_slice %105 {offsets = [0, 32], sizes = [2, 32], strides = [1, 1]} : vector<2x128xf32> to vector<2x32xf32>
    %108 = vector.extract_strided_slice %105 {offsets = [0, 96], sizes = [2, 32], strides = [1, 1]} : vector<2x128xf32> to vector<2x32xf32>
    %109 = vector.extract_strided_slice %100 {offsets = [0, 64], sizes = [2, 32], strides = [1, 1]} : vector<2x128xf32> to vector<2x32xf32>
    %110 = math.tanh %109 : vector<2x32xf32>
    %111 = arith.mulf %107, %62 : vector<2x32xf32>
    %112 = arith.mulf %106, %110 : vector<2x32xf32>
    %113 = arith.addf %111, %112 : vector<2x32xf32>
    %cst_60 = arith.constant dense<0.000000e+00> : vector<2xf32>
    %114 = vector.multi_reduction <add>, %113, %cst_60 [1] : vector<2x32xf32> to vector<2xf32>
    %115 = vector.shape_cast %114 : vector<2xf32> to vector<2x1xf32>
    %cst_61 = arith.constant 3.200000e+01 : f32
    %116 = vector.broadcast %cst_61 : f32 to vector<2x1xf32>
    %117 = arith.divf %115, %116 : vector<2x1xf32>
    %118 = vector.broadcast %117 : vector<2x1xf32> to vector<2x32xf32>
    %119 = arith.subf %113, %118 : vector<2x32xf32>
    %120 = arith.mulf %119, %119 : vector<2x32xf32>
    %cst_62 = arith.constant dense<0.000000e+00> : vector<2xf32>
    %121 = vector.multi_reduction <add>, %120, %cst_62 [1] : vector<2x32xf32> to vector<2xf32>
    %122 = vector.shape_cast %121 : vector<2xf32> to vector<2x1xf32>
    %cst_63 = arith.constant 3.200000e+01 : f32
    %123 = vector.broadcast %cst_63 : f32 to vector<2x1xf32>
    %124 = arith.divf %122, %123 : vector<2x1xf32>
    %cst_64 = arith.constant 9.99999974E-6 : f32
    %125 = vector.broadcast %cst_64 : f32 to vector<2x1xf32>
    %126 = arith.addf %124, %125 : vector<2x1xf32>
    %127 = math.rsqrt %126 : vector<2x1xf32>
    %128 = vector.broadcast %127 : vector<2x1xf32> to vector<2x32xf32>
    %129 = arith.mulf %119, %128 : vector<2x32xf32>
    %130 = vector.broadcast %23 : vector<1x32xf32> to vector<2x32xf32>
    %131 = arith.mulf %129, %130 : vector<2x32xf32>
    %132 = vector.broadcast %27 : vector<1x32xf32> to vector<2x32xf32>
    %133 = arith.addf %131, %132 : vector<2x32xf32>
    %134 = math.tanh %133 : vector<2x32xf32>
    %135 = arith.mulf %108, %134 : vector<2x32xf32>
    %136 = arith.index_cast %c0_i32_43 : i32 to index
    %c0_65 = arith.constant 0 : index
    %c0_66 = arith.constant 0 : index
    %137 = vector.load %arg9[%136, %c0_65, %c0_66] : memref<4x2x32xf32, #tpu.memory_space<vmem>>, vector<1x2x32xf32>
    %138 = vector.shape_cast %137 : vector<1x2x32xf32> to vector<2x32xf32>
    %139 = vector.shape_cast %135 : vector<2x32xf32> to vector<1x2x32xf32>
    tpu.vector_store %arg9[%136, %c0_65, %c0_66], %139 {strides = array<i32>} : memref<4x2x32xf32, #tpu.memory_space<vmem>>, vector<1x2x32xf32>,
    %c1_i32 = arith.constant 1 : i32
    %140 = arith.index_cast %c1_i32 : i32 to index
    %c0_67 = arith.constant 0 : index
    %c0_68 = arith.constant 0 : index
    %141 = vector.load %arg1[%140, %c0_67, %c0_68] : memref<4x2x128xf32, #tpu.memory_space<vmem>>, vector<1x2x128xf32>
    %142 = vector.shape_cast %141 : vector<1x2x128xf32> to vector<2x128xf32>
    %143 = vector.shape_cast %135 : vector<2x32xf32> to vector<2x1x32xf32>
    "tpu.trace_start"() <{level = 10 : i32, message = "bqh,bhg->bqg"}> : () -> ()
    %cst_69 = arith.constant dense<0.000000e+00> : vector<2x1x128xf32>
    %144 = tpu.matmul %143, %5, %cst_69 {dimension_numbers = #tpu.dot_dimension_numbers<[2], [1], [1], [2], [0, 0, 0, 1, 1, 2], [0], [0]>} : vector<2x1x32xf32>, vector<2x32x128xf32>, vector<2x1x128xf32> -> vector<2x1x128xf32>
    "tpu.trace_stop"() : () -> ()
    %145 = vector.shape_cast %144 : vector<2x1x128xf32> to vector<2x128xf32>
    %146 = arith.addf %145, %9 : vector<2x128xf32>
    %147 = arith.addf %146, %142 : vector<2x128xf32>
    %cst_70 = arith.constant dense<0.000000e+00> : vector<2x128xf32>
    %148 = tpu.matmul %147, %3, %cst_70 {dimension_numbers = #tpu.dot_dimension_numbers<[1], [0], [0], [1], [0, 0, 1, 1], [], []>} : vector<2x128xf32>, vector<128x128xf32>, vector<2x128xf32> -> vector<2x128xf32>
    %149 = arith.subf %147, %148 : vector<2x128xf32>
    %150 = arith.mulf %149, %149 : vector<2x128xf32>
    %cst_71 = arith.constant dense<0.000000e+00> : vector<2x128xf32>
    %151 = tpu.matmul %150, %3, %cst_71 {dimension_numbers = #tpu.dot_dimension_numbers<[1], [0], [0], [1], [0, 0, 1, 1], [], []>} : vector<2x128xf32>, vector<128x128xf32>, vector<2x128xf32> -> vector<2x128xf32>
    %cst_72 = arith.constant 9.99999974E-6 : f32
    %152 = vector.broadcast %cst_72 : f32 to vector<2x128xf32>
    %153 = arith.addf %151, %152 : vector<2x128xf32>
    %154 = math.rsqrt %153 : vector<2x128xf32>
    %155 = arith.mulf %149, %154 : vector<2x128xf32>
    %156 = vector.broadcast %13 : vector<1x128xf32> to vector<2x128xf32>
    %157 = arith.mulf %155, %156 : vector<2x128xf32>
    %158 = vector.broadcast %17 : vector<1x128xf32> to vector<2x128xf32>
    %159 = arith.addf %157, %158 : vector<2x128xf32>
    %160 = arith.negf %159 : vector<2x128xf32>
    %161 = math.exp %160 : vector<2x128xf32>
    %cst_73 = arith.constant 1.000000e+00 : f32
    %162 = vector.broadcast %cst_73 : f32 to vector<2x128xf32>
    %163 = arith.addf %162, %161 : vector<2x128xf32>
    %164 = arith.divf %162, %163 : vector<2x128xf32>
    %165 = vector.extract_strided_slice %164 {offsets = [0, 0], sizes = [2, 32], strides = [1, 1]} : vector<2x128xf32> to vector<2x32xf32>
    %166 = vector.extract_strided_slice %164 {offsets = [0, 32], sizes = [2, 32], strides = [1, 1]} : vector<2x128xf32> to vector<2x32xf32>
    %167 = vector.extract_strided_slice %164 {offsets = [0, 96], sizes = [2, 32], strides = [1, 1]} : vector<2x128xf32> to vector<2x32xf32>
    %168 = vector.extract_strided_slice %159 {offsets = [0, 64], sizes = [2, 32], strides = [1, 1]} : vector<2x128xf32> to vector<2x32xf32>
    %169 = math.tanh %168 : vector<2x32xf32>
    %170 = arith.mulf %166, %113 : vector<2x32xf32>
    %171 = arith.mulf %165, %169 : vector<2x32xf32>
    %172 = arith.addf %170, %171 : vector<2x32xf32>
    %cst_74 = arith.constant dense<0.000000e+00> : vector<2xf32>
    %173 = vector.multi_reduction <add>, %172, %cst_74 [1] : vector<2x32xf32> to vector<2xf32>
    %174 = vector.shape_cast %173 : vector<2xf32> to vector<2x1xf32>
    %cst_75 = arith.constant 3.200000e+01 : f32
    %175 = vector.broadcast %cst_75 : f32 to vector<2x1xf32>
    %176 = arith.divf %174, %175 : vector<2x1xf32>
    %177 = vector.broadcast %176 : vector<2x1xf32> to vector<2x32xf32>
    %178 = arith.subf %172, %177 : vector<2x32xf32>
    %179 = arith.mulf %178, %178 : vector<2x32xf32>
    %cst_76 = arith.constant dense<0.000000e+00> : vector<2xf32>
    %180 = vector.multi_reduction <add>, %179, %cst_76 [1] : vector<2x32xf32> to vector<2xf32>
    %181 = vector.shape_cast %180 : vector<2xf32> to vector<2x1xf32>
    %cst_77 = arith.constant 3.200000e+01 : f32
    %182 = vector.broadcast %cst_77 : f32 to vector<2x1xf32>
    %183 = arith.divf %181, %182 : vector<2x1xf32>
    %cst_78 = arith.constant 9.99999974E-6 : f32
    %184 = vector.broadcast %cst_78 : f32 to vector<2x1xf32>
    %185 = arith.addf %183, %184 : vector<2x1xf32>
    %186 = math.rsqrt %185 : vector<2x1xf32>
    %187 = vector.broadcast %186 : vector<2x1xf32> to vector<2x32xf32>
    %188 = arith.mulf %178, %187 : vector<2x32xf32>
    %189 = vector.broadcast %21 : vector<1x32xf32> to vector<2x32xf32>
    %190 = arith.mulf %188, %189 : vector<2x32xf32>
    %191 = vector.broadcast %25 : vector<1x32xf32> to vector<2x32xf32>
    %192 = arith.addf %190, %191 : vector<2x32xf32>
    %193 = math.tanh %192 : vector<2x32xf32>
    %194 = arith.mulf %167, %193 : vector<2x32xf32>
    %195 = vector.shape_cast %194 : vector<2x32xf32> to vector<2x1x32xf32>
    "tpu.trace_start"() <{level = 10 : i32, message = "bqh,bhg->bqg"}> : () -> ()
    %cst_79 = arith.constant dense<0.000000e+00> : vector<2x1x128xf32>
    %196 = tpu.matmul %195, %7, %cst_79 {dimension_numbers = #tpu.dot_dimension_numbers<[2], [1], [1], [2], [0, 0, 0, 1, 1, 2], [0], [0]>} : vector<2x1x32xf32>, vector<2x32x128xf32>, vector<2x1x128xf32> -> vector<2x1x128xf32>
    "tpu.trace_stop"() : () -> ()
    %197 = vector.shape_cast %196 : vector<2x1x128xf32> to vector<2x128xf32>
    %198 = arith.addf %197, %11 : vector<2x128xf32>
    %cst_80 = arith.constant dense<0.000000e+00> : vector<2x128xf32>
    %199 = tpu.matmul %198, %3, %cst_80 {dimension_numbers = #tpu.dot_dimension_numbers<[1], [0], [0], [1], [0, 0, 1, 1], [], []>} : vector<2x128xf32>, vector<128x128xf32>, vector<2x128xf32> -> vector<2x128xf32>
    %200 = arith.subf %198, %199 : vector<2x128xf32>
    %201 = arith.mulf %200, %200 : vector<2x128xf32>
    %cst_81 = arith.constant dense<0.000000e+00> : vector<2x128xf32>
    %202 = tpu.matmul %201, %3, %cst_81 {dimension_numbers = #tpu.dot_dimension_numbers<[1], [0], [0], [1], [0, 0, 1, 1], [], []>} : vector<2x128xf32>, vector<128x128xf32>, vector<2x128xf32> -> vector<2x128xf32>
    %cst_82 = arith.constant 9.99999974E-6 : f32
    %203 = vector.broadcast %cst_82 : f32 to vector<2x128xf32>
    %204 = arith.addf %202, %203 : vector<2x128xf32>
    %205 = math.rsqrt %204 : vector<2x128xf32>
    %206 = arith.mulf %200, %205 : vector<2x128xf32>
    %207 = vector.broadcast %15 : vector<1x128xf32> to vector<2x128xf32>
    %208 = arith.mulf %206, %207 : vector<2x128xf32>
    %209 = vector.broadcast %19 : vector<1x128xf32> to vector<2x128xf32>
    %210 = arith.addf %208, %209 : vector<2x128xf32>
    %211 = arith.negf %210 : vector<2x128xf32>
    %212 = math.exp %211 : vector<2x128xf32>
    %cst_83 = arith.constant 1.000000e+00 : f32
    %213 = vector.broadcast %cst_83 : f32 to vector<2x128xf32>
    %214 = arith.addf %213, %212 : vector<2x128xf32>
    %215 = arith.divf %213, %214 : vector<2x128xf32>
    %216 = vector.extract_strided_slice %215 {offsets = [0, 0], sizes = [2, 32], strides = [1, 1]} : vector<2x128xf32> to vector<2x32xf32>
    %217 = vector.extract_strided_slice %215 {offsets = [0, 32], sizes = [2, 32], strides = [1, 1]} : vector<2x128xf32> to vector<2x32xf32>
    %218 = vector.extract_strided_slice %215 {offsets = [0, 96], sizes = [2, 32], strides = [1, 1]} : vector<2x128xf32> to vector<2x32xf32>
    %219 = vector.extract_strided_slice %210 {offsets = [0, 64], sizes = [2, 32], strides = [1, 1]} : vector<2x128xf32> to vector<2x32xf32>
    %220 = math.tanh %219 : vector<2x32xf32>
    %221 = arith.mulf %217, %172 : vector<2x32xf32>
    %222 = arith.mulf %216, %220 : vector<2x32xf32>
    %223 = arith.addf %221, %222 : vector<2x32xf32>
    %cst_84 = arith.constant dense<0.000000e+00> : vector<2xf32>
    %224 = vector.multi_reduction <add>, %223, %cst_84 [1] : vector<2x32xf32> to vector<2xf32>
    %225 = vector.shape_cast %224 : vector<2xf32> to vector<2x1xf32>
    %cst_85 = arith.constant 3.200000e+01 : f32
    %226 = vector.broadcast %cst_85 : f32 to vector<2x1xf32>
    %227 = arith.divf %225, %226 : vector<2x1xf32>
    %228 = vector.broadcast %227 : vector<2x1xf32> to vector<2x32xf32>
    %229 = arith.subf %223, %228 : vector<2x32xf32>
    %230 = arith.mulf %229, %229 : vector<2x32xf32>
    %cst_86 = arith.constant dense<0.000000e+00> : vector<2xf32>
    %231 = vector.multi_reduction <add>, %230, %cst_86 [1] : vector<2x32xf32> to vector<2xf32>
    %232 = vector.shape_cast %231 : vector<2xf32> to vector<2x1xf32>
    %cst_87 = arith.constant 3.200000e+01 : f32
    %233 = vector.broadcast %cst_87 : f32 to vector<2x1xf32>
    %234 = arith.divf %232, %233 : vector<2x1xf32>
    %cst_88 = arith.constant 9.99999974E-6 : f32
    %235 = vector.broadcast %cst_88 : f32 to vector<2x1xf32>
    %236 = arith.addf %234, %235 : vector<2x1xf32>
    %237 = math.rsqrt %236 : vector<2x1xf32>
    %238 = vector.broadcast %237 : vector<2x1xf32> to vector<2x32xf32>
    %239 = arith.mulf %229, %238 : vector<2x32xf32>
    %240 = vector.broadcast %23 : vector<1x32xf32> to vector<2x32xf32>
    %241 = arith.mulf %239, %240 : vector<2x32xf32>
    %242 = vector.broadcast %27 : vector<1x32xf32> to vector<2x32xf32>
    %243 = arith.addf %241, %242 : vector<2x32xf32>
    %244 = math.tanh %243 : vector<2x32xf32>
    %245 = arith.mulf %218, %244 : vector<2x32xf32>
    %246 = arith.index_cast %c1_i32 : i32 to index
    %c0_89 = arith.constant 0 : index
    %c0_90 = arith.constant 0 : index
    %247 = vector.load %arg9[%246, %c0_89, %c0_90] : memref<4x2x32xf32, #tpu.memory_space<vmem>>, vector<1x2x32xf32>
    %248 = vector.shape_cast %247 : vector<1x2x32xf32> to vector<2x32xf32>
    %249 = vector.shape_cast %245 : vector<2x32xf32> to vector<1x2x32xf32>
    tpu.vector_store %arg9[%246, %c0_89, %c0_90], %249 {strides = array<i32>} : memref<4x2x32xf32, #tpu.memory_space<vmem>>, vector<1x2x32xf32>,
    %c2_i32 = arith.constant 2 : i32
    %250 = arith.index_cast %c2_i32 : i32 to index
    %c0_91 = arith.constant 0 : index
    %c0_92 = arith.constant 0 : index
    %251 = vector.load %arg1[%250, %c0_91, %c0_92] : memref<4x2x128xf32, #tpu.memory_space<vmem>>, vector<1x2x128xf32>
    %252 = vector.shape_cast %251 : vector<1x2x128xf32> to vector<2x128xf32>
    %253 = vector.shape_cast %245 : vector<2x32xf32> to vector<2x1x32xf32>
    "tpu.trace_start"() <{level = 10 : i32, message = "bqh,bhg->bqg"}> : () -> ()
    %cst_93 = arith.constant dense<0.000000e+00> : vector<2x1x128xf32>
    %254 = tpu.matmul %253, %5, %cst_93 {dimension_numbers = #tpu.dot_dimension_numbers<[2], [1], [1], [2], [0, 0, 0, 1, 1, 2], [0], [0]>} : vector<2x1x32xf32>, vector<2x32x128xf32>, vector<2x1x128xf32> -> vector<2x1x128xf32>
    "tpu.trace_stop"() : () -> ()
    %255 = vector.shape_cast %254 : vector<2x1x128xf32> to vector<2x128xf32>
    %256 = arith.addf %255, %9 : vector<2x128xf32>
    %257 = arith.addf %256, %252 : vector<2x128xf32>
    %cst_94 = arith.constant dense<0.000000e+00> : vector<2x128xf32>
    %258 = tpu.matmul %257, %3, %cst_94 {dimension_numbers = #tpu.dot_dimension_numbers<[1], [0], [0], [1], [0, 0, 1, 1], [], []>} : vector<2x128xf32>, vector<128x128xf32>, vector<2x128xf32> -> vector<2x128xf32>
    %259 = arith.subf %257, %258 : vector<2x128xf32>
    %260 = arith.mulf %259, %259 : vector<2x128xf32>
    %cst_95 = arith.constant dense<0.000000e+00> : vector<2x128xf32>
    %261 = tpu.matmul %260, %3, %cst_95 {dimension_numbers = #tpu.dot_dimension_numbers<[1], [0], [0], [1], [0, 0, 1, 1], [], []>} : vector<2x128xf32>, vector<128x128xf32>, vector<2x128xf32> -> vector<2x128xf32>
    %cst_96 = arith.constant 9.99999974E-6 : f32
    %262 = vector.broadcast %cst_96 : f32 to vector<2x128xf32>
    %263 = arith.addf %261, %262 : vector<2x128xf32>
    %264 = math.rsqrt %263 : vector<2x128xf32>
    %265 = arith.mulf %259, %264 : vector<2x128xf32>
    %266 = vector.broadcast %13 : vector<1x128xf32> to vector<2x128xf32>
    %267 = arith.mulf %265, %266 : vector<2x128xf32>
    %268 = vector.broadcast %17 : vector<1x128xf32> to vector<2x128xf32>
    %269 = arith.addf %267, %268 : vector<2x128xf32>
    %270 = arith.negf %269 : vector<2x128xf32>
    %271 = math.exp %270 : vector<2x128xf32>
    %cst_97 = arith.constant 1.000000e+00 : f32
    %272 = vector.broadcast %cst_97 : f32 to vector<2x128xf32>
    %273 = arith.addf %272, %271 : vector<2x128xf32>
    %274 = arith.divf %272, %273 : vector<2x128xf32>
    %275 = vector.extract_strided_slice %274 {offsets = [0, 0], sizes = [2, 32], strides = [1, 1]} : vector<2x128xf32> to vector<2x32xf32>
    %276 = vector.extract_strided_slice %274 {offsets = [0, 32], sizes = [2, 32], strides = [1, 1]} : vector<2x128xf32> to vector<2x32xf32>
    %277 = vector.extract_strided_slice %274 {offsets = [0, 96], sizes = [2, 32], strides = [1, 1]} : vector<2x128xf32> to vector<2x32xf32>
    %278 = vector.extract_strided_slice %269 {offsets = [0, 64], sizes = [2, 32], strides = [1, 1]} : vector<2x128xf32> to vector<2x32xf32>
    %279 = math.tanh %278 : vector<2x32xf32>
    %280 = arith.mulf %276, %223 : vector<2x32xf32>
    %281 = arith.mulf %275, %279 : vector<2x32xf32>
    %282 = arith.addf %280, %281 : vector<2x32xf32>
    %cst_98 = arith.constant dense<0.000000e+00> : vector<2xf32>
    %283 = vector.multi_reduction <add>, %282, %cst_98 [1] : vector<2x32xf32> to vector<2xf32>
    %284 = vector.shape_cast %283 : vector<2xf32> to vector<2x1xf32>
    %cst_99 = arith.constant 3.200000e+01 : f32
    %285 = vector.broadcast %cst_99 : f32 to vector<2x1xf32>
    %286 = arith.divf %284, %285 : vector<2x1xf32>
    %287 = vector.broadcast %286 : vector<2x1xf32> to vector<2x32xf32>
    %288 = arith.subf %282, %287 : vector<2x32xf32>
    %289 = arith.mulf %288, %288 : vector<2x32xf32>
    %cst_100 = arith.constant dense<0.000000e+00> : vector<2xf32>
    %290 = vector.multi_reduction <add>, %289, %cst_100 [1] : vector<2x32xf32> to vector<2xf32>
    %291 = vector.shape_cast %290 : vector<2xf32> to vector<2x1xf32>
    %cst_101 = arith.constant 3.200000e+01 : f32
    %292 = vector.broadcast %cst_101 : f32 to vector<2x1xf32>
    %293 = arith.divf %291, %292 : vector<2x1xf32>
    %cst_102 = arith.constant 9.99999974E-6 : f32
    %294 = vector.broadcast %cst_102 : f32 to vector<2x1xf32>
    %295 = arith.addf %293, %294 : vector<2x1xf32>
    %296 = math.rsqrt %295 : vector<2x1xf32>
    %297 = vector.broadcast %296 : vector<2x1xf32> to vector<2x32xf32>
    %298 = arith.mulf %288, %297 : vector<2x32xf32>
    %299 = vector.broadcast %21 : vector<1x32xf32> to vector<2x32xf32>
    %300 = arith.mulf %298, %299 : vector<2x32xf32>
    %301 = vector.broadcast %25 : vector<1x32xf32> to vector<2x32xf32>
    %302 = arith.addf %300, %301 : vector<2x32xf32>
    %303 = math.tanh %302 : vector<2x32xf32>
    %304 = arith.mulf %277, %303 : vector<2x32xf32>
    %305 = vector.shape_cast %304 : vector<2x32xf32> to vector<2x1x32xf32>
    "tpu.trace_start"() <{level = 10 : i32, message = "bqh,bhg->bqg"}> : () -> ()
    %cst_103 = arith.constant dense<0.000000e+00> : vector<2x1x128xf32>
    %306 = tpu.matmul %305, %7, %cst_103 {dimension_numbers = #tpu.dot_dimension_numbers<[2], [1], [1], [2], [0, 0, 0, 1, 1, 2], [0], [0]>} : vector<2x1x32xf32>, vector<2x32x128xf32>, vector<2x1x128xf32> -> vector<2x1x128xf32>
    "tpu.trace_stop"() : () -> ()
    %307 = vector.shape_cast %306 : vector<2x1x128xf32> to vector<2x128xf32>
    %308 = arith.addf %307, %11 : vector<2x128xf32>
    %cst_104 = arith.constant dense<0.000000e+00> : vector<2x128xf32>
    %309 = tpu.matmul %308, %3, %cst_104 {dimension_numbers = #tpu.dot_dimension_numbers<[1], [0], [0], [1], [0, 0, 1, 1], [], []>} : vector<2x128xf32>, vector<128x128xf32>, vector<2x128xf32> -> vector<2x128xf32>
    %310 = arith.subf %308, %309 : vector<2x128xf32>
    %311 = arith.mulf %310, %310 : vector<2x128xf32>
    %cst_105 = arith.constant dense<0.000000e+00> : vector<2x128xf32>
    %312 = tpu.matmul %311, %3, %cst_105 {dimension_numbers = #tpu.dot_dimension_numbers<[1], [0], [0], [1], [0, 0, 1, 1], [], []>} : vector<2x128xf32>, vector<128x128xf32>, vector<2x128xf32> -> vector<2x128xf32>
    %cst_106 = arith.constant 9.99999974E-6 : f32
    %313 = vector.broadcast %cst_106 : f32 to vector<2x128xf32>
    %314 = arith.addf %312, %313 : vector<2x128xf32>
    %315 = math.rsqrt %314 : vector<2x128xf32>
    %316 = arith.mulf %310, %315 : vector<2x128xf32>
    %317 = vector.broadcast %15 : vector<1x128xf32> to vector<2x128xf32>
    %318 = arith.mulf %316, %317 : vector<2x128xf32>
    %319 = vector.broadcast %19 : vector<1x128xf32> to vector<2x128xf32>
    %320 = arith.addf %318, %319 : vector<2x128xf32>
    %321 = arith.negf %320 : vector<2x128xf32>
    %322 = math.exp %321 : vector<2x128xf32>
    %cst_107 = arith.constant 1.000000e+00 : f32
    %323 = vector.broadcast %cst_107 : f32 to vector<2x128xf32>
    %324 = arith.addf %323, %322 : vector<2x128xf32>
    %325 = arith.divf %323, %324 : vector<2x128xf32>
    %326 = vector.extract_strided_slice %325 {offsets = [0, 0], sizes = [2, 32], strides = [1, 1]} : vector<2x128xf32> to vector<2x32xf32>
    %327 = vector.extract_strided_slice %325 {offsets = [0, 32], sizes = [2, 32], strides = [1, 1]} : vector<2x128xf32> to vector<2x32xf32>
    %328 = vector.extract_strided_slice %325 {offsets = [0, 96], sizes = [2, 32], strides = [1, 1]} : vector<2x128xf32> to vector<2x32xf32>
    %329 = vector.extract_strided_slice %320 {offsets = [0, 64], sizes = [2, 32], strides = [1, 1]} : vector<2x128xf32> to vector<2x32xf32>
    %330 = math.tanh %329 : vector<2x32xf32>
    %331 = arith.mulf %327, %282 : vector<2x32xf32>
    %332 = arith.mulf %326, %330 : vector<2x32xf32>
    %333 = arith.addf %331, %332 : vector<2x32xf32>
    %cst_108 = arith.constant dense<0.000000e+00> : vector<2xf32>
    %334 = vector.multi_reduction <add>, %333, %cst_108 [1] : vector<2x32xf32> to vector<2xf32>
    %335 = vector.shape_cast %334 : vector<2xf32> to vector<2x1xf32>
    %cst_109 = arith.constant 3.200000e+01 : f32
    %336 = vector.broadcast %cst_109 : f32 to vector<2x1xf32>
    %337 = arith.divf %335, %336 : vector<2x1xf32>
    %338 = vector.broadcast %337 : vector<2x1xf32> to vector<2x32xf32>
    %339 = arith.subf %333, %338 : vector<2x32xf32>
    %340 = arith.mulf %339, %339 : vector<2x32xf32>
    %cst_110 = arith.constant dense<0.000000e+00> : vector<2xf32>
    %341 = vector.multi_reduction <add>, %340, %cst_110 [1] : vector<2x32xf32> to vector<2xf32>
    %342 = vector.shape_cast %341 : vector<2xf32> to vector<2x1xf32>
    %cst_111 = arith.constant 3.200000e+01 : f32
    %343 = vector.broadcast %cst_111 : f32 to vector<2x1xf32>
    %344 = arith.divf %342, %343 : vector<2x1xf32>
    %cst_112 = arith.constant 9.99999974E-6 : f32
    %345 = vector.broadcast %cst_112 : f32 to vector<2x1xf32>
    %346 = arith.addf %344, %345 : vector<2x1xf32>
    %347 = math.rsqrt %346 : vector<2x1xf32>
    %348 = vector.broadcast %347 : vector<2x1xf32> to vector<2x32xf32>
    %349 = arith.mulf %339, %348 : vector<2x32xf32>
    %350 = vector.broadcast %23 : vector<1x32xf32> to vector<2x32xf32>
    %351 = arith.mulf %349, %350 : vector<2x32xf32>
    %352 = vector.broadcast %27 : vector<1x32xf32> to vector<2x32xf32>
    %353 = arith.addf %351, %352 : vector<2x32xf32>
    %354 = math.tanh %353 : vector<2x32xf32>
    %355 = arith.mulf %328, %354 : vector<2x32xf32>
    %356 = arith.index_cast %c2_i32 : i32 to index
    %c0_113 = arith.constant 0 : index
    %c0_114 = arith.constant 0 : index
    %357 = vector.load %arg9[%356, %c0_113, %c0_114] : memref<4x2x32xf32, #tpu.memory_space<vmem>>, vector<1x2x32xf32>
    %358 = vector.shape_cast %357 : vector<1x2x32xf32> to vector<2x32xf32>
    %359 = vector.shape_cast %355 : vector<2x32xf32> to vector<1x2x32xf32>
    tpu.vector_store %arg9[%356, %c0_113, %c0_114], %359 {strides = array<i32>} : memref<4x2x32xf32, #tpu.memory_space<vmem>>, vector<1x2x32xf32>,
    %c3_i32 = arith.constant 3 : i32
    %360 = arith.index_cast %c3_i32 : i32 to index
    %c0_115 = arith.constant 0 : index
    %c0_116 = arith.constant 0 : index
    %361 = vector.load %arg1[%360, %c0_115, %c0_116] : memref<4x2x128xf32, #tpu.memory_space<vmem>>, vector<1x2x128xf32>
    %362 = vector.shape_cast %361 : vector<1x2x128xf32> to vector<2x128xf32>
    %363 = vector.shape_cast %355 : vector<2x32xf32> to vector<2x1x32xf32>
    "tpu.trace_start"() <{level = 10 : i32, message = "bqh,bhg->bqg"}> : () -> ()
    %cst_117 = arith.constant dense<0.000000e+00> : vector<2x1x128xf32>
    %364 = tpu.matmul %363, %5, %cst_117 {dimension_numbers = #tpu.dot_dimension_numbers<[2], [1], [1], [2], [0, 0, 0, 1, 1, 2], [0], [0]>} : vector<2x1x32xf32>, vector<2x32x128xf32>, vector<2x1x128xf32> -> vector<2x1x128xf32>
    "tpu.trace_stop"() : () -> ()
    %365 = vector.shape_cast %364 : vector<2x1x128xf32> to vector<2x128xf32>
    %366 = arith.addf %365, %9 : vector<2x128xf32>
    %367 = arith.addf %366, %362 : vector<2x128xf32>
    %cst_118 = arith.constant dense<0.000000e+00> : vector<2x128xf32>
    %368 = tpu.matmul %367, %3, %cst_118 {dimension_numbers = #tpu.dot_dimension_numbers<[1], [0], [0], [1], [0, 0, 1, 1], [], []>} : vector<2x128xf32>, vector<128x128xf32>, vector<2x128xf32> -> vector<2x128xf32>
    %369 = arith.subf %367, %368 : vector<2x128xf32>
    %370 = arith.mulf %369, %369 : vector<2x128xf32>
    %cst_119 = arith.constant dense<0.000000e+00> : vector<2x128xf32>
    %371 = tpu.matmul %370, %3, %cst_119 {dimension_numbers = #tpu.dot_dimension_numbers<[1], [0], [0], [1], [0, 0, 1, 1], [], []>} : vector<2x128xf32>, vector<128x128xf32>, vector<2x128xf32> -> vector<2x128xf32>
    %cst_120 = arith.constant 9.99999974E-6 : f32
    %372 = vector.broadcast %cst_120 : f32 to vector<2x128xf32>
    %373 = arith.addf %371, %372 : vector<2x128xf32>
    %374 = math.rsqrt %373 : vector<2x128xf32>
    %375 = arith.mulf %369, %374 : vector<2x128xf32>
    %376 = vector.broadcast %13 : vector<1x128xf32> to vector<2x128xf32>
    %377 = arith.mulf %375, %376 : vector<2x128xf32>
    %378 = vector.broadcast %17 : vector<1x128xf32> to vector<2x128xf32>
    %379 = arith.addf %377, %378 : vector<2x128xf32>
    %380 = arith.negf %379 : vector<2x128xf32>
    %381 = math.exp %380 : vector<2x128xf32>
    %cst_121 = arith.constant 1.000000e+00 : f32
    %382 = vector.broadcast %cst_121 : f32 to vector<2x128xf32>
    %383 = arith.addf %382, %381 : vector<2x128xf32>
    %384 = arith.divf %382, %383 : vector<2x128xf32>
    %385 = vector.extract_strided_slice %384 {offsets = [0, 0], sizes = [2, 32], strides = [1, 1]} : vector<2x128xf32> to vector<2x32xf32>
    %386 = vector.extract_strided_slice %384 {offsets = [0, 32], sizes = [2, 32], strides = [1, 1]} : vector<2x128xf32> to vector<2x32xf32>
    %387 = vector.extract_strided_slice %384 {offsets = [0, 96], sizes = [2, 32], strides = [1, 1]} : vector<2x128xf32> to vector<2x32xf32>
    %388 = vector.extract_strided_slice %379 {offsets = [0, 64], sizes = [2, 32], strides = [1, 1]} : vector<2x128xf32> to vector<2x32xf32>
    %389 = math.tanh %388 : vector<2x32xf32>
    %390 = arith.mulf %386, %333 : vector<2x32xf32>
    %391 = arith.mulf %385, %389 : vector<2x32xf32>
    %392 = arith.addf %390, %391 : vector<2x32xf32>
    %cst_122 = arith.constant dense<0.000000e+00> : vector<2xf32>
    %393 = vector.multi_reduction <add>, %392, %cst_122 [1] : vector<2x32xf32> to vector<2xf32>
    %394 = vector.shape_cast %393 : vector<2xf32> to vector<2x1xf32>
    %cst_123 = arith.constant 3.200000e+01 : f32
    %395 = vector.broadcast %cst_123 : f32 to vector<2x1xf32>
    %396 = arith.divf %394, %395 : vector<2x1xf32>
    %397 = vector.broadcast %396 : vector<2x1xf32> to vector<2x32xf32>
    %398 = arith.subf %392, %397 : vector<2x32xf32>
    %399 = arith.mulf %398, %398 : vector<2x32xf32>
    %cst_124 = arith.constant dense<0.000000e+00> : vector<2xf32>
    %400 = vector.multi_reduction <add>, %399, %cst_124 [1] : vector<2x32xf32> to vector<2xf32>
    %401 = vector.shape_cast %400 : vector<2xf32> to vector<2x1xf32>
    %cst_125 = arith.constant 3.200000e+01 : f32
    %402 = vector.broadcast %cst_125 : f32 to vector<2x1xf32>
    %403 = arith.divf %401, %402 : vector<2x1xf32>
    %cst_126 = arith.constant 9.99999974E-6 : f32
    %404 = vector.broadcast %cst_126 : f32 to vector<2x1xf32>
    %405 = arith.addf %403, %404 : vector<2x1xf32>
    %406 = math.rsqrt %405 : vector<2x1xf32>
    %407 = vector.broadcast %406 : vector<2x1xf32> to vector<2x32xf32>
    %408 = arith.mulf %398, %407 : vector<2x32xf32>
    %409 = vector.broadcast %21 : vector<1x32xf32> to vector<2x32xf32>
    %410 = arith.mulf %408, %409 : vector<2x32xf32>
    %411 = vector.broadcast %25 : vector<1x32xf32> to vector<2x32xf32>
    %412 = arith.addf %410, %411 : vector<2x32xf32>
    %413 = math.tanh %412 : vector<2x32xf32>
    %414 = arith.mulf %387, %413 : vector<2x32xf32>
    %415 = vector.shape_cast %414 : vector<2x32xf32> to vector<2x1x32xf32>
    "tpu.trace_start"() <{level = 10 : i32, message = "bqh,bhg->bqg"}> : () -> ()
    %cst_127 = arith.constant dense<0.000000e+00> : vector<2x1x128xf32>
    %416 = tpu.matmul %415, %7, %cst_127 {dimension_numbers = #tpu.dot_dimension_numbers<[2], [1], [1], [2], [0, 0, 0, 1, 1, 2], [0], [0]>} : vector<2x1x32xf32>, vector<2x32x128xf32>, vector<2x1x128xf32> -> vector<2x1x128xf32>
    "tpu.trace_stop"() : () -> ()
    %417 = vector.shape_cast %416 : vector<2x1x128xf32> to vector<2x128xf32>
    %418 = arith.addf %417, %11 : vector<2x128xf32>
    %cst_128 = arith.constant dense<0.000000e+00> : vector<2x128xf32>
    %419 = tpu.matmul %418, %3, %cst_128 {dimension_numbers = #tpu.dot_dimension_numbers<[1], [0], [0], [1], [0, 0, 1, 1], [], []>} : vector<2x128xf32>, vector<128x128xf32>, vector<2x128xf32> -> vector<2x128xf32>
    %420 = arith.subf %418, %419 : vector<2x128xf32>
    %421 = arith.mulf %420, %420 : vector<2x128xf32>
    %cst_129 = arith.constant dense<0.000000e+00> : vector<2x128xf32>
    %422 = tpu.matmul %421, %3, %cst_129 {dimension_numbers = #tpu.dot_dimension_numbers<[1], [0], [0], [1], [0, 0, 1, 1], [], []>} : vector<2x128xf32>, vector<128x128xf32>, vector<2x128xf32> -> vector<2x128xf32>
    %cst_130 = arith.constant 9.99999974E-6 : f32
    %423 = vector.broadcast %cst_130 : f32 to vector<2x128xf32>
    %424 = arith.addf %422, %423 : vector<2x128xf32>
    %425 = math.rsqrt %424 : vector<2x128xf32>
    %426 = arith.mulf %420, %425 : vector<2x128xf32>
    %427 = vector.broadcast %15 : vector<1x128xf32> to vector<2x128xf32>
    %428 = arith.mulf %426, %427 : vector<2x128xf32>
    %429 = vector.broadcast %19 : vector<1x128xf32> to vector<2x128xf32>
    %430 = arith.addf %428, %429 : vector<2x128xf32>
    %431 = arith.negf %430 : vector<2x128xf32>
    %432 = math.exp %431 : vector<2x128xf32>
    %cst_131 = arith.constant 1.000000e+00 : f32
    %433 = vector.broadcast %cst_131 : f32 to vector<2x128xf32>
    %434 = arith.addf %433, %432 : vector<2x128xf32>
    %435 = arith.divf %433, %434 : vector<2x128xf32>
    %436 = vector.extract_strided_slice %435 {offsets = [0, 0], sizes = [2, 32], strides = [1, 1]} : vector<2x128xf32> to vector<2x32xf32>
    %437 = vector.extract_strided_slice %435 {offsets = [0, 32], sizes = [2, 32], strides = [1, 1]} : vector<2x128xf32> to vector<2x32xf32>
    %438 = vector.extract_strided_slice %435 {offsets = [0, 96], sizes = [2, 32], strides = [1, 1]} : vector<2x128xf32> to vector<2x32xf32>
    %439 = vector.extract_strided_slice %430 {offsets = [0, 64], sizes = [2, 32], strides = [1, 1]} : vector<2x128xf32> to vector<2x32xf32>
    %440 = math.tanh %439 : vector<2x32xf32>
    %441 = arith.mulf %437, %392 : vector<2x32xf32>
    %442 = arith.mulf %436, %440 : vector<2x32xf32>
    %443 = arith.addf %441, %442 : vector<2x32xf32>
    %cst_132 = arith.constant dense<0.000000e+00> : vector<2xf32>
    %444 = vector.multi_reduction <add>, %443, %cst_132 [1] : vector<2x32xf32> to vector<2xf32>
    %445 = vector.shape_cast %444 : vector<2xf32> to vector<2x1xf32>
    %cst_133 = arith.constant 3.200000e+01 : f32
    %446 = vector.broadcast %cst_133 : f32 to vector<2x1xf32>
    %447 = arith.divf %445, %446 : vector<2x1xf32>
    %448 = vector.broadcast %447 : vector<2x1xf32> to vector<2x32xf32>
    %449 = arith.subf %443, %448 : vector<2x32xf32>
    %450 = arith.mulf %449, %449 : vector<2x32xf32>
    %cst_134 = arith.constant dense<0.000000e+00> : vector<2xf32>
    %451 = vector.multi_reduction <add>, %450, %cst_134 [1] : vector<2x32xf32> to vector<2xf32>
    %452 = vector.shape_cast %451 : vector<2xf32> to vector<2x1xf32>
    %cst_135 = arith.constant 3.200000e+01 : f32
    %453 = vector.broadcast %cst_135 : f32 to vector<2x1xf32>
    %454 = arith.divf %452, %453 : vector<2x1xf32>
    %cst_136 = arith.constant 9.99999974E-6 : f32
    %455 = vector.broadcast %cst_136 : f32 to vector<2x1xf32>
    %456 = arith.addf %454, %455 : vector<2x1xf32>
    %457 = math.rsqrt %456 : vector<2x1xf32>
    %458 = vector.broadcast %457 : vector<2x1xf32> to vector<2x32xf32>
    %459 = arith.mulf %449, %458 : vector<2x32xf32>
    %460 = vector.broadcast %23 : vector<1x32xf32> to vector<2x32xf32>
    %461 = arith.mulf %459, %460 : vector<2x32xf32>
    %462 = vector.broadcast %27 : vector<1x32xf32> to vector<2x32xf32>
    %463 = arith.addf %461, %462 : vector<2x32xf32>
    %464 = math.tanh %463 : vector<2x32xf32>
    %465 = arith.mulf %438, %464 : vector<2x32xf32>
    %466 = arith.index_cast %c3_i32 : i32 to index
    %c0_137 = arith.constant 0 : index
    %c0_138 = arith.constant 0 : index
    %467 = vector.load %arg9[%466, %c0_137, %c0_138] : memref<4x2x32xf32, #tpu.memory_space<vmem>>, vector<1x2x32xf32>
    %468 = vector.shape_cast %467 : vector<1x2x32xf32> to vector<2x32xf32>
    %469 = vector.shape_cast %465 : vector<2x32xf32> to vector<1x2x32xf32>
    tpu.vector_store %arg9[%466, %c0_137, %c0_138], %469 {strides = array<i32>} : memref<4x2x32xf32, #tpu.memory_space<vmem>>, vector<1x2x32xf32>,
    %c4_i32 = arith.constant 4 : i32
    %c0_139 = arith.constant 0 : index
    %c0_140 = arith.constant 0 : index
    %470 = vector.load %arg11[%c0_139, %c0_140] : memref<2x32xf32, #tpu.memory_space<vmem>>, vector<2x32xf32>
    tpu.vector_store %arg11[%c0_139, %c0_140], %465 {strides = array<i32>} : memref<2x32xf32, #tpu.memory_space<vmem>>, vector<2x32xf32>,
    %c0_141 = arith.constant 0 : index
    %c0_142 = arith.constant 0 : index
    %471 = vector.load %arg12[%c0_141, %c0_142] : memref<2x32xf32, #tpu.memory_space<vmem>>, vector<2x32xf32>
    tpu.vector_store %arg12[%c0_141, %c0_142], %443 {strides = array<i32>} : memref<2x32xf32, #tpu.memory_space<vmem>>, vector<2x32xf32>,
    return
  }
  func.func @transform_0(%arg0: i32) -> (i32, i32, i32) {
    %c0_i32 = arith.constant 0 : i32
    %c0_i32_0 = arith.constant 0 : i32
    %c0_i32_1 = arith.constant 0 : i32
    return %arg0, %c0_i32, %c0_i32_0 : i32, i32, i32
  }
  func.func @transform_2(%arg0: i32) -> (i32, i32, i32) {
    %c0_i32 = arith.constant 0 : i32
    %c0_i32_0 = arith.constant 0 : i32
    %c0_i32_1 = arith.constant 0 : i32
    %c0_i32_2 = arith.constant 0 : i32
    return %c0_i32, %c0_i32_0, %c0_i32_1 : i32, i32, i32
  }
  func.func @transform_3(%arg0: i32) -> (i32, i32, i32) {
    %c0_i32 = arith.constant 0 : i32
    %c0_i32_0 = arith.constant 0 : i32
    %c0_i32_1 = arith.constant 0 : i32
    %c0_i32_2 = arith.constant 0 : i32
    return %c0_i32, %c0_i32_0, %c0_i32_1 : i32, i32, i32
  }
  func.func @transform_4(%arg0: i32) -> (i32, i32, i32) {
    %c0_i32 = arith.constant 0 : i32
    %c0_i32_0 = arith.constant 0 : i32
    %c0_i32_1 = arith.constant 0 : i32
    %c0_i32_2 = arith.constant 0 : i32
    return %c0_i32, %c0_i32_0, %c0_i32_1 : i32, i32, i32
  }
  func.func @transform_5(%arg0: i32) -> (i32, i32, i32) {
    %c0_i32 = arith.constant 0 : i32
    %c0_i32_0 = arith.constant 0 : i32
    %c0_i32_1 = arith.constant 0 : i32
    %c0_i32_2 = arith.constant 0 : i32
    return %c0_i32, %c0_i32_0, %c0_i32_1 : i32, i32, i32
  }
  func.func @transform_6(%arg0: i32) -> (i32, i32, i32) {
    %c0_i32 = arith.constant 0 : i32
    %c0_i32_0 = arith.constant 0 : i32
    %c0_i32_1 = arith.constant 0 : i32
    %c0_i32_2 = arith.constant 0 : i32
    return %c0_i32, %c0_i32_0, %c0_i32_1 : i32, i32, i32
  }
  func.func @transform_7(%arg0: i32) -> (i32, i32) {
    %c0_i32 = arith.constant 0 : i32
    %c0_i32_0 = arith.constant 0 : i32
    %c0_i32_1 = arith.constant 0 : i32
    return %c0_i32, %c0_i32_0 : i32, i32
  }
  func.func @transform_8(%arg0: i32) -> (i32, i32, i32) {
    %c0_i32 = arith.constant 0 : i32
    %c0_i32_0 = arith.constant 0 : i32
    %c0_i32_1 = arith.constant 0 : i32
    return %arg0, %c0_i32, %c0_i32_0 : i32, i32, i32
  }
}

</mosaic_0001>

<llo_original>
// kernel: custom_lstm_forward.1
$region0: #{custom_lstm_forward.1}
  #allocation0 [shape = 'u32[]', space=smem, size = 0x4, offset = 0x4, fixed_abs, tag = 'smem constant byte address 0x4 - core index']
  #allocation1 [shape = 'u32[144,128]{1,0:T(1,128)}', space=vmem, size = 0x12000, scoped, tag = 'internal scratch']
  #allocation2 [shape = 'f32[2,2,32,128]{3,2,1,0:T(8,128)}', space=vmem, size = 0x10000, scoped, tag = 'scratch operand']
  #allocation3 [shape = 'f32[2,32]{1,0:T(2,128)}', space=vmem, size = 0x400, scoped, tag = 'scratch operand']
  #allocation4 [shape = 'f32[2,32]{1,0:T(2,128)}', space=vmem, size = 0x400, scoped, tag = 'scratch operand']
  #allocation5 [shape = 's32[1]{0}', space=sflag, size = 0x4, scoped, tag = 'scratch operand']
  #allocation6 [shape = 's32[]', space=sflag, size = 0x4, offset = 0, fixed_abs, tag = 'sflag constant byte address 0x0 - dummy sync flag']
  %s0 = inlined_call_operand.vmem [shape: f32[8,2,128], index: 0, kind: input, shape index: {}]
  %s1 = inlined_call_operand.vmem [shape: f32[2,2,32,128], index: 1, kind: input, shape index: {}]
  %s2 = inlined_call_operand.vmem [shape: f32[2,2,128], index: 2, kind: input, shape index: {}]
  %s3 = inlined_call_operand.vmem [shape: f32[2,1,128], index: 3, kind: input, shape index: {}]
  %s4 = inlined_call_operand.vmem [shape: f32[2,1,128], index: 4, kind: input, shape index: {}]
  %s5 = inlined_call_operand.vmem [shape: f32[2,1,32], index: 5, kind: input, shape index: {}]
  %s6 = inlined_call_operand.vmem [shape: f32[2,1,32], index: 6, kind: input, shape index: {}]
  %s7 = inlined_call_operand.vmem [shape: f32[128,128], index: 7, kind: input, shape index: {}]
  %s8 = inlined_call_operand.vmem [shape: f32[8,2,32], index: 8, kind: output, shape index: {}]
  %s9 = sld [smem:[#allocation0]]
  $region99: #{custom_lstm_forward.1} parent=0
    _
  %s11 = ssub.s32 1, %s9
  %s12 = scalar_select 0, %s11, %s9
  loop: start=0, step=1, limit=4
  $region2: #{custom_lstm_forward.1} parent=0 // loop_pre_header
    _
  $region3: #{custom_lstm_forward.1} parent=0 // loop_header
    %s14 = sphi 0, %s18
    %p15 = scmp.ge.s32.totalorder %s14, 4
    %s24 = sphi 0, %s26
    %s27 = sphi 0, %s24
    %s28 = sphi 0, %s27
    %s44 = sphi 0, %s28
    %s48 = sphi 0, %s48
    %s50 = sphi 0, %s48
    %s51 = sphi 0, %s50
    %s65 = sphi 0, %s51
    %s69 = sphi 0, %s69
    %s71 = sphi 0, %s69
    %s72 = sphi 0, %s71
    %s86 = sphi 0, %s72
    %s90 = sphi 0, %s90
    %s92 = sphi 0, %s90
    %s93 = sphi 0, %s92
    %s107 = sphi 0, %s93
    %s111 = sphi 0, %s111
    %s113 = sphi 0, %s111
    %s114 = sphi 0, %s113
    %s128 = sphi 0, %s114
    %s132 = sphi 0, %s132
    %s134 = sphi 0, %s132
    %s135 = sphi 0, %s134
    %s149 = sphi 0, %s135
    %s153 = sphi 0, %s153
    %s155 = sphi 0, %s153
    %s156 = sphi 0, %s155
    %s170 = sphi 0, %s156
    %s176 = sphi 0, %s178
    %s179 = sphi 0, %s176
    %s180 = sphi 0, %s179
    %s196 = sphi 0, %s180
  $region4: #{custom_lstm_forward.1} parent=0 // loop_header_branch
    %17 = sbr.rel (%p15) target = $region8
  $region5: #{custom_lstm_forward.1} parent=0 // loop_body
    %s19 = ssub.s32 %s14, 1
    %s20 = ssub.s32 %s14, 2
    %s21 = sadd.s32 %s14, 1
    %s22 = ssub.s32 %s14, %s21
    %p23 = scmp.eq.s32.totalorder %s22, 0
    %s25 = sadd.s32 %s24, 1
    %s26 = scalar_select %p23, %s24, %s25
    %p29 = pneg %p23
    %p30 = scmp.eq.s32.totalorder %s14, 1
    %p31 = por %p29, %p30
    %p32 = scmp.ne.s32.totalorder %s24, %s27
    %p33 = scmp.eq.s32.totalorder %s14, 0
    %p34 = por %p32, %p33
    %p35 = scmp.ne.s32.totalorder %s24, %s27
    %p36 = scmp.eq.s32.totalorder %s19, 1
    %p37 = por %p35, %p36
    %p38 = scmp.ne.s32.totalorder %s27, %s28
    %p39 = scmp.eq.s32.totalorder %s19, 0
    %p40 = por %p38, %p39
    %p41 = scmp.ne.s32.totalorder %s27, %s28
    %p42 = scmp.eq.s32.totalorder %s20, 1
    %p43 = por %p41, %p42
    %p45 = scmp.ne.s32.totalorder %s28, %s44
    %p46 = scmp.eq.s32.totalorder %s20, 0
    %p47 = por %p45, %p46
    %s49 = sadd.s32 %s48, 1
    %p52 = scmp.eq.s32.totalorder %s14, 1
    %p53 = scmp.ne.s32.totalorder %s48, %s50
    %p54 = scmp.eq.s32.totalorder %s14, 0
    %p55 = por %p53, %p54
    %p56 = scmp.ne.s32.totalorder %s48, %s50
    %p57 = scmp.eq.s32.totalorder %s19, 1
    %p58 = por %p56, %p57
    %p59 = scmp.ne.s32.totalorder %s50, %s51
    %p60 = scmp.eq.s32.totalorder %s19, 0
    %p61 = por %p59, %p60
    %p62 = scmp.ne.s32.totalorder %s50, %s51
    %p63 = scmp.eq.s32.totalorder %s20, 1
    %p64 = por %p62, %p63
    %p66 = scmp.ne.s32.totalorder %s51, %s65
    %p67 = scmp.eq.s32.totalorder %s20, 0
    %p68 = por %p66, %p67
    %s70 = sadd.s32 %s69, 1
    %p73 = scmp.eq.s32.totalorder %s14, 1
    %p74 = scmp.ne.s32.totalorder %s69, %s71
    %p75 = scmp.eq.s32.totalorder %s14, 0
    %p76 = por %p74, %p75
    %p77 = scmp.ne.s32.totalorder %s69, %s71
    %p78 = scmp.eq.s32.totalorder %s19, 1
    %p79 = por %p77, %p78
    %p80 = scmp.ne.s32.totalorder %s71, %s72
    %p81 = scmp.eq.s32.totalorder %s19, 0
    %p82 = por %p80, %p81
    %p83 = scmp.ne.s32.totalorder %s71, %s72
    %p84 = scmp.eq.s32.totalorder %s20, 1
    %p85 = por %p83, %p84
    %p87 = scmp.ne.s32.totalorder %s72, %s86
    %p88 = scmp.eq.s32.totalorder %s20, 0
    %p89 = por %p87, %p88
    %s91 = sadd.s32 %s90, 1
    %p94 = scmp.eq.s32.totalorder %s14, 1
    %p95 = scmp.ne.s32.totalorder %s90, %s92
    %p96 = scmp.eq.s32.totalorder %s14, 0
    %p97 = por %p95, %p96
    %p98 = scmp.ne.s32.totalorder %s90, %s92
    %p99 = scmp.eq.s32.totalorder %s19, 1
    %p100 = por %p98, %p99
    %p101 = scmp.ne.s32.totalorder %s92, %s93
    %p102 = scmp.eq.s32.totalorder %s19, 0
    %p103 = por %p101, %p102
    %p104 = scmp.ne.s32.totalorder %s92, %s93
    %p105 = scmp.eq.s32.totalorder %s20, 1
    %p106 = por %p104, %p105
    %p108 = scmp.ne.s32.totalorder %s93, %s107
    %p109 = scmp.eq.s32.totalorder %s20, 0
    %p110 = por %p108, %p109
    %s112 = sadd.s32 %s111, 1
    %p115 = scmp.eq.s32.totalorder %s14, 1
    %p116 = scmp.ne.s32.totalorder %s111, %s113
    %p117 = scmp.eq.s32.totalorder %s14, 0
    %p118 = por %p116, %p117
    %p119 = scmp.ne.s32.totalorder %s111, %s113
    %p120 = scmp.eq.s32.totalorder %s19, 1
    %p121 = por %p119, %p120
    %p122 = scmp.ne.s32.totalorder %s113, %s114
    %p123 = scmp.eq.s32.totalorder %s19, 0
    %p124 = por %p122, %p123
    %p125 = scmp.ne.s32.totalorder %s113, %s114
    %p126 = scmp.eq.s32.totalorder %s20, 1
    %p127 = por %p125, %p126
    %p129 = scmp.ne.s32.totalorder %s114, %s128
    %p130 = scmp.eq.s32.totalorder %s20, 0
    %p131 = por %p129, %p130
    %s133 = sadd.s32 %s132, 1
    %p136 = scmp.eq.s32.totalorder %s14, 1
    %p137 = scmp.ne.s32.totalorder %s132, %s134
    %p138 = scmp.eq.s32.totalorder %s14, 0
    %p139 = por %p137, %p138
    %p140 = scmp.ne.s32.totalorder %s132, %s134
    %p141 = scmp.eq.s32.totalorder %s19, 1
    %p142 = por %p140, %p141
    %p143 = scmp.ne.s32.totalorder %s134, %s135
    %p144 = scmp.eq.s32.totalorder %s19, 0
    %p145 = por %p143, %p144
    %p146 = scmp.ne.s32.totalorder %s134, %s135
    %p147 = scmp.eq.s32.totalorder %s20, 1
    %p148 = por %p146, %p147
    %p150 = scmp.ne.s32.totalorder %s135, %s149
    %p151 = scmp.eq.s32.totalorder %s20, 0
    %p152 = por %p150, %p151
    %s154 = sadd.s32 %s153, 1
    %p157 = scmp.eq.s32.totalorder %s14, 1
    %p158 = scmp.ne.s32.totalorder %s153, %s155
    %p159 = scmp.eq.s32.totalorder %s14, 0
    %p160 = por %p158, %p159
    %p161 = scmp.ne.s32.totalorder %s153, %s155
    %p162 = scmp.eq.s32.totalorder %s19, 1
    %p163 = por %p161, %p162
    %p164 = scmp.ne.s32.totalorder %s155, %s156
    %p165 = scmp.eq.s32.totalorder %s19, 0
    %p166 = por %p164, %p165
    %p167 = scmp.ne.s32.totalorder %s155, %s156
    %p168 = scmp.eq.s32.totalorder %s20, 1
    %p169 = por %p167, %p168
    %p171 = scmp.ne.s32.totalorder %s156, %s170
    %p172 = scmp.eq.s32.totalorder %s20, 0
    %p173 = por %p171, %p172
    %s174 = ssub.s32 %s14, %s21
    %p175 = scmp.eq.s32.totalorder %s174, 0
    %s177 = sadd.s32 %s176, 1
    %s178 = scalar_select %p175, %s176, %s177
    %p181 = pneg %p175
    %p182 = scmp.eq.s32.totalorder %s14, 1
    %p183 = por %p181, %p182
    %p184 = scmp.ne.s32.totalorder %s176, %s179
    %p185 = scmp.eq.s32.totalorder %s14, 0
    %p186 = por %p184, %p185
    %p187 = scmp.ne.s32.totalorder %s176, %s179
    %p188 = scmp.eq.s32.totalorder %s19, 1
    %p189 = por %p187, %p188
    %p190 = scmp.ne.s32.totalorder %s179, %s180
    %p191 = scmp.eq.s32.totalorder %s19, 0
    %p192 = por %p190, %p191
    %p193 = scmp.ne.s32.totalorder %s179, %s180
    %p194 = scmp.eq.s32.totalorder %s20, 1
    %p195 = por %p193, %p194
    %p197 = scmp.ne.s32.totalorder %s180, %s196
    %p198 = scmp.eq.s32.totalorder %s20, 0
    %p199 = por %p197, %p198
    %p200 = scmp.le.s32.totalorder 1, %s14
    %p201 = scmp.lt.s32.totalorder %s14, 3
    %p202 = pnand %p200, %p201
    %p203 = pneg %p202
    // Predicated region
    $region9: #{custom_lstm_forward.1} parent=5 // pred_check
      _
    $region10: #{custom_lstm_forward.1} parent=5 // pred_check_branch
      %205 = sbr.rel (%p202) target = $region12
    $region11: #{custom_lstm_forward.1} parent=5 // pred_region
      %s206 = ssub.s32 %s14, 1
      // Predicated region
      $region13: #{custom_lstm_forward.1} parent=11 // pred_check
        %p207 = pneg %p61
      $region14: #{custom_lstm_forward.1} parent=11 // pred_check_branch
        %209 = sbr.rel (%p207) target = $region16
      $region15: #{custom_lstm_forward.1} parent=11 // pred_region
        _
      $region16: #{custom_lstm_forward.1} parent=11 // pred_fallthru
        _
      // Predicated region
      $region17: #{custom_lstm_forward.1} parent=11 // pred_check
        %p210 = pneg %p82
      $region18: #{custom_lstm_forward.1} parent=11 // pred_check_branch
        %212 = sbr.rel (%p210) target = $region20
      $region19: #{custom_lstm_forward.1} parent=11 // pred_region
        _
      $region20: #{custom_lstm_forward.1} parent=11 // pred_fallthru
        _
      // Predicated region
      $region21: #{custom_lstm_forward.1} parent=11 // pred_check
        %p213 = pneg %p103
      $region22: #{custom_lstm_forward.1} parent=11 // pred_check_branch
        %215 = sbr.rel (%p213) target = $region24
      $region23: #{custom_lstm_forward.1} parent=11 // pred_region
        _
      $region24: #{custom_lstm_forward.1} parent=11 // pred_fallthru
        _
      // Predicated region
      $region25: #{custom_lstm_forward.1} parent=11 // pred_check
        %p216 = pneg %p124
      $region26: #{custom_lstm_forward.1} parent=11 // pred_check_branch
        %218 = sbr.rel (%p216) target = $region28
      $region27: #{custom_lstm_forward.1} parent=11 // pred_region
        _
      $region28: #{custom_lstm_forward.1} parent=11 // pred_fallthru
        _
      // Predicated region
      $region29: #{custom_lstm_forward.1} parent=11 // pred_check
        %p219 = pneg %p145
      $region30: #{custom_lstm_forward.1} parent=11 // pred_check_branch
        %221 = sbr.rel (%p219) target = $region32
      $region31: #{custom_lstm_forward.1} parent=11 // pred_region
        _
      $region32: #{custom_lstm_forward.1} parent=11 // pred_fallthru
        _
      // Predicated region
      $region33: #{custom_lstm_forward.1} parent=11 // pred_check
        %p222 = pneg %p166
      $region34: #{custom_lstm_forward.1} parent=11 // pred_check_branch
        %224 = sbr.rel (%p222) target = $region36
      $region35: #{custom_lstm_forward.1} parent=11 // pred_region
        _
      $region36: #{custom_lstm_forward.1} parent=11 // pred_fallthru
        _
    $region12: #{custom_lstm_forward.1} parent=5 // pred_fallthru
      _
    %p225 = scmp.lt.s32.totalorder %s14, 2
    // Predicated region
    $region37: #{custom_lstm_forward.1} parent=5 // pred_check
      %p226 = pneg %p225
    $region38: #{custom_lstm_forward.1} parent=5 // pred_check_branch
      %228 = sbr.rel (%p226) target = $region40
    $region39: #{custom_lstm_forward.1} parent=5 // pred_region
      // Predicated region
      $region41: #{custom_lstm_forward.1} parent=39 // pred_check
        %p229 = pneg %p34
      $region42: #{custom_lstm_forward.1} parent=39 // pred_check_branch
        %231 = sbr.rel (%p229) target = $region44
      $region43: #{custom_lstm_forward.1} parent=39 // pred_region
        %s232 = smul.u32 4, %s14
        %p233 = scmp.lt.s32.totalorder %s232, 7
        %s234 = scalar_select %p233, %s232, 7
        %s235 = smul.addr %s234, 2
        %s236 = scalar_lea.vmem %s0, %s235
        %s237 = smul.u32 4, %s14
      $region44: #{custom_lstm_forward.1} parent=39 // pred_fallthru
        _
    $region40: #{custom_lstm_forward.1} parent=5 // pred_fallthru
      _
    %p238 = scmp.le.s32.totalorder 1, %s14
    %p239 = scmp.lt.s32.totalorder %s14, 3
    %p240 = pnand %p238, %p239
    %p241 = pneg %p240
    // Predicated region
    $region45: #{custom_lstm_forward.1} parent=5 // pred_check
      _
    $region46: #{custom_lstm_forward.1} parent=5 // pred_check_branch
      %243 = sbr.rel (%p240) target = $region48
    $region47: #{custom_lstm_forward.1} parent=5 // pred_region
      %s244 = ssub.s32 %s14, 1
      %s245 = smul.u32 4, %s19
      %p246 = scmp.lt.s32.totalorder %s245, 7
      %s247 = scalar_select %p246, %s245, 7
      %s248 = smul.addr %s247, 2
      %s249 = scalar_lea.vmem %s0, %s248
      %p250 = pneg %p40
      %p251 = pneg %p37
      %p252 = pneg %p61
      %p253 = pneg %p58
      %p254 = pneg %p82
      %p255 = pneg %p79
      %p256 = pneg %p103
      %p257 = pneg %p100
      %p258 = pneg %p124
      %p259 = pneg %p121
      %p260 = pneg %p145
      %p261 = pneg %p142
      %p262 = pneg %p166
      %p263 = pneg %p163
      %p264 = pneg %p192
      %p265 = pneg %p189
      %s266 = smul.u32 4, %s19
      %p267 = scmp.lt.s32.totalorder %s266, 7
      %s268 = scalar_select %p267, %s266, 7
      %s269 = smul.addr %s268, 2
      %s270 = scalar_lea.vmem %s8, %s269
      %s271 = smul.u32 4, %s19
      %p272 = scmp.lt.s32.totalorder %s271, 7
      %s273 = scalar_select %p272, %s271, 7
      %s274 = smul.addr %s273, 2
      %s275 = scalar_lea.vmem %s0, %s274
      %s276 = smul.u32 4, %s19
      %s277 = smul.u32 4, %s19
      %p278 = scmp.lt.s32.totalorder %s277, 7
      %s279 = scalar_select %p278, %s277, 7
      %s280 = smul.addr %s279, 2
      %s281 = scalar_lea.vmem %s8, %s280
      %s282 = smul.u32 4, %s19
      %p283 = scmp.eq.s32.totalorder %s19, 0
      // Predicated region
      $region49: #{custom_lstm_forward.1} parent=47 // pred_check
        %p284 = pneg %p283
      $region50: #{custom_lstm_forward.1} parent=47 // pred_check_branch
        %286 = sbr.rel (%p284) target = $region52
      $region51: #{custom_lstm_forward.1} parent=47 // pred_region
        %p288 = scmp.lt.u32.totalorder 128, 8
        %p289 = pneg %p288
        // Predicated region
        $region53: #{custom_lstm_forward.1} parent=51 // pred_check
          _
        $region54: #{custom_lstm_forward.1} parent=51 // pred_check_branch
          %291 = sbr.rel (%p288) target = $region56
        $region55: #{custom_lstm_forward.1} parent=51 // pred_region
          %s306 = sand.u32 128, 7
          %p307 = scmp.eq.s32.totalorder %s306, 0
          // Predicated region
          $region68: #{custom_lstm_forward.1} parent=55 // pred_check
            %p308 = pneg %p307
          $region69: #{custom_lstm_forward.1} parent=55 // pred_check_branch
            %310 = sbr.rel (%p308) target = $region71
          $region70: #{custom_lstm_forward.1} parent=55 // pred_region
            loop: start=0, step=1, limit=1
            $region72: #{custom_lstm_forward.1} parent=70 // loop_pre_header
              _
            $region73: #{custom_lstm_forward.1} parent=70 // loop_header
              %s312 = sphi 0, %s316
              %p313 = scmp.ge.s32.totalorder %s312, 1
              %s317 = sphi %s1, %s1
              %s318 = sphi [#allocation2], [#allocation2]
            $region74: #{custom_lstm_forward.1} parent=70 // loop_header_branch
              %315 = sbr.rel (%p313) target = $region78
            $region75: #{custom_lstm_forward.1} parent=70 // loop_body
              %v319 = vld [vmem:[%s317] sm:$0xff]
              %320 = vst [vmem:[%s318] sm:$0xff] %v319
              %v321 = vld [vmem:[%s317 + $0x8] sm:$0xff]
              %322 = vst [vmem:[%s318 + $0x8] sm:$0xff] %v321
              %v323 = vld [vmem:[%s317 + $0x10] sm:$0xff]
              %324 = vst [vmem:[%s318 + $0x10] sm:$0xff] %v323
              %v325 = vld [vmem:[%s317 + $0x18] sm:$0xff]
              %326 = vst [vmem:[%s318 + $0x18] sm:$0xff] %v325
              %v327 = vld [vmem:[%s317 + $0x20] sm:$0xff]
              %328 = vst [vmem:[%s318 + $0x20] sm:$0xff] %v327
              %v329 = vld [vmem:[%s317 + $0x28] sm:$0xff]
              %330 = vst [vmem:[%s318 + $0x28] sm:$0xff] %v329
              %v331 = vld [vmem:[%s317 + $0x30] sm:$0xff]
              %332 = vst [vmem:[%s318 + $0x30] sm:$0xff] %v331
              %v333 = vld [vmem:[%s317 + $0x38] sm:$0xff]
              %334 = vst [vmem:[%s318 + $0x38] sm:$0xff] %v333
              %v335 = vld [vmem:[%s317 + $0x40] sm:$0xff]
              %336 = vst [vmem:[%s318 + $0x40] sm:$0xff] %v335
              %v337 = vld [vmem:[%s317 + $0x48] sm:$0xff]
              %338 = vst [vmem:[%s318 + $0x48] sm:$0xff] %v337
              %v339 = vld [vmem:[%s317 + $0x50] sm:$0xff]
              %340 = vst [vmem:[%s318 + $0x50] sm:$0xff] %v339
              %v341 = vld [vmem:[%s317 + $0x58] sm:$0xff]
              %342 = vst [vmem:[%s318 + $0x58] sm:$0xff] %v341
              %v343 = vld [vmem:[%s317 + $0x60] sm:$0xff]
              %344 = vst [vmem:[%s318 + $0x60] sm:$0xff] %v343
              %v345 = vld [vmem:[%s317 + $0x68] sm:$0xff]
              %346 = vst [vmem:[%s318 + $0x68] sm:$0xff] %v345
              %v347 = vld [vmem:[%s317 + $0x70] sm:$0xff]
              %348 = vst [vmem:[%s318 + $0x70] sm:$0xff] %v347
              %v349 = vld [vmem:[%s317 + $0x78] sm:$0xff]
              %350 = vst [vmem:[%s318 + $0x78] sm:$0xff] %v349
            $region76: #{custom_lstm_forward.1} parent=70 // loop_footer
              %s316 = sadd.s32 1, %s312
            $region77: #{custom_lstm_forward.1} parent=70 // loop_footer_branch
              %311 = sbr.rel target = $region73
            $region78: #{custom_lstm_forward.1} parent=70 // loop_exit
              _
          $region71: #{custom_lstm_forward.1} parent=55 // pred_fallthru
            _
          %p351 = pneg %p307
          // Predicated region
          $region79: #{custom_lstm_forward.1} parent=55 // pred_check
            _
          $region80: #{custom_lstm_forward.1} parent=55 // pred_check_branch
            %353 = sbr.rel (%p307) target = $region82
          $region81: #{custom_lstm_forward.1} parent=55 // pred_region
            %s354 = sand.u32 128, 7
          $region82: #{custom_lstm_forward.1} parent=55 // pred_fallthru
            _
        $region56: #{custom_lstm_forward.1} parent=51 // pred_fallthru
          _
        // Predicated region
        $region57: #{custom_lstm_forward.1} parent=51 // pred_check
          %p292 = pneg %p288
        $region58: #{custom_lstm_forward.1} parent=51 // pred_check_branch
          %294 = sbr.rel (%p292) target = $region60
        $region59: #{custom_lstm_forward.1} parent=51 // pred_region
          %s295 = sshllo.u32 0, 128
          loop: start=0, step=1, limit=1
          $region61: #{custom_lstm_forward.1} parent=59 // loop_pre_header
            _
          $region62: #{custom_lstm_forward.1} parent=59 // loop_header
            %s297 = sphi 0, %s301
            %p298 = scmp.ge.s32.totalorder %s297, 1
            %s302 = sphi %s1, %s1
            %s303 = sphi [#allocation2], [#allocation2]
          $region63: #{custom_lstm_forward.1} parent=59 // loop_header_branch
            %300 = sbr.rel (%p298) target = $region67
          $region64: #{custom_lstm_forward.1} parent=59 // loop_body
            %v304 = vld [vmem:[%s302] sm:%s295]
            %305 = vst [vmem:[%s303] sm:%s295] %v304
          $region65: #{custom_lstm_forward.1} parent=59 // loop_footer
            %s301 = sadd.s32 1, %s297
          $region66: #{custom_lstm_forward.1} parent=59 // loop_footer_branch
            %296 = sbr.rel target = $region62
          $region67: #{custom_lstm_forward.1} parent=59 // loop_exit
            _
        $region60: #{custom_lstm_forward.1} parent=51 // pred_fallthru
          _
        // Predicated region
        $region83: #{custom_lstm_forward.1} parent=51 // pred_check
          _
        $region84: #{custom_lstm_forward.1} parent=51 // pred_check_branch
          %357 = sbr.rel (0) target = $region86
        $region85: #{custom_lstm_forward.1} parent=51 // pred_region
          %358 = vsyncadd [#allocation5], 2048
        $region86: #{custom_lstm_forward.1} parent=51 // pred_fallthru
          _
        %s359 = smul.u32 2, 2
        %s360 = smul.u32 %s359, 32
        %s361 = smul.u32 %s360, 1
        %s362 = sshll.u32 %s361, 4
        %363 = dma.done [#allocation5], %s362
        %vm364 = vcmask 254976
        %365 = vst.msk [vmem:[#allocation3] sm:$0x3] %vm364, 0.0
        %366 = vst.msk [vmem:[#allocation4] sm:$0x3] %vm364, 0.0
      $region52: #{custom_lstm_forward.1} parent=47 // pred_fallthru
        _
      %v367 = vld [vmem:[%s7] sm:$0xff]
      %v368 = vld [vmem:[%s7 + $0x8] sm:$0xff]
      %v369 = vld [vmem:[%s7 + $0x10] sm:$0xff]
      %v370 = vld [vmem:[%s7 + $0x18] sm:$0xff]
      %v371 = vld [vmem:[%s7 + $0x20] sm:$0xff]
      %v372 = vld [vmem:[%s7 + $0x28] sm:$0xff]
      %v373 = vld [vmem:[%s7 + $0x30] sm:$0xff]
      %v374 = vld [vmem:[%s7 + $0x38] sm:$0xff]
      %v375 = vld [vmem:[%s7 + $0x40] sm:$0xff]
      %v376 = vld [vmem:[%s7 + $0x48] sm:$0xff]
      %v377 = vld [vmem:[%s7 + $0x50] sm:$0xff]
      %v378 = vld [vmem:[%s7 + $0x58] sm:$0xff]
      %v379 = vld [vmem:[%s7 + $0x60] sm:$0xff]
      %v380 = vld [vmem:[%s7 + $0x68] sm:$0xff]
      %v381 = vld [vmem:[%s7 + $0x70] sm:$0xff]
      %v382 = vld [vmem:[%s7 + $0x78] sm:$0xff]
      %v383 = vld [vmem:[#allocation2] sm:$0xff]
      %v384 = vld [vmem:[#allocation2 + $0x8] sm:$0xff]
      %v385 = vld [vmem:[#allocation2 + $0x10] sm:$0xff]
      %v386 = vld [vmem:[#allocation2 + $0x18] sm:$0xff]
      %v387 = vld [vmem:[#allocation2 + $0x20] sm:$0xff]
      %v388 = vld [vmem:[#allocation2 + $0x28] sm:$0xff]
      %v389 = vld [vmem:[#allocation2 + $0x30] sm:$0xff]
      %v390 = vld [vmem:[#allocation2 + $0x38] sm:$0xff]
      %s391 = scalar_lea.vmem [#allocation2], 64
      %v392 = vld [vmem:[%s391] sm:$0xff]
      %v393 = vld [vmem:[%s391 + $0x8] sm:$0xff]
      %v394 = vld [vmem:[%s391 + $0x10] sm:$0xff]
      %v395 = vld [vmem:[%s391 + $0x18] sm:$0xff]
      %v396 = vld [vmem:[%s391 + $0x20] sm:$0xff]
      %v397 = vld [vmem:[%s391 + $0x28] sm:$0xff]
      %v398 = vld [vmem:[%s391 + $0x30] sm:$0xff]
      %v399 = vld [vmem:[%s391 + $0x38] sm:$0xff]
      %v400 = vld [vmem:[%s2] sm:$0x3]
      %s401 = scalar_lea.vmem %s2, 2
      %v402 = vld [vmem:[%s401] sm:$0x3]
      %v403 = vld [vmem:[%s3] sm:$0x1]
      %s404 = scalar_lea.vmem %s3, 1
      %v405 = vld [vmem:[%s404] sm:$0x1]
      %v406 = vld [vmem:[%s4] sm:$0x1]
      %s407 = scalar_lea.vmem %s4, 1
      %v408 = vld [vmem:[%s407] sm:$0x1]
      %v409 = vld [vmem:[%s5] sm:$0x1]
      %s410 = scalar_lea.vmem %s5, 1
      %v411 = vld [vmem:[%s410] sm:$0x1]
      %v412 = vld [vmem:[%s6] sm:$0x1]
      %s413 = scalar_lea.vmem %s6, 1
      %v414 = vld [vmem:[%s413] sm:$0x1]
      %v415 = vld [vmem:[#allocation3] sm:$0x3]
      %v416 = vld [vmem:[#allocation4] sm:$0x3]
      %v417 = vld [vmem:[%s275] sm:$0x3]
      %v420 = vunpack.c.l.s4 1966171168
      %v421 = vunpack.c.0.s8 %v420
      %v422 = vlaneseq
      %v423 = vshrl.u32 %v422, 7
      %v424 = vsub.s32 %v421, %v423
      %v425 = vrot.slane %v415, %v424
      %v426 = vcombine.high %v425, %v425
      %v428 = vunpack.c.l.s4 1966171168
      %v429 = vunpack.c.0.s8 %v428
      %v430 = vlaneseq
      %v431 = vshrl.u32 %v430, 7
      %v432 = vsub.s32 %v429, %v431
      %v433 = vrot.slane %v425, %v432
      %v435 = vunpack.c.l.s4 1966171168
      %v436 = vunpack.c.0.s8 %v435
      %v437 = vlaneseq
      %v438 = vshrl.u32 %v437, 7
      %v439 = vsub.s32 %v436, %v438
      %v440 = vrot.slane %v426, %v439
      %vm441 = vcmask 261120
      %v442 = vsel %vm441, %v433, 0
      %444 = vmatprep.subr.mxu0 0.0
      %445 = vmatpush1.msra.mxu0 %v383
      %446 = vmatprep.subr.mxu0 0.0
      %447 = vmatpush1.msra.mxu0 %v384
      %448 = vmatprep.subr.mxu0 0.0
      %449 = vmatpush1.msra.mxu0 %v385
      %450 = vmatprep.subr.mxu0 0.0
      %451 = vmatpush1.msra.mxu0 %v386
      %452 = vmatprep.subr.mxu0 0.0
      %453 = vmatpush1.msra.mxu0 0.0
      %454 = vmatprep.subr.mxu0 0.0
      %455 = vmatpush1.msra.mxu0 0.0
      %456 = vmatprep.subr.mxu0 0.0
      %457 = vmatpush1.msra.mxu0 0.0
      %458 = vmatprep.subr.mxu0 0.0
      %459 = vmatpush1.msra.mxu0 0.0
      %460 = vmatprep.subr.mxu0 0.0
      %461 = vmatpush1.msra.mxu0 0.0
      %462 = vmatprep.subr.mxu0 0.0
      %463 = vmatpush1.msra.mxu0 0.0
      %464 = vmatprep.subr.mxu0 0.0
      %465 = vmatpush1.msra.mxu0 0.0
      %466 = vmatprep.subr.mxu0 0.0
      %467 = vmatpush1.msra.mxu0 0.0
      %468 = vmatprep.subr.mxu0 0.0
      %469 = vmatpush1.msra.mxu0 0.0
      %470 = vmatprep.subr.mxu0 0.0
      %471 = vmatpush1.msra.mxu0 0.0
      %472 = vmatprep.subr.mxu0 0.0
      %473 = vmatpush1.msra.mxu0 0.0
      %474 = vmatprep.subr.mxu0 0.0
      %475 = vmatpush1.msra.mxu0 0.0
      %476 = vmatprep.subr.mxu0 0.0
      %477 = vmatpush1.msra.mxu0 0.0
      %478 = vmatprep.subr.mxu0 0.0
      %479 = vmatpush1.msra.mxu0 0.0
      %480 = vmatprep.subr.mxu0 0.0
      %481 = vmatpush1.msra.mxu0 0.0
      %482 = vmatprep.subr.mxu0 0.0
      %483 = vmatpush1.msra.mxu0 0.0
      %484 = vmatprep.subr.mxu0 0.0
      %485 = vmatpush1.msra.mxu0 0.0
      %486 = vmatprep.subr.mxu0 0.0
      %487 = vmatpush1.msra.mxu0 0.0
      %488 = vmatprep.subr.mxu0 0.0
      %489 = vmatpush1.msra.mxu0 0.0
      %490 = vmatprep.subr.mxu0 0.0
      %491 = vmatpush1.msra.mxu0 0.0
      %492 = vmatprep.subr.mxu0 0.0
      %493 = vmatpush1.msra.mxu0 0.0
      %494 = vmatprep.subr.mxu0 0.0
      %495 = vmatpush1.msra.mxu0 0.0
      %496 = vmatprep.subr.mxu0 0.0
      %497 = vmatpush1.msra.mxu0 0.0
      %498 = vmatprep.subr.mxu0 0.0
      %499 = vmatpush1.msra.mxu0 0.0
      %500 = vmatprep.subr.mxu0 0.0
      %501 = vmatpush1.msra.mxu0 0.0
      %502 = vmatprep.subr.mxu0 0.0
      %503 = vmatpush1.msra.mxu0 0.0
      %504 = vmatprep.subr.mxu0 0.0
      %505 = vmatpush1.msra.mxu0 0.0
      %506 = vmatprep.subr.mxu0 0.0
      %507 = vmatpush1.msra.mxu0 0.0
      %508 = vmatprep.mubr.f32.mxu0 0.0
      %509 = vmatmul.mubr.f32.gmra.mrb[0].mxu0 %v442
      %v510 = vpop.f32.mrb[0].mxu0
      %v511 = vadd.f32 0.0, %v510
      %v512 = vpop.f32.mrb[0].mxu0
      %513 = vdwg.mxu0
      %v514 = vsel %vm441, %v440, 0
      %516 = vmatprep.subr.mxu0 0.0
      %517 = vmatpush1.msra.mxu0 %v387
      %518 = vmatprep.subr.mxu0 0.0
      %519 = vmatpush1.msra.mxu0 %v388
      %520 = vmatprep.subr.mxu0 0.0
      %521 = vmatpush1.msra.mxu0 %v389
      %522 = vmatprep.subr.mxu0 0.0
      %523 = vmatpush1.msra.mxu0 %v390
      %524 = vmatprep.subr.mxu0 0.0
      %525 = vmatpush1.msra.mxu0 0.0
      %526 = vmatprep.subr.mxu0 0.0
      %527 = vmatpush1.msra.mxu0 0.0
      %528 = vmatprep.subr.mxu0 0.0
      %529 = vmatpush1.msra.mxu0 0.0
      %530 = vmatprep.subr.mxu0 0.0
      %531 = vmatpush1.msra.mxu0 0.0
      %532 = vmatprep.subr.mxu0 0.0
      %533 = vmatpush1.msra.mxu0 0.0
      %534 = vmatprep.subr.mxu0 0.0
      %535 = vmatpush1.msra.mxu0 0.0
      %536 = vmatprep.subr.mxu0 0.0
      %537 = vmatpush1.msra.mxu0 0.0
      %538 = vmatprep.subr.mxu0 0.0
      %539 = vmatpush1.msra.mxu0 0.0
      %540 = vmatprep.subr.mxu0 0.0
      %541 = vmatpush1.msra.mxu0 0.0
      %542 = vmatprep.subr.mxu0 0.0
      %543 = vmatpush1.msra.mxu0 0.0
      %544 = vmatprep.subr.mxu0 0.0
      %545 = vmatpush1.msra.mxu0 0.0
      %546 = vmatprep.subr.mxu0 0.0
      %547 = vmatpush1.msra.mxu0 0.0
      %548 = vmatprep.subr.mxu0 0.0
      %549 = vmatpush1.msra.mxu0 0.0
      %550 = vmatprep.subr.mxu0 0.0
      %551 = vmatpush1.msra.mxu0 0.0
      %552 = vmatprep.subr.mxu0 0.0
      %553 = vmatpush1.msra.mxu0 0.0
      %554 = vmatprep.subr.mxu0 0.0
      %555 = vmatpush1.msra.mxu0 0.0
      %556 = vmatprep.subr.mxu0 0.0
      %557 = vmatpush1.msra.mxu0 0.0
      %558 = vmatprep.subr.mxu0 0.0
      %559 = vmatpush1.msra.mxu0 0.0
      %560 = vmatprep.subr.mxu0 0.0
      %561 = vmatpush1.msra.mxu0 0.0
      %562 = vmatprep.subr.mxu0 0.0
      %563 = vmatpush1.msra.mxu0 0.0
      %564 = vmatprep.subr.mxu0 0.0
      %565 = vmatpush1.msra.mxu0 0.0
      %566 = vmatprep.subr.mxu0 0.0
      %567 = vmatpush1.msra.mxu0 0.0
      %568 = vmatprep.subr.mxu0 0.0
      %569 = vmatpush1.msra.mxu0 0.0
      %570 = vmatprep.subr.mxu0 0.0
      %571 = vmatpush1.msra.mxu0 0.0
      %572 = vmatprep.subr.mxu0 0.0
      %573 = vmatpush1.msra.mxu0 0.0
      %574 = vmatprep.subr.mxu0 0.0
      %575 = vmatpush1.msra.mxu0 0.0
      %576 = vmatprep.subr.mxu0 0.0
      %577 = vmatpush1.msra.mxu0 0.0
      %578 = vmatprep.subr.mxu0 0.0
      %579 = vmatpush1.msra.mxu0 0.0
      %580 = vmatprep.mubr.f32.mxu0 0.0
      %581 = vmatmul.mubr.f32.gmra.mrb[0].mxu0 %v514
      %v582 = vpop.f32.mrb[0].mxu0
      %v583 = vadd.f32 0.0, %v582
      %v584 = vpop.f32.mrb[0].mxu0
      %585 = vdwg.mxu0
      %v587 = vrot.slane %v400, 1
      %v590 = vadd.f32 %v511, %v400
      %v591 = vadd.f32 %v583, %v587
      %v593 = vrot.slane %v417, 1
      %v596 = vadd.f32 %v590, %v417
      %v597 = vadd.f32 %v591, %v593
      %v600 = vrot.slane %v597, 7
      %vm601 = vcmask 1041409
      %v602 = vsel %vm601, %v600, %v596
      %604 = vmatprep.subr.mxu0 0.0
      %605 = vmatpush1.msra.mxu0 %v367
      %606 = vmatprep.subr.mxu0 0.0
      %607 = vmatpush1.msra.mxu0 %v368
      %608 = vmatprep.subr.mxu0 0.0
      %609 = vmatpush1.msra.mxu0 %v369
      %610 = vmatprep.subr.mxu0 0.0
      %611 = vmatpush1.msra.mxu0 %v370
      %612 = vmatprep.subr.mxu0 0.0
      %613 = vmatpush1.msra.mxu0 %v371
      %614 = vmatprep.subr.mxu0 0.0
      %615 = vmatpush1.msra.mxu0 %v372
      %616 = vmatprep.subr.mxu0 0.0
      %617 = vmatpush1.msra.mxu0 %v373
      %618 = vmatprep.subr.mxu0 0.0
      %619 = vmatpush1.msra.mxu0 %v374
      %620 = vmatprep.subr.mxu0 0.0
      %621 = vmatpush1.msra.mxu0 %v375
      %622 = vmatprep.subr.mxu0 0.0
      %623 = vmatpush1.msra.mxu0 %v376
      %624 = vmatprep.subr.mxu0 0.0
      %625 = vmatpush1.msra.mxu0 %v377
      %626 = vmatprep.subr.mxu0 0.0
      %627 = vmatpush1.msra.mxu0 %v378
      %628 = vmatprep.subr.mxu0 0.0
      %629 = vmatpush1.msra.mxu0 %v379
      %630 = vmatprep.subr.mxu0 0.0
      %631 = vmatpush1.msra.mxu0 %v380
      %632 = vmatprep.subr.mxu0 0.0
      %633 = vmatpush1.msra.mxu0 %v381
      %634 = vmatprep.subr.mxu0 0.0
      %635 = vmatpush1.msra.mxu0 %v382
      %636 = vmatprep.subr.mxu0 0.0
      %637 = vmatpush1.msra.mxu0 0.0
      %638 = vmatprep.subr.mxu0 0.0
      %639 = vmatpush1.msra.mxu0 0.0
      %640 = vmatprep.subr.mxu0 0.0
      %641 = vmatpush1.msra.mxu0 0.0
      %642 = vmatprep.subr.mxu0 0.0
      %643 = vmatpush1.msra.mxu0 0.0
      %644 = vmatprep.subr.mxu0 0.0
      %645 = vmatpush1.msra.mxu0 0.0
      %646 = vmatprep.subr.mxu0 0.0
      %647 = vmatpush1.msra.mxu0 0.0
      %648 = vmatprep.subr.mxu0 0.0
      %649 = vmatpush1.msra.mxu0 0.0
      %650 = vmatprep.subr.mxu0 0.0
      %651 = vmatpush1.msra.mxu0 0.0
      %652 = vmatprep.subr.mxu0 0.0
      %653 = vmatpush1.msra.mxu0 0.0
      %654 = vmatprep.subr.mxu0 0.0
      %655 = vmatpush1.msra.mxu0 0.0
      %656 = vmatprep.subr.mxu0 0.0
      %657 = vmatpush1.msra.mxu0 0.0
      %658 = vmatprep.subr.mxu0 0.0
      %659 = vmatpush1.msra.mxu0 0.0
      %660 = vmatprep.subr.mxu0 0.0
      %661 = vmatpush1.msra.mxu0 0.0
      %662 = vmatprep.subr.mxu0 0.0
      %663 = vmatpush1.msra.mxu0 0.0
      %664 = vmatprep.subr.mxu0 0.0
      %665 = vmatpush1.msra.mxu0 0.0
      %666 = vmatprep.subr.mxu0 0.0
      %667 = vmatpush1.msra.mxu0 0.0
      %668 = vmatprep.mubr.f32.mxu0 0.0
      %669 = vmatmul.mubr.f32.gmra.mrb[0].mxu0 %v602
      %v670 = vpop.f32.mrb[0].mxu0
      %v671 = vadd.f32 0.0, %v670
      %v672 = vpop.f32.mrb[0].mxu0
      %673 = vdwg.mxu0
      %v675 = vrot.slane %v671, 1
      %v678 = vsub.f32 %v596, %v671
      %v679 = vsub.f32 %v597, %v675
      %v680 = vmul.f32 %v678, %v678
      %v681 = vmul.f32 %v679, %v679
      %v684 = vrot.slane %v681, 7
      %v685 = vsel %vm601, %v684, %v680
      %687 = vmatprep.subr.mxu0 0.0
      %688 = vmatpush1.msra.mxu0 %v367
      %689 = vmatprep.subr.mxu0 0.0
      %690 = vmatpush1.msra.mxu0 %v368
      %691 = vmatprep.subr.mxu0 0.0
      %692 = vmatpush1.msra.mxu0 %v369
      %693 = vmatprep.subr.mxu0 0.0
      %694 = vmatpush1.msra.mxu0 %v370
      %695 = vmatprep.subr.mxu0 0.0
      %696 = vmatpush1.msra.mxu0 %v371
      %697 = vmatprep.subr.mxu0 0.0
      %698 = vmatpush1.msra.mxu0 %v372
      %699 = vmatprep.subr.mxu0 0.0
      %700 = vmatpush1.msra.mxu0 %v373
      %701 = vmatprep.subr.mxu0 0.0
      %702 = vmatpush1.msra.mxu0 %v374
      %703 = vmatprep.subr.mxu0 0.0
      %704 = vmatpush1.msra.mxu0 %v375
      %705 = vmatprep.subr.mxu0 0.0
      %706 = vmatpush1.msra.mxu0 %v376
      %707 = vmatprep.subr.mxu0 0.0
      %708 = vmatpush1.msra.mxu0 %v377
      %709 = vmatprep.subr.mxu0 0.0
      %710 = vmatpush1.msra.mxu0 %v378
      %711 = vmatprep.subr.mxu0 0.0
      %712 = vmatpush1.msra.mxu0 %v379
      %713 = vmatprep.subr.mxu0 0.0
      %714 = vmatpush1.msra.mxu0 %v380
      %715 = vmatprep.subr.mxu0 0.0
      %716 = vmatpush1.msra.mxu0 %v381
      %717 = vmatprep.subr.mxu0 0.0
      %718 = vmatpush1.msra.mxu0 %v382
      %719 = vmatprep.subr.mxu0 0.0
      %720 = vmatpush1.msra.mxu0 0.0
      %721 = vmatprep.subr.mxu0 0.0
      %722 = vmatpush1.msra.mxu0 0.0
      %723 = vmatprep.subr.mxu0 0.0
      %724 = vmatpush1.msra.mxu0 0.0
      %725 = vmatprep.subr.mxu0 0.0
      %726 = vmatpush1.msra.mxu0 0.0
      %727 = vmatprep.subr.mxu0 0.0
      %728 = vmatpush1.msra.mxu0 0.0
      %729 = vmatprep.subr.mxu0 0.0
      %730 = vmatpush1.msra.mxu0 0.0
      %731 = vmatprep.subr.mxu0 0.0
      %732 = vmatpush1.msra.mxu0 0.0
      %733 = vmatprep.subr.mxu0 0.0
      %734 = vmatpush1.msra.mxu0 0.0
      %735 = vmatprep.subr.mxu0 0.0
      %736 = vmatpush1.msra.mxu0 0.0
      %737 = vmatprep.subr.mxu0 0.0
      %738 = vmatpush1.msra.mxu0 0.0
      %739 = vmatprep.subr.mxu0 0.0
      %740 = vmatpush1.msra.mxu0 0.0
      %741 = vmatprep.subr.mxu0 0.0
      %742 = vmatpush1.msra.mxu0 0.0
      %743 = vmatprep.subr.mxu0 0.0
      %744 = vmatpush1.msra.mxu0 0.0
      %745 = vmatprep.subr.mxu0 0.0
      %746 = vmatpush1.msra.mxu0 0.0
      %747 = vmatprep.subr.mxu0 0.0
      %748 = vmatpush1.msra.mxu0 0.0
      %749 = vmatprep.subr.mxu0 0.0
      %750 = vmatpush1.msra.mxu0 0.0
      %751 = vmatprep.mubr.f32.mxu0 0.0
      %752 = vmatmul.mubr.f32.gmra.mrb[0].mxu0 %v685
      %v753 = vpop.f32.mrb[0].mxu0
      %v754 = vadd.f32 1e-05, %v753
      %v755 = vpop.f32.mrb[0].mxu0
      %756 = vdwg.mxu0
      %v757 = vrsqrt.pop %v754
      %v759 = vrot.slane %v757, 1
      %v762 = vmul.f32 %v678, %v757
      %v763 = vmul.f32 %v679, %v759
      %v765 = vlaneseq
      %v766 = vshrl.u32 %v765, 7
      %v767 = vsub.s32 0, %v766
      %v768 = vrot.slane %v403, %v767
      %v770 = vmul.f32 %v762, %v768
      %v771 = vmul.f32 %v763, %v768
      %v773 = vlaneseq
      %v774 = vshrl.u32 %v773, 7
      %v775 = vsub.s32 0, %v774
      %v776 = vrot.slane %v406, %v775
      %v778 = vadd.f32 %v770, %v776
      %v779 = vadd.f32 %v771, %v776
      %v780 = vxor.u32 %v778, 2147483648
      %v781 = vxor.u32 %v779, 2147483648
      %v782 = vmul.f32 %v780, 1.442695
      %v783 = vpow.pop %v782
      %v784 = vmul.f32 %v781, 1.442695
      %v785 = vpow.pop %v784
      %v786 = vadd.f32 %v783, 1.0
      %v787 = vadd.f32 %v785, 1.0
      %v788 = vrcp.pop %v786
      %v789 = vmul.f32 1.0, %v788
      %v790 = vrcp.pop %v787
      %v791 = vmul.f32 1.0, %v790
      %v792 = vtanh.pop %v778
      %v793 = vtanh.pop %v779
      %v795 = vrot.slane %v416, 1
      %796 = vrot.lane.b32.xlu0 %v416, 32
      %v797 = vpop.permute.xlu0 %796
      %798 = vrot.lane.b32.xlu0 %v795, 32
      %v799 = vpop.permute.xlu0 %798
      %v802 = vmul.f32 %v789, %v797
      %v803 = vmul.f32 %v791, %v799
      %806 = vrot.lane.b32.xlu0 %v792, 64
      %v807 = vpop.permute.xlu0 %806
      %808 = vrot.lane.b32.xlu0 %v793, 64
      %v809 = vpop.permute.xlu0 %808
      %v812 = vmul.f32 %v789, %v807
      %v813 = vmul.f32 %v791, %v809
      %816 = vrot.lane.b32.xlu0 %v812, 32
      %v817 = vpop.permute.xlu0 %816
      %818 = vrot.lane.b32.xlu0 %v813, 32
      %v819 = vpop.permute.xlu0 %818
      %v822 = vadd.f32 %v802, %v817
      %v823 = vadd.f32 %v803, %v819
      %v826 = vrot.slane %v823, 7
      %v827 = vsel %vm601, %v826, %v822
      %828 = vrot.lane.b32.xlu0 %v827, 96
      %v829 = vpop.permute.xlu0 %828
      %vm831 = vcmask 254976
      %v832 = vsel %vm831, %v829, 0.0
      %833 = vadd.xlane.f32.xlu0 %v832
      %v834 = vpop.xlane.xlu0 %833
      %v835 = vrcp.pop 32.0
      %v836 = vmul.f32 %v834, %v835
      %v838 = vrot.slane %v836, 1
      %v841 = vsub.f32 %v822, %v836
      %v842 = vsub.f32 %v823, %v838
      %v843 = vmul.f32 %v841, %v841
      %v844 = vmul.f32 %v842, %v842
      %v847 = vrot.slane %v844, 7
      %v848 = vsel %vm601, %v847, %v843
      %849 = vrot.lane.b32.xlu0 %v848, 96
      %v850 = vpop.permute.xlu0 %849
      %v852 = vsel %vm831, %v850, 0.0
      %853 = vadd.xlane.f32.xlu0 %v852
      %v854 = vpop.xlane.xlu0 %853
      %v855 = vmul.f32 %v854, %v835
      %v856 = vadd.f32 %v855, 1e-05
      %v857 = vrsqrt.pop %v856
      %v859 = vrot.slane %v857, 1
      %v862 = vmul.f32 %v841, %v857
      %v863 = vmul.f32 %v842, %v859
      %v865 = vlaneseq
      %v866 = vshrl.u32 %v865, 7
      %v867 = vsub.s32 0, %v866
      %v868 = vrot.slane %v409, %v867
      %869 = vrot.lane.b32.xlu0 %v868, 32
      %v870 = vpop.permute.xlu0 %869
      %v872 = vmul.f32 %v862, %v870
      %v873 = vmul.f32 %v863, %v870
      %v875 = vlaneseq
      %v876 = vshrl.u32 %v875, 7
      %v877 = vsub.s32 0, %v876
      %v878 = vrot.slane %v412, %v877
      %879 = vrot.lane.b32.xlu0 %v878, 32
      %v880 = vpop.permute.xlu0 %879
      %v882 = vadd.f32 %v872, %v880
      %v883 = vadd.f32 %v873, %v880
      %v884 = vtanh.pop %v882
      %v885 = vtanh.pop %v883
      %888 = vrot.lane.b32.xlu0 %v884, 64
      %v889 = vpop.permute.xlu0 %888
      %890 = vrot.lane.b32.xlu0 %v885, 64
      %v891 = vpop.permute.xlu0 %890
      %v894 = vmul.f32 %v789, %v889
      %v895 = vmul.f32 %v791, %v891
      %897 = vrot.lane.b32.xlu0 %v894, 32
      %v898 = vpop.permute.xlu0 %897
      %v899 = vsel %vm441, %v898, 0
      %901 = vmatprep.subr.mxu0 0.0
      %902 = vmatpush1.msra.mxu0 %v392
      %903 = vmatprep.subr.mxu0 0.0
      %904 = vmatpush1.msra.mxu0 %v393
      %905 = vmatprep.subr.mxu0 0.0
      %906 = vmatpush1.msra.mxu0 %v394
      %907 = vmatprep.subr.mxu0 0.0
      %908 = vmatpush1.msra.mxu0 %v395
      %909 = vmatprep.subr.mxu0 0.0
      %910 = vmatpush1.msra.mxu0 0.0
      %911 = vmatprep.subr.mxu0 0.0
      %912 = vmatpush1.msra.mxu0 0.0
      %913 = vmatprep.subr.mxu0 0.0
      %914 = vmatpush1.msra.mxu0 0.0
      %915 = vmatprep.subr.mxu0 0.0
      %916 = vmatpush1.msra.mxu0 0.0
      %917 = vmatprep.subr.mxu0 0.0
      %918 = vmatpush1.msra.mxu0 0.0
      %919 = vmatprep.subr.mxu0 0.0
      %920 = vmatpush1.msra.mxu0 0.0
      %921 = vmatprep.subr.mxu0 0.0
      %922 = vmatpush1.msra.mxu0 0.0
      %923 = vmatprep.subr.mxu0 0.0
      %924 = vmatpush1.msra.mxu0 0.0
      %925 = vmatprep.subr.mxu0 0.0
      %926 = vmatpush1.msra.mxu0 0.0
      %927 = vmatprep.subr.mxu0 0.0
      %928 = vmatpush1.msra.mxu0 0.0
      %929 = vmatprep.subr.mxu0 0.0
      %930 = vmatpush1.msra.mxu0 0.0
      %931 = vmatprep.subr.mxu0 0.0
      %932 = vmatpush1.msra.mxu0 0.0
      %933 = vmatprep.subr.mxu0 0.0
      %934 = vmatpush1.msra.mxu0 0.0
      %935 = vmatprep.subr.mxu0 0.0
      %936 = vmatpush1.msra.mxu0 0.0
      %937 = vmatprep.subr.mxu0 0.0
      %938 = vmatpush1.msra.mxu0 0.0
      %939 = vmatprep.subr.mxu0 0.0
      %940 = vmatpush1.msra.mxu0 0.0
      %941 = vmatprep.subr.mxu0 0.0
      %942 = vmatpush1.msra.mxu0 0.0
      %943 = vmatprep.subr.mxu0 0.0
      %944 = vmatpush1.msra.mxu0 0.0
      %945 = vmatprep.subr.mxu0 0.0
      %946 = vmatpush1.msra.mxu0 0.0
      %947 = vmatprep.subr.mxu0 0.0
      %948 = vmatpush1.msra.mxu0 0.0
      %949 = vmatprep.subr.mxu0 0.0
      %950 = vmatpush1.msra.mxu0 0.0
      %951 = vmatprep.subr.mxu0 0.0
      %952 = vmatpush1.msra.mxu0 0.0
      %953 = vmatprep.subr.mxu0 0.0
      %954 = vmatpush1.msra.mxu0 0.0
      %955 = vmatprep.subr.mxu0 0.0
      %956 = vmatpush1.msra.mxu0 0.0
      %957 = vmatprep.subr.mxu0 0.0
      %958 = vmatpush1.msra.mxu0 0.0
      %959 = vmatprep.subr.mxu0 0.0
      %960 = vmatpush1.msra.mxu0 0.0
      %961 = vmatprep.subr.mxu0 0.0
      %962 = vmatpush1.msra.mxu0 0.0
      %963 = vmatprep.subr.mxu0 0.0
      %964 = vmatpush1.msra.mxu0 0.0
      %965 = vmatprep.mubr.f32.mxu0 0.0
      %966 = vmatmul.mubr.f32.gmra.mrb[0].mxu0 %v899
      %v967 = vpop.f32.mrb[0].mxu0
      %v968 = vadd.f32 0.0, %v967
      %v969 = vpop.f32.mrb[0].mxu0
      %970 = vdwg.mxu0
      %972 = vrot.lane.b32.xlu0 %v895, 32
      %v973 = vpop.permute.xlu0 %972
      %v974 = vsel %vm441, %v973, 0
      %976 = vmatprep.subr.mxu0 0.0
      %977 = vmatpush1.msra.mxu0 %v396
      %978 = vmatprep.subr.mxu0 0.0
      %979 = vmatpush1.msra.mxu0 %v397
      %980 = vmatprep.subr.mxu0 0.0
      %981 = vmatpush1.msra.mxu0 %v398
      %982 = vmatprep.subr.mxu0 0.0
      %983 = vmatpush1.msra.mxu0 %v399
      %984 = vmatprep.subr.mxu0 0.0
      %985 = vmatpush1.msra.mxu0 0.0
      %986 = vmatprep.subr.mxu0 0.0
      %987 = vmatpush1.msra.mxu0 0.0
      %988 = vmatprep.subr.mxu0 0.0
      %989 = vmatpush1.msra.mxu0 0.0
      %990 = vmatprep.subr.mxu0 0.0
      %991 = vmatpush1.msra.mxu0 0.0
      %992 = vmatprep.subr.mxu0 0.0
      %993 = vmatpush1.msra.mxu0 0.0
      %994 = vmatprep.subr.mxu0 0.0
      %995 = vmatpush1.msra.mxu0 0.0
      %996 = vmatprep.subr.mxu0 0.0
      %997 = vmatpush1.msra.mxu0 0.0
      %998 = vmatprep.subr.mxu0 0.0
      %999 = vmatpush1.msra.mxu0 0.0
      %1000 = vmatprep.subr.mxu0 0.0
      %1001 = vmatpush1.msra.mxu0 0.0
      %1002 = vmatprep.subr.mxu0 0.0
      %1003 = vmatpush1.msra.mxu0 0.0
      %1004 = vmatprep.subr.mxu0 0.0
      %1005 = vmatpush1.msra.mxu0 0.0
      %1006 = vmatprep.subr.mxu0 0.0
      %1007 = vmatpush1.msra.mxu0 0.0
      %1008 = vmatprep.subr.mxu0 0.0
      %1009 = vmatpush1.msra.mxu0 0.0
      %1010 = vmatprep.subr.mxu0 0.0
      %1011 = vmatpush1.msra.mxu0 0.0
      %1012 = vmatprep.subr.mxu0 0.0
      %1013 = vmatpush1.msra.mxu0 0.0
      %1014 = vmatprep.subr.mxu0 0.0
      %1015 = vmatpush1.msra.mxu0 0.0
      %1016 = vmatprep.subr.mxu0 0.0
      %1017 = vmatpush1.msra.mxu0 0.0
      %1018 = vmatprep.subr.mxu0 0.0
      %1019 = vmatpush1.msra.mxu0 0.0
      %1020 = vmatprep.subr.mxu0 0.0
      %1021 = vmatpush1.msra.mxu0 0.0
      %1022 = vmatprep.subr.mxu0 0.0
      %1023 = vmatpush1.msra.mxu0 0.0
      %1024 = vmatprep.subr.mxu0 0.0
      %1025 = vmatpush1.msra.mxu0 0.0
      %1026 = vmatprep.subr.mxu0 0.0
      %1027 = vmatpush1.msra.mxu0 0.0
      %1028 = vmatprep.subr.mxu0 0.0
      %1029 = vmatpush1.msra.mxu0 0.0
      %1030 = vmatprep.subr.mxu0 0.0
      %1031 = vmatpush1.msra.mxu0 0.0
      %1032 = vmatprep.subr.mxu0 0.0
      %1033 = vmatpush1.msra.mxu0 0.0
      %1034 = vmatprep.subr.mxu0 0.0
      %1035 = vmatpush1.msra.mxu0 0.0
      %1036 = vmatprep.subr.mxu0 0.0
      %1037 = vmatpush1.msra.mxu0 0.0
      %1038 = vmatprep.subr.mxu0 0.0
      %1039 = vmatpush1.msra.mxu0 0.0
      %1040 = vmatprep.mubr.f32.mxu0 0.0
      %1041 = vmatmul.mubr.f32.gmra.mrb[0].mxu0 %v974
      %v1042 = vpop.f32.mrb[0].mxu0
      %v1043 = vadd.f32 0.0, %v1042
      %v1044 = vpop.f32.mrb[0].mxu0
      %1045 = vdwg.mxu0
      %v1047 = vrot.slane %v402, 1
      %v1050 = vadd.f32 %v968, %v402
      %v1051 = vadd.f32 %v1043, %v1047
      %v1054 = vrot.slane %v1051, 7
      %v1055 = vsel %vm601, %v1054, %v1050
      %1057 = vmatprep.subr.mxu0 0.0
      %1058 = vmatpush1.msra.mxu0 %v367
      %1059 = vmatprep.subr.mxu0 0.0
      %1060 = vmatpush1.msra.mxu0 %v368
      %1061 = vmatprep.subr.mxu0 0.0
      %1062 = vmatpush1.msra.mxu0 %v369
      %1063 = vmatprep.subr.mxu0 0.0
      %1064 = vmatpush1.msra.mxu0 %v370
      %1065 = vmatprep.subr.mxu0 0.0
      %1066 = vmatpush1.msra.mxu0 %v371
      %1067 = vmatprep.subr.mxu0 0.0
      %1068 = vmatpush1.msra.mxu0 %v372
      %1069 = vmatprep.subr.mxu0 0.0
      %1070 = vmatpush1.msra.mxu0 %v373
      %1071 = vmatprep.subr.mxu0 0.0
      %1072 = vmatpush1.msra.mxu0 %v374
      %1073 = vmatprep.subr.mxu0 0.0
      %1074 = vmatpush1.msra.mxu0 %v375
      %1075 = vmatprep.subr.mxu0 0.0
      %1076 = vmatpush1.msra.mxu0 %v376
      %1077 = vmatprep.subr.mxu0 0.0
      %1078 = vmatpush1.msra.mxu0 %v377
      %1079 = vmatprep.subr.mxu0 0.0
      %1080 = vmatpush1.msra.mxu0 %v378
      %1081 = vmatprep.subr.mxu0 0.0
      %1082 = vmatpush1.msra.mxu0 %v379
      %1083 = vmatprep.subr.mxu0 0.0
      %1084 = vmatpush1.msra.mxu0 %v380
      %1085 = vmatprep.subr.mxu0 0.0
      %1086 = vmatpush1.msra.mxu0 %v381
      %1087 = vmatprep.subr.mxu0 0.0
      %1088 = vmatpush1.msra.mxu0 %v382
      %1089 = vmatprep.subr.mxu0 0.0
      %1090 = vmatpush1.msra.mxu0 0.0
      %1091 = vmatprep.subr.mxu0 0.0
      %1092 = vmatpush1.msra.mxu0 0.0
      %1093 = vmatprep.subr.mxu0 0.0
      %1094 = vmatpush1.msra.mxu0 0.0
      %1095 = vmatprep.subr.mxu0 0.0
      %1096 = vmatpush1.msra.mxu0 0.0
      %1097 = vmatprep.subr.mxu0 0.0
      %1098 = vmatpush1.msra.mxu0 0.0
      %1099 = vmatprep.subr.mxu0 0.0
      %1100 = vmatpush1.msra.mxu0 0.0
      %1101 = vmatprep.subr.mxu0 0.0
      %1102 = vmatpush1.msra.mxu0 0.0
      %1103 = vmatprep.subr.mxu0 0.0
      %1104 = vmatpush1.msra.mxu0 0.0
      %1105 = vmatprep.subr.mxu0 0.0
      %1106 = vmatpush1.msra.mxu0 0.0
      %1107 = vmatprep.subr.mxu0 0.0
      %1108 = vmatpush1.msra.mxu0 0.0
      %1109 = vmatprep.subr.mxu0 0.0
      %1110 = vmatpush1.msra.mxu0 0.0
      %1111 = vmatprep.subr.mxu0 0.0
      %1112 = vmatpush1.msra.mxu0 0.0
      %1113 = vmatprep.subr.mxu0 0.0
      %1114 = vmatpush1.msra.mxu0 0.0
      %1115 = vmatprep.subr.mxu0 0.0
      %1116 = vmatpush1.msra.mxu0 0.0
      %1117 = vmatprep.subr.mxu0 0.0
      %1118 = vmatpush1.msra.mxu0 0.0
      %1119 = vmatprep.subr.mxu0 0.0
      %1120 = vmatpush1.msra.mxu0 0.0
      %1121 = vmatprep.mubr.f32.mxu0 0.0
      %1122 = vmatmul.mubr.f32.gmra.mrb[0].mxu0 %v1055
      %v1123 = vpop.f32.mrb[0].mxu0
      %v1124 = vadd.f32 0.0, %v1123
      %v1125 = vpop.f32.mrb[0].mxu0
      %1126 = vdwg.mxu0
      %v1128 = vrot.slane %v1124, 1
      %v1131 = vsub.f32 %v1050, %v1124
      %v1132 = vsub.f32 %v1051, %v1128
      %v1133 = vmul.f32 %v1131, %v1131
      %v1134 = vmul.f32 %v1132, %v1132
      %v1137 = vrot.slane %v1134, 7
      %v1138 = vsel %vm601, %v1137, %v1133
      %1140 = vmatprep.subr.mxu0 0.0
      %1141 = vmatpush1.msra.mxu0 %v367
      %1142 = vmatprep.subr.mxu0 0.0
      %1143 = vmatpush1.msra.mxu0 %v368
      %1144 = vmatprep.subr.mxu0 0.0
      %1145 = vmatpush1.msra.mxu0 %v369
      %1146 = vmatprep.subr.mxu0 0.0
      %1147 = vmatpush1.msra.mxu0 %v370
      %1148 = vmatprep.subr.mxu0 0.0
      %1149 = vmatpush1.msra.mxu0 %v371
      %1150 = vmatprep.subr.mxu0 0.0
      %1151 = vmatpush1.msra.mxu0 %v372
      %1152 = vmatprep.subr.mxu0 0.0
      %1153 = vmatpush1.msra.mxu0 %v373
      %1154 = vmatprep.subr.mxu0 0.0
      %1155 = vmatpush1.msra.mxu0 %v374
      %1156 = vmatprep.subr.mxu0 0.0
      %1157 = vmatpush1.msra.mxu0 %v375
      %1158 = vmatprep.subr.mxu0 0.0
      %1159 = vmatpush1.msra.mxu0 %v376
      %1160 = vmatprep.subr.mxu0 0.0
      %1161 = vmatpush1.msra.mxu0 %v377
      %1162 = vmatprep.subr.mxu0 0.0
      %1163 = vmatpush1.msra.mxu0 %v378
      %1164 = vmatprep.subr.mxu0 0.0
      %1165 = vmatpush1.msra.mxu0 %v379
      %1166 = vmatprep.subr.mxu0 0.0
      %1167 = vmatpush1.msra.mxu0 %v380
      %1168 = vmatprep.subr.mxu0 0.0
      %1169 = vmatpush1.msra.mxu0 %v381
      %1170 = vmatprep.subr.mxu0 0.0
      %1171 = vmatpush1.msra.mxu0 %v382
      %1172 = vmatprep.subr.mxu0 0.0
      %1173 = vmatpush1.msra.mxu0 0.0
      %1174 = vmatprep.subr.mxu0 0.0
      %1175 = vmatpush1.msra.mxu0 0.0
      %1176 = vmatprep.subr.mxu0 0.0
      %1177 = vmatpush1.msra.mxu0 0.0
      %1178 = vmatprep.subr.mxu0 0.0
      %1179 = vmatpush1.msra.mxu0 0.0
      %1180 = vmatprep.subr.mxu0 0.0
      %1181 = vmatpush1.msra.mxu0 0.0
      %1182 = vmatprep.subr.mxu0 0.0
      %1183 = vmatpush1.msra.mxu0 0.0
      %1184 = vmatprep.subr.mxu0 0.0
      %1185 = vmatpush1.msra.mxu0 0.0
      %1186 = vmatprep.subr.mxu0 0.0
      %1187 = vmatpush1.msra.mxu0 0.0
      %1188 = vmatprep.subr.mxu0 0.0
      %1189 = vmatpush1.msra.mxu0 0.0
      %1190 = vmatprep.subr.mxu0 0.0
      %1191 = vmatpush1.msra.mxu0 0.0
      %1192 = vmatprep.subr.mxu0 0.0
      %1193 = vmatpush1.msra.mxu0 0.0
      %1194 = vmatprep.subr.mxu0 0.0
      %1195 = vmatpush1.msra.mxu0 0.0
      %1196 = vmatprep.subr.mxu0 0.0
      %1197 = vmatpush1.msra.mxu0 0.0
      %1198 = vmatprep.subr.mxu0 0.0
      %1199 = vmatpush1.msra.mxu0 0.0
      %1200 = vmatprep.subr.mxu0 0.0
      %1201 = vmatpush1.msra.mxu0 0.0
      %1202 = vmatprep.subr.mxu0 0.0
      %1203 = vmatpush1.msra.mxu0 0.0
      %1204 = vmatprep.mubr.f32.mxu0 0.0
      %1205 = vmatmul.mubr.f32.gmra.mrb[0].mxu0 %v1138
      %v1206 = vpop.f32.mrb[0].mxu0
      %v1207 = vadd.f32 1e-05, %v1206
      %v1208 = vpop.f32.mrb[0].mxu0
      %1209 = vdwg.mxu0
      %v1210 = vrsqrt.pop %v1207
      %v1212 = vrot.slane %v1210, 1
      %v1215 = vmul.f32 %v1131, %v1210
      %v1216 = vmul.f32 %v1132, %v1212
      %v1218 = vlaneseq
      %v1219 = vshrl.u32 %v1218, 7
      %v1220 = vsub.s32 0, %v1219
      %v1221 = vrot.slane %v405, %v1220
      %v1223 = vmul.f32 %v1215, %v1221
      %v1224 = vmul.f32 %v1216, %v1221
      %v1226 = vlaneseq
      %v1227 = vshrl.u32 %v1226, 7
      %v1228 = vsub.s32 0, %v1227
      %v1229 = vrot.slane %v408, %v1228
      %v1231 = vadd.f32 %v1223, %v1229
      %v1232 = vadd.f32 %v1224, %v1229
      %v1233 = vxor.u32 %v1231, 2147483648
      %v1234 = vxor.u32 %v1232, 2147483648
      %v1235 = vmul.f32 %v1233, 1.442695
      %v1236 = vpow.pop %v1235
      %v1237 = vmul.f32 %v1234, 1.442695
      %v1238 = vpow.pop %v1237
      %v1239 = vadd.f32 %v1236, 1.0
      %v1240 = vadd.f32 %v1238, 1.0
      %v1241 = vrcp.pop %v1239
      %v1242 = vmul.f32 1.0, %v1241
      %v1243 = vrcp.pop %v1240
      %v1244 = vmul.f32 1.0, %v1243
      %v1245 = vtanh.pop %v1231
      %v1246 = vtanh.pop %v1232
      %v1247 = vmul.f32 %v1242, %v822
      %v1248 = vmul.f32 %v1244, %v823
      %1251 = vrot.lane.b32.xlu0 %v1245, 64
      %v1252 = vpop.permute.xlu0 %1251
      %1253 = vrot.lane.b32.xlu0 %v1246, 64
      %v1254 = vpop.permute.xlu0 %1253
      %v1257 = vmul.f32 %v1242, %v1252
      %v1258 = vmul.f32 %v1244, %v1254
      %1261 = vrot.lane.b32.xlu0 %v1257, 32
      %v1262 = vpop.permute.xlu0 %1261
      %1263 = vrot.lane.b32.xlu0 %v1258, 32
      %v1264 = vpop.permute.xlu0 %1263
      %v1267 = vadd.f32 %v1247, %v1262
      %v1268 = vadd.f32 %v1248, %v1264
      %v1271 = vrot.slane %v1268, 7
      %v1272 = vsel %vm601, %v1271, %v1267
      %1273 = vrot.lane.b32.xlu0 %v1272, 96
      %v1274 = vpop.permute.xlu0 %1273
      %v1276 = vsel %vm831, %v1274, 0.0
      %1277 = vadd.xlane.f32.xlu0 %v1276
      %v1278 = vpop.xlane.xlu0 %1277
      %v1279 = vmul.f32 %v1278, %v835
      %v1281 = vrot.slane %v1279, 1
      %v1284 = vsub.f32 %v1267, %v1279
      %v1285 = vsub.f32 %v1268, %v1281
      %v1286 = vmul.f32 %v1284, %v1284
      %v1287 = vmul.f32 %v1285, %v1285
      %v1290 = vrot.slane %v1287, 7
      %v1291 = vsel %vm601, %v1290, %v1286
      %1292 = vrot.lane.b32.xlu0 %v1291, 96
      %v1293 = vpop.permute.xlu0 %1292
      %v1295 = vsel %vm831, %v1293, 0.0
      %1296 = vadd.xlane.f32.xlu0 %v1295
      %v1297 = vpop.xlane.xlu0 %1296
      %v1298 = vmul.f32 %v1297, %v835
      %v1299 = vadd.f32 %v1298, 1e-05
      %v1300 = vrsqrt.pop %v1299
      %v1302 = vrot.slane %v1300, 1
      %v1305 = vmul.f32 %v1284, %v1300
      %v1306 = vmul.f32 %v1285, %v1302
      %v1308 = vlaneseq
      %v1309 = vshrl.u32 %v1308, 7
      %v1310 = vsub.s32 0, %v1309
      %v1311 = vrot.slane %v411, %v1310
      %1312 = vrot.lane.b32.xlu0 %v1311, 32
      %v1313 = vpop.permute.xlu0 %1312
      %v1315 = vmul.f32 %v1305, %v1313
      %v1316 = vmul.f32 %v1306, %v1313
      %v1318 = vlaneseq
      %v1319 = vshrl.u32 %v1318, 7
      %v1320 = vsub.s32 0, %v1319
      %v1321 = vrot.slane %v414, %v1320
      %1322 = vrot.lane.b32.xlu0 %v1321, 32
      %v1323 = vpop.permute.xlu0 %1322
      %v1325 = vadd.f32 %v1315, %v1323
      %v1326 = vadd.f32 %v1316, %v1323
      %v1327 = vtanh.pop %v1325
      %v1328 = vtanh.pop %v1326
      %1331 = vrot.lane.b32.xlu0 %v1327, 64
      %v1332 = vpop.permute.xlu0 %1331
      %1333 = vrot.lane.b32.xlu0 %v1328, 64
      %v1334 = vpop.permute.xlu0 %1333
      %v1337 = vmul.f32 %v1242, %v1332
      %v1338 = vmul.f32 %v1244, %v1334
      %v1341 = vrot.slane %v1338, 7
      %v1342 = vsel %vm601, %v1341, %v1337
      %1343 = vrot.lane.b32.xlu0 %v1342, 32
      %v1344 = vpop.permute.xlu0 %1343
      %1346 = vst.msk [vmem:[%s281] sm:$0x3] %vm831, %v1344
      %s1347 = scalar_lea.vmem %s275, 2
      %v1348 = vld [vmem:[%s1347] sm:$0x3]
      %1349 = vrot.lane.b32.xlu0 %v1337, 32
      %v1350 = vpop.permute.xlu0 %1349
      %v1351 = vsel %vm441, %v1350, 0
      %1353 = vmatprep.subr.mxu0 0.0
      %1354 = vmatpush1.msra.mxu0 %v383
      %1355 = vmatprep.subr.mxu0 0.0
      %1356 = vmatpush1.msra.mxu0 %v384
      %1357 = vmatprep.subr.mxu0 0.0
      %1358 = vmatpush1.msra.mxu0 %v385
      %1359 = vmatprep.subr.mxu0 0.0
      %1360 = vmatpush1.msra.mxu0 %v386
      %1361 = vmatprep.subr.mxu0 0.0
      %1362 = vmatpush1.msra.mxu0 0.0
      %1363 = vmatprep.subr.mxu0 0.0
      %1364 = vmatpush1.msra.mxu0 0.0
      %1365 = vmatprep.subr.mxu0 0.0
      %1366 = vmatpush1.msra.mxu0 0.0
      %1367 = vmatprep.subr.mxu0 0.0
      %1368 = vmatpush1.msra.mxu0 0.0
      %1369 = vmatprep.subr.mxu0 0.0
      %1370 = vmatpush1.msra.mxu0 0.0
      %1371 = vmatprep.subr.mxu0 0.0
      %1372 = vmatpush1.msra.mxu0 0.0
      %1373 = vmatprep.subr.mxu0 0.0
      %1374 = vmatpush1.msra.mxu0 0.0
      %1375 = vmatprep.subr.mxu0 0.0
      %1376 = vmatpush1.msra.mxu0 0.0
      %1377 = vmatprep.subr.mxu0 0.0
      %1378 = vmatpush1.msra.mxu0 0.0
      %1379 = vmatprep.subr.mxu0 0.0
      %1380 = vmatpush1.msra.mxu0 0.0
      %1381 = vmatprep.subr.mxu0 0.0
      %1382 = vmatpush1.msra.mxu0 0.0
      %1383 = vmatprep.subr.mxu0 0.0
      %1384 = vmatpush1.msra.mxu0 0.0
      %1385 = vmatprep.subr.mxu0 0.0
      %1386 = vmatpush1.msra.mxu0 0.0
      %1387 = vmatprep.subr.mxu0 0.0
      %1388 = vmatpush1.msra.mxu0 0.0
      %1389 = vmatprep.subr.mxu0 0.0
      %1390 = vmatpush1.msra.mxu0 0.0
      %1391 = vmatprep.subr.mxu0 0.0
      %1392 = vmatpush1.msra.mxu0 0.0
      %1393 = vmatprep.subr.mxu0 0.0
      %1394 = vmatpush1.msra.mxu0 0.0
      %1395 = vmatprep.subr.mxu0 0.0
      %1396 = vmatpush1.msra.mxu0 0.0
      %1397 = vmatprep.subr.mxu0 0.0
      %1398 = vmatpush1.msra.mxu0 0.0
      %1399 = vmatprep.subr.mxu0 0.0
      %1400 = vmatpush1.msra.mxu0 0.0
      %1401 = vmatprep.subr.mxu0 0.0
      %1402 = vmatpush1.msra.mxu0 0.0
      %1403 = vmatprep.subr.mxu0 0.0
      %1404 = vmatpush1.msra.mxu0 0.0
      %1405 = vmatprep.subr.mxu0 0.0
      %1406 = vmatpush1.msra.mxu0 0.0
      %1407 = vmatprep.subr.mxu0 0.0
      %1408 = vmatpush1.msra.mxu0 0.0
      %1409 = vmatprep.subr.mxu0 0.0
      %1410 = vmatpush1.msra.mxu0 0.0
      %1411 = vmatprep.subr.mxu0 0.0
      %1412 = vmatpush1.msra.mxu0 0.0
      %1413 = vmatprep.subr.mxu0 0.0
      %1414 = vmatpush1.msra.mxu0 0.0
      %1415 = vmatprep.subr.mxu0 0.0
      %1416 = vmatpush1.msra.mxu0 0.0
      %1417 = vmatprep.mubr.f32.mxu0 0.0
      %1418 = vmatmul.mubr.f32.gmra.mrb[0].mxu0 %v1351
      %v1419 = vpop.f32.mrb[0].mxu0
      %v1420 = vadd.f32 0.0, %v1419
      %v1421 = vpop.f32.mrb[0].mxu0
      %1422 = vdwg.mxu0
      %1423 = vrot.lane.b32.xlu0 %v1338, 32
      %v1424 = vpop.permute.xlu0 %1423
      %v1425 = vsel %vm441, %v1424, 0
      %1427 = vmatprep.subr.mxu0 0.0
      %1428 = vmatpush1.msra.mxu0 %v387
      %1429 = vmatprep.subr.mxu0 0.0
      %1430 = vmatpush1.msra.mxu0 %v388
      %1431 = vmatprep.subr.mxu0 0.0
      %1432 = vmatpush1.msra.mxu0 %v389
      %1433 = vmatprep.subr.mxu0 0.0
      %1434 = vmatpush1.msra.mxu0 %v390
      %1435 = vmatprep.subr.mxu0 0.0
      %1436 = vmatpush1.msra.mxu0 0.0
      %1437 = vmatprep.subr.mxu0 0.0
      %1438 = vmatpush1.msra.mxu0 0.0
      %1439 = vmatprep.subr.mxu0 0.0
      %1440 = vmatpush1.msra.mxu0 0.0
      %1441 = vmatprep.subr.mxu0 0.0
      %1442 = vmatpush1.msra.mxu0 0.0
      %1443 = vmatprep.subr.mxu0 0.0
      %1444 = vmatpush1.msra.mxu0 0.0
      %1445 = vmatprep.subr.mxu0 0.0
      %1446 = vmatpush1.msra.mxu0 0.0
      %1447 = vmatprep.subr.mxu0 0.0
      %1448 = vmatpush1.msra.mxu0 0.0
      %1449 = vmatprep.subr.mxu0 0.0
      %1450 = vmatpush1.msra.mxu0 0.0
      %1451 = vmatprep.subr.mxu0 0.0
      %1452 = vmatpush1.msra.mxu0 0.0
      %1453 = vmatprep.subr.mxu0 0.0
      %1454 = vmatpush1.msra.mxu0 0.0
      %1455 = vmatprep.subr.mxu0 0.0
      %1456 = vmatpush1.msra.mxu0 0.0
      %1457 = vmatprep.subr.mxu0 0.0
      %1458 = vmatpush1.msra.mxu0 0.0
      %1459 = vmatprep.subr.mxu0 0.0
      %1460 = vmatpush1.msra.mxu0 0.0
      %1461 = vmatprep.subr.mxu0 0.0
      %1462 = vmatpush1.msra.mxu0 0.0
      %1463 = vmatprep.subr.mxu0 0.0
      %1464 = vmatpush1.msra.mxu0 0.0
      %1465 = vmatprep.subr.mxu0 0.0
      %1466 = vmatpush1.msra.mxu0 0.0
      %1467 = vmatprep.subr.mxu0 0.0
      %1468 = vmatpush1.msra.mxu0 0.0
      %1469 = vmatprep.subr.mxu0 0.0
      %1470 = vmatpush1.msra.mxu0 0.0
      %1471 = vmatprep.subr.mxu0 0.0
      %1472 = vmatpush1.msra.mxu0 0.0
      %1473 = vmatprep.subr.mxu0 0.0
      %1474 = vmatpush1.msra.mxu0 0.0
      %1475 = vmatprep.subr.mxu0 0.0
      %1476 = vmatpush1.msra.mxu0 0.0
      %1477 = vmatprep.subr.mxu0 0.0
      %1478 = vmatpush1.msra.mxu0 0.0
      %1479 = vmatprep.subr.mxu0 0.0
      %1480 = vmatpush1.msra.mxu0 0.0
      %1481 = vmatprep.subr.mxu0 0.0
      %1482 = vmatpush1.msra.mxu0 0.0
      %1483 = vmatprep.subr.mxu0 0.0
      %1484 = vmatpush1.msra.mxu0 0.0
      %1485 = vmatprep.subr.mxu0 0.0
      %1486 = vmatpush1.msra.mxu0 0.0
      %1487 = vmatprep.subr.mxu0 0.0
      %1488 = vmatpush1.msra.mxu0 0.0
      %1489 = vmatprep.subr.mxu0 0.0
      %1490 = vmatpush1.msra.mxu0 0.0
      %1491 = vmatprep.mubr.f32.mxu0 0.0
      %1492 = vmatmul.mubr.f32.gmra.mrb[0].mxu0 %v1425
      %v1493 = vpop.f32.mrb[0].mxu0
      %v1494 = vadd.f32 0.0, %v1493
      %v1495 = vpop.f32.mrb[0].mxu0
      %1496 = vdwg.mxu0
      %v1497 = vadd.f32 %v1420, %v400
      %v1498 = vadd.f32 %v1494, %v587
      %v1500 = vrot.slane %v1348, 1
      %v1503 = vadd.f32 %v1497, %v1348
      %v1504 = vadd.f32 %v1498, %v1500
      %v1507 = vrot.slane %v1504, 7
      %v1508 = vsel %vm601, %v1507, %v1503
      %1510 = vmatprep.subr.mxu0 0.0
      %1511 = vmatpush1.msra.mxu0 %v367
      %1512 = vmatprep.subr.mxu0 0.0
      %1513 = vmatpush1.msra.mxu0 %v368
      %1514 = vmatprep.subr.mxu0 0.0
      %1515 = vmatpush1.msra.mxu0 %v369
      %1516 = vmatprep.subr.mxu0 0.0
      %1517 = vmatpush1.msra.mxu0 %v370
      %1518 = vmatprep.subr.mxu0 0.0
      %1519 = vmatpush1.msra.mxu0 %v371
      %1520 = vmatprep.subr.mxu0 0.0
      %1521 = vmatpush1.msra.mxu0 %v372
      %1522 = vmatprep.subr.mxu0 0.0
      %1523 = vmatpush1.msra.mxu0 %v373
      %1524 = vmatprep.subr.mxu0 0.0
      %1525 = vmatpush1.msra.mxu0 %v374
      %1526 = vmatprep.subr.mxu0 0.0
      %1527 = vmatpush1.msra.mxu0 %v375
      %1528 = vmatprep.subr.mxu0 0.0
      %1529 = vmatpush1.msra.mxu0 %v376
      %1530 = vmatprep.subr.mxu0 0.0
      %1531 = vmatpush1.msra.mxu0 %v377
      %1532 = vmatprep.subr.mxu0 0.0
      %1533 = vmatpush1.msra.mxu0 %v378
      %1534 = vmatprep.subr.mxu0 0.0
      %1535 = vmatpush1.msra.mxu0 %v379
      %1536 = vmatprep.subr.mxu0 0.0
      %1537 = vmatpush1.msra.mxu0 %v380
      %1538 = vmatprep.subr.mxu0 0.0
      %1539 = vmatpush1.msra.mxu0 %v381
      %1540 = vmatprep.subr.mxu0 0.0
      %1541 = vmatpush1.msra.mxu0 %v382
      %1542 = vmatprep.subr.mxu0 0.0
      %1543 = vmatpush1.msra.mxu0 0.0
      %1544 = vmatprep.subr.mxu0 0.0
      %1545 = vmatpush1.msra.mxu0 0.0
      %1546 = vmatprep.subr.mxu0 0.0
      %1547 = vmatpush1.msra.mxu0 0.0
      %1548 = vmatprep.subr.mxu0 0.0
      %1549 = vmatpush1.msra.mxu0 0.0
      %1550 = vmatprep.subr.mxu0 0.0
      %1551 = vmatpush1.msra.mxu0 0.0
      %1552 = vmatprep.subr.mxu0 0.0
      %1553 = vmatpush1.msra.mxu0 0.0
      %1554 = vmatprep.subr.mxu0 0.0
      %1555 = vmatpush1.msra.mxu0 0.0
      %1556 = vmatprep.subr.mxu0 0.0
      %1557 = vmatpush1.msra.mxu0 0.0
      %1558 = vmatprep.subr.mxu0 0.0
      %1559 = vmatpush1.msra.mxu0 0.0
      %1560 = vmatprep.subr.mxu0 0.0
      %1561 = vmatpush1.msra.mxu0 0.0
      %1562 = vmatprep.subr.mxu0 0.0
      %1563 = vmatpush1.msra.mxu0 0.0
      %1564 = vmatprep.subr.mxu0 0.0
      %1565 = vmatpush1.msra.mxu0 0.0
      %1566 = vmatprep.subr.mxu0 0.0
      %1567 = vmatpush1.msra.mxu0 0.0
      %1568 = vmatprep.subr.mxu0 0.0
      %1569 = vmatpush1.msra.mxu0 0.0
      %1570 = vmatprep.subr.mxu0 0.0
      %1571 = vmatpush1.msra.mxu0 0.0
      %1572 = vmatprep.subr.mxu0 0.0
      %1573 = vmatpush1.msra.mxu0 0.0
      %1574 = vmatprep.mubr.f32.mxu0 0.0
      %1575 = vmatmul.mubr.f32.gmra.mrb[0].mxu0 %v1508
      %v1576 = vpop.f32.mrb[0].mxu0
      %v1577 = vadd.f32 0.0, %v1576
      %v1578 = vpop.f32.mrb[0].mxu0
      %1579 = vdwg.mxu0
      %v1581 = vrot.slane %v1577, 1
      %v1584 = vsub.f32 %v1503, %v1577
      %v1585 = vsub.f32 %v1504, %v1581
      %v1586 = vmul.f32 %v1584, %v1584
      %v1587 = vmul.f32 %v1585, %v1585
      %v1590 = vrot.slane %v1587, 7
      %v1591 = vsel %vm601, %v1590, %v1586
      %1593 = vmatprep.subr.mxu0 0.0
      %1594 = vmatpush1.msra.mxu0 %v367
      %1595 = vmatprep.subr.mxu0 0.0
      %1596 = vmatpush1.msra.mxu0 %v368
      %1597 = vmatprep.subr.mxu0 0.0
      %1598 = vmatpush1.msra.mxu0 %v369
      %1599 = vmatprep.subr.mxu0 0.0
      %1600 = vmatpush1.msra.mxu0 %v370
      %1601 = vmatprep.subr.mxu0 0.0
      %1602 = vmatpush1.msra.mxu0 %v371
      %1603 = vmatprep.subr.mxu0 0.0
      %1604 = vmatpush1.msra.mxu0 %v372
      %1605 = vmatprep.subr.mxu0 0.0
      %1606 = vmatpush1.msra.mxu0 %v373
      %1607 = vmatprep.subr.mxu0 0.0
      %1608 = vmatpush1.msra.mxu0 %v374
      %1609 = vmatprep.subr.mxu0 0.0
      %1610 = vmatpush1.msra.mxu0 %v375
      %1611 = vmatprep.subr.mxu0 0.0
      %1612 = vmatpush1.msra.mxu0 %v376
      %1613 = vmatprep.subr.mxu0 0.0
      %1614 = vmatpush1.msra.mxu0 %v377
      %1615 = vmatprep.subr.mxu0 0.0
      %1616 = vmatpush1.msra.mxu0 %v378
      %1617 = vmatprep.subr.mxu0 0.0
      %1618 = vmatpush1.msra.mxu0 %v379
      %1619 = vmatprep.subr.mxu0 0.0
      %1620 = vmatpush1.msra.mxu0 %v380
      %1621 = vmatprep.subr.mxu0 0.0
      %1622 = vmatpush1.msra.mxu0 %v381
      %1623 = vmatprep.subr.mxu0 0.0
      %1624 = vmatpush1.msra.mxu0 %v382
      %1625 = vmatprep.subr.mxu0 0.0
      %1626 = vmatpush1.msra.mxu0 0.0
      %1627 = vmatprep.subr.mxu0 0.0
      %1628 = vmatpush1.msra.mxu0 0.0
      %1629 = vmatprep.subr.mxu0 0.0
      %1630 = vmatpush1.msra.mxu0 0.0
      %1631 = vmatprep.subr.mxu0 0.0
      %1632 = vmatpush1.msra.mxu0 0.0
      %1633 = vmatprep.subr.mxu0 0.0
      %1634 = vmatpush1.msra.mxu0 0.0
      %1635 = vmatprep.subr.mxu0 0.0
      %1636 = vmatpush1.msra.mxu0 0.0
      %1637 = vmatprep.subr.mxu0 0.0
      %1638 = vmatpush1.msra.mxu0 0.0
      %1639 = vmatprep.subr.mxu0 0.0
      %1640 = vmatpush1.msra.mxu0 0.0
      %1641 = vmatprep.subr.mxu0 0.0
      %1642 = vmatpush1.msra.mxu0 0.0
      %1643 = vmatprep.subr.mxu0 0.0
      %1644 = vmatpush1.msra.mxu0 0.0
      %1645 = vmatprep.subr.mxu0 0.0
      %1646 = vmatpush1.msra.mxu0 0.0
      %1647 = vmatprep.subr.mxu0 0.0
      %1648 = vmatpush1.msra.mxu0 0.0
      %1649 = vmatprep.subr.mxu0 0.0
      %1650 = vmatpush1.msra.mxu0 0.0
      %1651 = vmatprep.subr.mxu0 0.0
      %1652 = vmatpush1.msra.mxu0 0.0
      %1653 = vmatprep.subr.mxu0 0.0
      %1654 = vmatpush1.msra.mxu0 0.0
      %1655 = vmatprep.subr.mxu0 0.0
      %1656 = vmatpush1.msra.mxu0 0.0
      %1657 = vmatprep.mubr.f32.mxu0 0.0
      %1658 = vmatmul.mubr.f32.gmra.mrb[0].mxu0 %v1591
      %v1659 = vpop.f32.mrb[0].mxu0
      %v1660 = vadd.f32 1e-05, %v1659
      %v1661 = vpop.f32.mrb[0].mxu0
      %1662 = vdwg.mxu0
      %v1663 = vrsqrt.pop %v1660
      %v1665 = vrot.slane %v1663, 1
      %v1668 = vmul.f32 %v1584, %v1663
      %v1669 = vmul.f32 %v1585, %v1665
      %v1670 = vmul.f32 %v1668, %v768
      %v1671 = vmul.f32 %v1669, %v768
      %v1672 = vadd.f32 %v1670, %v776
      %v1673 = vadd.f32 %v1671, %v776
      %v1674 = vxor.u32 %v1672, 2147483648
      %v1675 = vxor.u32 %v1673, 2147483648
      %v1676 = vmul.f32 %v1674, 1.442695
      %v1677 = vpow.pop %v1676
      %v1678 = vmul.f32 %v1675, 1.442695
      %v1679 = vpow.pop %v1678
      %v1680 = vadd.f32 %v1677, 1.0
      %v1681 = vadd.f32 %v1679, 1.0
      %v1682 = vrcp.pop %v1680
      %v1683 = vmul.f32 1.0, %v1682
      %v1684 = vrcp.pop %v1681
      %v1685 = vmul.f32 1.0, %v1684
      %v1686 = vtanh.pop %v1672
      %v1687 = vtanh.pop %v1673
      %v1688 = vmul.f32 %v1683, %v1267
      %v1689 = vmul.f32 %v1685, %v1268
      %1692 = vrot.lane.b32.xlu0 %v1686, 64
      %v1693 = vpop.permute.xlu0 %1692
      %1694 = vrot.lane.b32.xlu0 %v1687, 64
      %v1695 = vpop.permute.xlu0 %1694
      %v1698 = vmul.f32 %v1683, %v1693
      %v1699 = vmul.f32 %v1685, %v1695
      %1702 = vrot.lane.b32.xlu0 %v1698, 32
      %v1703 = vpop.permute.xlu0 %1702
      %1704 = vrot.lane.b32.xlu0 %v1699, 32
      %v1705 = vpop.permute.xlu0 %1704
      %v1708 = vadd.f32 %v1688, %v1703
      %v1709 = vadd.f32 %v1689, %v1705
      %v1712 = vrot.slane %v1709, 7
      %v1713 = vsel %vm601, %v1712, %v1708
      %1714 = vrot.lane.b32.xlu0 %v1713, 96
      %v1715 = vpop.permute.xlu0 %1714
      %v1717 = vsel %vm831, %v1715, 0.0
      %1718 = vadd.xlane.f32.xlu0 %v1717
      %v1719 = vpop.xlane.xlu0 %1718
      %v1720 = vmul.f32 %v1719, %v835
      %v1722 = vrot.slane %v1720, 1
      %v1725 = vsub.f32 %v1708, %v1720
      %v1726 = vsub.f32 %v1709, %v1722
      %v1727 = vmul.f32 %v1725, %v1725
      %v1728 = vmul.f32 %v1726, %v1726
      %v1731 = vrot.slane %v1728, 7
      %v1732 = vsel %vm601, %v1731, %v1727
      %1733 = vrot.lane.b32.xlu0 %v1732, 96
      %v1734 = vpop.permute.xlu0 %1733
      %v1736 = vsel %vm831, %v1734, 0.0
      %1737 = vadd.xlane.f32.xlu0 %v1736
      %v1738 = vpop.xlane.xlu0 %1737
      %v1739 = vmul.f32 %v1738, %v835
      %v1740 = vadd.f32 %v1739, 1e-05
      %v1741 = vrsqrt.pop %v1740
      %v1743 = vrot.slane %v1741, 1
      %v1746 = vmul.f32 %v1725, %v1741
      %v1747 = vmul.f32 %v1726, %v1743
      %v1748 = vmul.f32 %v1746, %v870
      %v1749 = vmul.f32 %v1747, %v870
      %v1750 = vadd.f32 %v1748, %v880
      %v1751 = vadd.f32 %v1749, %v880
      %v1752 = vtanh.pop %v1750
      %v1753 = vtanh.pop %v1751
      %1756 = vrot.lane.b32.xlu0 %v1752, 64
      %v1757 = vpop.permute.xlu0 %1756
      %1758 = vrot.lane.b32.xlu0 %v1753, 64
      %v1759 = vpop.permute.xlu0 %1758
      %v1762 = vmul.f32 %v1683, %v1757
      %v1763 = vmul.f32 %v1685, %v1759
      %1765 = vrot.lane.b32.xlu0 %v1762, 32
      %v1766 = vpop.permute.xlu0 %1765
      %v1767 = vsel %vm441, %v1766, 0
      %1769 = vmatprep.subr.mxu0 0.0
      %1770 = vmatpush1.msra.mxu0 %v392
      %1771 = vmatprep.subr.mxu0 0.0
      %1772 = vmatpush1.msra.mxu0 %v393
      %1773 = vmatprep.subr.mxu0 0.0
      %1774 = vmatpush1.msra.mxu0 %v394
      %1775 = vmatprep.subr.mxu0 0.0
      %1776 = vmatpush1.msra.mxu0 %v395
      %1777 = vmatprep.subr.mxu0 0.0
      %1778 = vmatpush1.msra.mxu0 0.0
      %1779 = vmatprep.subr.mxu0 0.0
      %1780 = vmatpush1.msra.mxu0 0.0
      %1781 = vmatprep.subr.mxu0 0.0
      %1782 = vmatpush1.msra.mxu0 0.0
      %1783 = vmatprep.subr.mxu0 0.0
      %1784 = vmatpush1.msra.mxu0 0.0
      %1785 = vmatprep.subr.mxu0 0.0
      %1786 = vmatpush1.msra.mxu0 0.0
      %1787 = vmatprep.subr.mxu0 0.0
      %1788 = vmatpush1.msra.mxu0 0.0
      %1789 = vmatprep.subr.mxu0 0.0
      %1790 = vmatpush1.msra.mxu0 0.0
      %1791 = vmatprep.subr.mxu0 0.0
      %1792 = vmatpush1.msra.mxu0 0.0
      %1793 = vmatprep.subr.mxu0 0.0
      %1794 = vmatpush1.msra.mxu0 0.0
      %1795 = vmatprep.subr.mxu0 0.0
      %1796 = vmatpush1.msra.mxu0 0.0
      %1797 = vmatprep.subr.mxu0 0.0
      %1798 = vmatpush1.msra.mxu0 0.0
      %1799 = vmatprep.subr.mxu0 0.0
      %1800 = vmatpush1.msra.mxu0 0.0
      %1801 = vmatprep.subr.mxu0 0.0
      %1802 = vmatpush1.msra.mxu0 0.0
      %1803 = vmatprep.subr.mxu0 0.0
      %1804 = vmatpush1.msra.mxu0 0.0
      %1805 = vmatprep.subr.mxu0 0.0
      %1806 = vmatpush1.msra.mxu0 0.0
      %1807 = vmatprep.subr.mxu0 0.0
      %1808 = vmatpush1.msra.mxu0 0.0
      %1809 = vmatprep.subr.mxu0 0.0
      %1810 = vmatpush1.msra.mxu0 0.0
      %1811 = vmatprep.subr.mxu0 0.0
      %1812 = vmatpush1.msra.mxu0 0.0
      %1813 = vmatprep.subr.mxu0 0.0
      %1814 = vmatpush1.msra.mxu0 0.0
      %1815 = vmatprep.subr.mxu0 0.0
      %1816 = vmatpush1.msra.mxu0 0.0
      %1817 = vmatprep.subr.mxu0 0.0
      %1818 = vmatpush1.msra.mxu0 0.0
      %1819 = vmatprep.subr.mxu0 0.0
      %1820 = vmatpush1.msra.mxu0 0.0
      %1821 = vmatprep.subr.mxu0 0.0
      %1822 = vmatpush1.msra.mxu0 0.0
      %1823 = vmatprep.subr.mxu0 0.0
      %1824 = vmatpush1.msra.mxu0 0.0
      %1825 = vmatprep.subr.mxu0 0.0
      %1826 = vmatpush1.msra.mxu0 0.0
      %1827 = vmatprep.subr.mxu0 0.0
      %1828 = vmatpush1.msra.mxu0 0.0
      %1829 = vmatprep.subr.mxu0 0.0
      %1830 = vmatpush1.msra.mxu0 0.0
      %1831 = vmatprep.subr.mxu0 0.0
      %1832 = vmatpush1.msra.mxu0 0.0
      %1833 = vmatprep.mubr.f32.mxu0 0.0
      %1834 = vmatmul.mubr.f32.gmra.mrb[0].mxu0 %v1767
      %v1835 = vpop.f32.mrb[0].mxu0
      %v1836 = vadd.f32 0.0, %v1835
      %v1837 = vpop.f32.mrb[0].mxu0
      %1838 = vdwg.mxu0
      %1840 = vrot.lane.b32.xlu0 %v1763, 32
      %v1841 = vpop.permute.xlu0 %1840
      %v1842 = vsel %vm441, %v1841, 0
      %1844 = vmatprep.subr.mxu0 0.0
      %1845 = vmatpush1.msra.mxu0 %v396
      %1846 = vmatprep.subr.mxu0 0.0
      %1847 = vmatpush1.msra.mxu0 %v397
      %1848 = vmatprep.subr.mxu0 0.0
      %1849 = vmatpush1.msra.mxu0 %v398
      %1850 = vmatprep.subr.mxu0 0.0
      %1851 = vmatpush1.msra.mxu0 %v399
      %1852 = vmatprep.subr.mxu0 0.0
      %1853 = vmatpush1.msra.mxu0 0.0
      %1854 = vmatprep.subr.mxu0 0.0
      %1855 = vmatpush1.msra.mxu0 0.0
      %1856 = vmatprep.subr.mxu0 0.0
      %1857 = vmatpush1.msra.mxu0 0.0
      %1858 = vmatprep.subr.mxu0 0.0
      %1859 = vmatpush1.msra.mxu0 0.0
      %1860 = vmatprep.subr.mxu0 0.0
      %1861 = vmatpush1.msra.mxu0 0.0
      %1862 = vmatprep.subr.mxu0 0.0
      %1863 = vmatpush1.msra.mxu0 0.0
      %1864 = vmatprep.subr.mxu0 0.0
      %1865 = vmatpush1.msra.mxu0 0.0
      %1866 = vmatprep.subr.mxu0 0.0
      %1867 = vmatpush1.msra.mxu0 0.0
      %1868 = vmatprep.subr.mxu0 0.0
      %1869 = vmatpush1.msra.mxu0 0.0
      %1870 = vmatprep.subr.mxu0 0.0
      %1871 = vmatpush1.msra.mxu0 0.0
      %1872 = vmatprep.subr.mxu0 0.0
      %1873 = vmatpush1.msra.mxu0 0.0
      %1874 = vmatprep.subr.mxu0 0.0
      %1875 = vmatpush1.msra.mxu0 0.0
      %1876 = vmatprep.subr.mxu0 0.0
      %1877 = vmatpush1.msra.mxu0 0.0
      %1878 = vmatprep.subr.mxu0 0.0
      %1879 = vmatpush1.msra.mxu0 0.0
      %1880 = vmatprep.subr.mxu0 0.0
      %1881 = vmatpush1.msra.mxu0 0.0
      %1882 = vmatprep.subr.mxu0 0.0
      %1883 = vmatpush1.msra.mxu0 0.0
      %1884 = vmatprep.subr.mxu0 0.0
      %1885 = vmatpush1.msra.mxu0 0.0
      %1886 = vmatprep.subr.mxu0 0.0
      %1887 = vmatpush1.msra.mxu0 0.0
      %1888 = vmatprep.subr.mxu0 0.0
      %1889 = vmatpush1.msra.mxu0 0.0
      %1890 = vmatprep.subr.mxu0 0.0
      %1891 = vmatpush1.msra.mxu0 0.0
      %1892 = vmatprep.subr.mxu0 0.0
      %1893 = vmatpush1.msra.mxu0 0.0
      %1894 = vmatprep.subr.mxu0 0.0
      %1895 = vmatpush1.msra.mxu0 0.0
      %1896 = vmatprep.subr.mxu0 0.0
      %1897 = vmatpush1.msra.mxu0 0.0
      %1898 = vmatprep.subr.mxu0 0.0
      %1899 = vmatpush1.msra.mxu0 0.0
      %1900 = vmatprep.subr.mxu0 0.0
      %1901 = vmatpush1.msra.mxu0 0.0
      %1902 = vmatprep.subr.mxu0 0.0
      %1903 = vmatpush1.msra.mxu0 0.0
      %1904 = vmatprep.subr.mxu0 0.0
      %1905 = vmatpush1.msra.mxu0 0.0
      %1906 = vmatprep.subr.mxu0 0.0
      %1907 = vmatpush1.msra.mxu0 0.0
      %1908 = vmatprep.mubr.f32.mxu0 0.0
      %1909 = vmatmul.mubr.f32.gmra.mrb[0].mxu0 %v1842
      %v1910 = vpop.f32.mrb[0].mxu0
      %v1911 = vadd.f32 0.0, %v1910
      %v1912 = vpop.f32.mrb[0].mxu0
      %1913 = vdwg.mxu0
      %v1914 = vadd.f32 %v1836, %v402
      %v1915 = vadd.f32 %v1911, %v1047
      %v1918 = vrot.slane %v1915, 7
      %v1919 = vsel %vm601, %v1918, %v1914
      %1921 = vmatprep.subr.mxu0 0.0
      %1922 = vmatpush1.msra.mxu0 %v367
      %1923 = vmatprep.subr.mxu0 0.0
      %1924 = vmatpush1.msra.mxu0 %v368
      %1925 = vmatprep.subr.mxu0 0.0
      %1926 = vmatpush1.msra.mxu0 %v369
      %1927 = vmatprep.subr.mxu0 0.0
      %1928 = vmatpush1.msra.mxu0 %v370
      %1929 = vmatprep.subr.mxu0 0.0
      %1930 = vmatpush1.msra.mxu0 %v371
      %1931 = vmatprep.subr.mxu0 0.0
      %1932 = vmatpush1.msra.mxu0 %v372
      %1933 = vmatprep.subr.mxu0 0.0
      %1934 = vmatpush1.msra.mxu0 %v373
      %1935 = vmatprep.subr.mxu0 0.0
      %1936 = vmatpush1.msra.mxu0 %v374
      %1937 = vmatprep.subr.mxu0 0.0
      %1938 = vmatpush1.msra.mxu0 %v375
      %1939 = vmatprep.subr.mxu0 0.0
      %1940 = vmatpush1.msra.mxu0 %v376
      %1941 = vmatprep.subr.mxu0 0.0
      %1942 = vmatpush1.msra.mxu0 %v377
      %1943 = vmatprep.subr.mxu0 0.0
      %1944 = vmatpush1.msra.mxu0 %v378
      %1945 = vmatprep.subr.mxu0 0.0
      %1946 = vmatpush1.msra.mxu0 %v379
      %1947 = vmatprep.subr.mxu0 0.0
      %1948 = vmatpush1.msra.mxu0 %v380
      %1949 = vmatprep.subr.mxu0 0.0
      %1950 = vmatpush1.msra.mxu0 %v381
      %1951 = vmatprep.subr.mxu0 0.0
      %1952 = vmatpush1.msra.mxu0 %v382
      %1953 = vmatprep.subr.mxu0 0.0
      %1954 = vmatpush1.msra.mxu0 0.0
      %1955 = vmatprep.subr.mxu0 0.0
      %1956 = vmatpush1.msra.mxu0 0.0
      %1957 = vmatprep.subr.mxu0 0.0
      %1958 = vmatpush1.msra.mxu0 0.0
      %1959 = vmatprep.subr.mxu0 0.0
      %1960 = vmatpush1.msra.mxu0 0.0
      %1961 = vmatprep.subr.mxu0 0.0
      %1962 = vmatpush1.msra.mxu0 0.0
      %1963 = vmatprep.subr.mxu0 0.0
      %1964 = vmatpush1.msra.mxu0 0.0
      %1965 = vmatprep.subr.mxu0 0.0
      %1966 = vmatpush1.msra.mxu0 0.0
      %1967 = vmatprep.subr.mxu0 0.0
      %1968 = vmatpush1.msra.mxu0 0.0
      %1969 = vmatprep.subr.mxu0 0.0
      %1970 = vmatpush1.msra.mxu0 0.0
      %1971 = vmatprep.subr.mxu0 0.0
      %1972 = vmatpush1.msra.mxu0 0.0
      %1973 = vmatprep.subr.mxu0 0.0
      %1974 = vmatpush1.msra.mxu0 0.0
      %1975 = vmatprep.subr.mxu0 0.0
      %1976 = vmatpush1.msra.mxu0 0.0
      %1977 = vmatprep.subr.mxu0 0.0
      %1978 = vmatpush1.msra.mxu0 0.0
      %1979 = vmatprep.subr.mxu0 0.0
      %1980 = vmatpush1.msra.mxu0 0.0
      %1981 = vmatprep.subr.mxu0 0.0
      %1982 = vmatpush1.msra.mxu0 0.0
      %1983 = vmatprep.subr.mxu0 0.0
      %1984 = vmatpush1.msra.mxu0 0.0
      %1985 = vmatprep.mubr.f32.mxu0 0.0
      %1986 = vmatmul.mubr.f32.gmra.mrb[0].mxu0 %v1919
      %v1987 = vpop.f32.mrb[0].mxu0
      %v1988 = vadd.f32 0.0, %v1987
      %v1989 = vpop.f32.mrb[0].mxu0
      %1990 = vdwg.mxu0
      %v1992 = vrot.slane %v1988, 1
      %v1995 = vsub.f32 %v1914, %v1988
      %v1996 = vsub.f32 %v1915, %v1992
      %v1997 = vmul.f32 %v1995, %v1995
      %v1998 = vmul.f32 %v1996, %v1996
      %v2001 = vrot.slane %v1998, 7
      %v2002 = vsel %vm601, %v2001, %v1997
      %2004 = vmatprep.subr.mxu0 0.0
      %2005 = vmatpush1.msra.mxu0 %v367
      %2006 = vmatprep.subr.mxu0 0.0
      %2007 = vmatpush1.msra.mxu0 %v368
      %2008 = vmatprep.subr.mxu0 0.0
      %2009 = vmatpush1.msra.mxu0 %v369
      %2010 = vmatprep.subr.mxu0 0.0
      %2011 = vmatpush1.msra.mxu0 %v370
      %2012 = vmatprep.subr.mxu0 0.0
      %2013 = vmatpush1.msra.mxu0 %v371
      %2014 = vmatprep.subr.mxu0 0.0
      %2015 = vmatpush1.msra.mxu0 %v372
      %2016 = vmatprep.subr.mxu0 0.0
      %2017 = vmatpush1.msra.mxu0 %v373
      %2018 = vmatprep.subr.mxu0 0.0
      %2019 = vmatpush1.msra.mxu0 %v374
      %2020 = vmatprep.subr.mxu0 0.0
      %2021 = vmatpush1.msra.mxu0 %v375
      %2022 = vmatprep.subr.mxu0 0.0
      %2023 = vmatpush1.msra.mxu0 %v376
      %2024 = vmatprep.subr.mxu0 0.0
      %2025 = vmatpush1.msra.mxu0 %v377
      %2026 = vmatprep.subr.mxu0 0.0
      %2027 = vmatpush1.msra.mxu0 %v378
      %2028 = vmatprep.subr.mxu0 0.0
      %2029 = vmatpush1.msra.mxu0 %v379
      %2030 = vmatprep.subr.mxu0 0.0
      %2031 = vmatpush1.msra.mxu0 %v380
      %2032 = vmatprep.subr.mxu0 0.0
      %2033 = vmatpush1.msra.mxu0 %v381
      %2034 = vmatprep.subr.mxu0 0.0
      %2035 = vmatpush1.msra.mxu0 %v382
      %2036 = vmatprep.subr.mxu0 0.0
      %2037 = vmatpush1.msra.mxu0 0.0
      %2038 = vmatprep.subr.mxu0 0.0
      %2039 = vmatpush1.msra.mxu0 0.0
      %2040 = vmatprep.subr.mxu0 0.0
      %2041 = vmatpush1.msra.mxu0 0.0
      %2042 = vmatprep.subr.mxu0 0.0
      %2043 = vmatpush1.msra.mxu0 0.0
      %2044 = vmatprep.subr.mxu0 0.0
      %2045 = vmatpush1.msra.mxu0 0.0
      %2046 = vmatprep.subr.mxu0 0.0
      %2047 = vmatpush1.msra.mxu0 0.0
      %2048 = vmatprep.subr.mxu0 0.0
      %2049 = vmatpush1.msra.mxu0 0.0
      %2050 = vmatprep.subr.mxu0 0.0
      %2051 = vmatpush1.msra.mxu0 0.0
      %2052 = vmatprep.subr.mxu0 0.0
      %2053 = vmatpush1.msra.mxu0 0.0
      %2054 = vmatprep.subr.mxu0 0.0
      %2055 = vmatpush1.msra.mxu0 0.0
      %2056 = vmatprep.subr.mxu0 0.0
      %2057 = vmatpush1.msra.mxu0 0.0
      %2058 = vmatprep.subr.mxu0 0.0
      %2059 = vmatpush1.msra.mxu0 0.0
      %2060 = vmatprep.subr.mxu0 0.0
      %2061 = vmatpush1.msra.mxu0 0.0
      %2062 = vmatprep.subr.mxu0 0.0
      %2063 = vmatpush1.msra.mxu0 0.0
      %2064 = vmatprep.subr.mxu0 0.0
      %2065 = vmatpush1.msra.mxu0 0.0
      %2066 = vmatprep.subr.mxu0 0.0
      %2067 = vmatpush1.msra.mxu0 0.0
      %2068 = vmatprep.mubr.f32.mxu0 0.0
      %2069 = vmatmul.mubr.f32.gmra.mrb[0].mxu0 %v2002
      %v2070 = vpop.f32.mrb[0].mxu0
      %v2071 = vadd.f32 1e-05, %v2070
      %v2072 = vpop.f32.mrb[0].mxu0
      %2073 = vdwg.mxu0
      %v2074 = vrsqrt.pop %v2071
      %v2076 = vrot.slane %v2074, 1
      %v2079 = vmul.f32 %v1995, %v2074
      %v2080 = vmul.f32 %v1996, %v2076
      %v2081 = vmul.f32 %v2079, %v1221
      %v2082 = vmul.f32 %v2080, %v1221
      %v2083 = vadd.f32 %v2081, %v1229
      %v2084 = vadd.f32 %v2082, %v1229
      %v2085 = vxor.u32 %v2083, 2147483648
      %v2086 = vxor.u32 %v2084, 2147483648
      %v2087 = vmul.f32 %v2085, 1.442695
      %v2088 = vpow.pop %v2087
      %v2089 = vmul.f32 %v2086, 1.442695
      %v2090 = vpow.pop %v2089
      %v2091 = vadd.f32 %v2088, 1.0
      %v2092 = vadd.f32 %v2090, 1.0
      %v2093 = vrcp.pop %v2091
      %v2094 = vmul.f32 1.0, %v2093
      %v2095 = vrcp.pop %v2092
      %v2096 = vmul.f32 1.0, %v2095
      %v2097 = vtanh.pop %v2083
      %v2098 = vtanh.pop %v2084
      %v2099 = vmul.f32 %v2094, %v1708
      %v2100 = vmul.f32 %v2096, %v1709
      %2103 = vrot.lane.b32.xlu0 %v2097, 64
      %v2104 = vpop.permute.xlu0 %2103
      %2105 = vrot.lane.b32.xlu0 %v2098, 64
      %v2106 = vpop.permute.xlu0 %2105
      %v2109 = vmul.f32 %v2094, %v2104
      %v2110 = vmul.f32 %v2096, %v2106
      %2113 = vrot.lane.b32.xlu0 %v2109, 32
      %v2114 = vpop.permute.xlu0 %2113
      %2115 = vrot.lane.b32.xlu0 %v2110, 32
      %v2116 = vpop.permute.xlu0 %2115
      %v2119 = vadd.f32 %v2099, %v2114
      %v2120 = vadd.f32 %v2100, %v2116
      %v2123 = vrot.slane %v2120, 7
      %v2124 = vsel %vm601, %v2123, %v2119
      %2125 = vrot.lane.b32.xlu0 %v2124, 96
      %v2126 = vpop.permute.xlu0 %2125
      %v2128 = vsel %vm831, %v2126, 0.0
      %2129 = vadd.xlane.f32.xlu0 %v2128
      %v2130 = vpop.xlane.xlu0 %2129
      %v2131 = vmul.f32 %v2130, %v835
      %v2133 = vrot.slane %v2131, 1
      %v2136 = vsub.f32 %v2119, %v2131
      %v2137 = vsub.f32 %v2120, %v2133
      %v2138 = vmul.f32 %v2136, %v2136
      %v2139 = vmul.f32 %v2137, %v2137
      %v2142 = vrot.slane %v2139, 7
      %v2143 = vsel %vm601, %v2142, %v2138
      %2144 = vrot.lane.b32.xlu0 %v2143, 96
      %v2145 = vpop.permute.xlu0 %2144
      %v2147 = vsel %vm831, %v2145, 0.0
      %2148 = vadd.xlane.f32.xlu0 %v2147
      %v2149 = vpop.xlane.xlu0 %2148
      %v2150 = vmul.f32 %v2149, %v835
      %v2151 = vadd.f32 %v2150, 1e-05
      %v2152 = vrsqrt.pop %v2151
      %v2154 = vrot.slane %v2152, 1
      %v2157 = vmul.f32 %v2136, %v2152
      %v2158 = vmul.f32 %v2137, %v2154
      %v2159 = vmul.f32 %v2157, %v1313
      %v2160 = vmul.f32 %v2158, %v1313
      %v2161 = vadd.f32 %v2159, %v1323
      %v2162 = vadd.f32 %v2160, %v1323
      %v2163 = vtanh.pop %v2161
      %v2164 = vtanh.pop %v2162
      %2167 = vrot.lane.b32.xlu0 %v2163, 64
      %v2168 = vpop.permute.xlu0 %2167
      %2169 = vrot.lane.b32.xlu0 %v2164, 64
      %v2170 = vpop.permute.xlu0 %2169
      %v2173 = vmul.f32 %v2094, %v2168
      %v2174 = vmul.f32 %v2096, %v2170
      %v2177 = vrot.slane %v2174, 7
      %v2178 = vsel %vm601, %v2177, %v2173
      %2179 = vrot.lane.b32.xlu0 %v2178, 32
      %v2180 = vpop.permute.xlu0 %2179
      %s2182 = scalar_lea.vmem %s281, 2
      %2183 = vst.msk [vmem:[%s2182] sm:$0x3] %vm831, %v2180
      %s2184 = scalar_lea.vmem %s275, 4
      %v2185 = vld [vmem:[%s2184] sm:$0x3]
      %2186 = vrot.lane.b32.xlu0 %v2173, 32
      %v2187 = vpop.permute.xlu0 %2186
      %v2188 = vsel %vm441, %v2187, 0
      %2190 = vmatprep.subr.mxu0 0.0
      %2191 = vmatpush1.msra.mxu0 %v383
      %2192 = vmatprep.subr.mxu0 0.0
      %2193 = vmatpush1.msra.mxu0 %v384
      %2194 = vmatprep.subr.mxu0 0.0
      %2195 = vmatpush1.msra.mxu0 %v385
      %2196 = vmatprep.subr.mxu0 0.0
      %2197 = vmatpush1.msra.mxu0 %v386
      %2198 = vmatprep.subr.mxu0 0.0
      %2199 = vmatpush1.msra.mxu0 0.0
      %2200 = vmatprep.subr.mxu0 0.0
      %2201 = vmatpush1.msra.mxu0 0.0
      %2202 = vmatprep.subr.mxu0 0.0
      %2203 = vmatpush1.msra.mxu0 0.0
      %2204 = vmatprep.subr.mxu0 0.0
      %2205 = vmatpush1.msra.mxu0 0.0
      %2206 = vmatprep.subr.mxu0 0.0
      %2207 = vmatpush1.msra.mxu0 0.0
      %2208 = vmatprep.subr.mxu0 0.0
      %2209 = vmatpush1.msra.mxu0 0.0
      %2210 = vmatprep.subr.mxu0 0.0
      %2211 = vmatpush1.msra.mxu0 0.0
      %2212 = vmatprep.subr.mxu0 0.0
      %2213 = vmatpush1.msra.mxu0 0.0
      %2214 = vmatprep.subr.mxu0 0.0
      %2215 = vmatpush1.msra.mxu0 0.0
      %2216 = vmatprep.subr.mxu0 0.0
      %2217 = vmatpush1.msra.mxu0 0.0
      %2218 = vmatprep.subr.mxu0 0.0
      %2219 = vmatpush1.msra.mxu0 0.0
      %2220 = vmatprep.subr.mxu0 0.0
      %2221 = vmatpush1.msra.mxu0 0.0
      %2222 = vmatprep.subr.mxu0 0.0
      %2223 = vmatpush1.msra.mxu0 0.0
      %2224 = vmatprep.subr.mxu0 0.0
      %2225 = vmatpush1.msra.mxu0 0.0
      %2226 = vmatprep.subr.mxu0 0.0
      %2227 = vmatpush1.msra.mxu0 0.0
      %2228 = vmatprep.subr.mxu0 0.0
      %2229 = vmatpush1.msra.mxu0 0.0
      %2230 = vmatprep.subr.mxu0 0.0
      %2231 = vmatpush1.msra.mxu0 0.0
      %2232 = vmatprep.subr.mxu0 0.0
      %2233 = vmatpush1.msra.mxu0 0.0
      %2234 = vmatprep.subr.mxu0 0.0
      %2235 = vmatpush1.msra.mxu0 0.0
      %2236 = vmatprep.subr.mxu0 0.0
      %2237 = vmatpush1.msra.mxu0 0.0
      %2238 = vmatprep.subr.mxu0 0.0
      %2239 = vmatpush1.msra.mxu0 0.0
      %2240 = vmatprep.subr.mxu0 0.0
      %2241 = vmatpush1.msra.mxu0 0.0
      %2242 = vmatprep.subr.mxu0 0.0
      %2243 = vmatpush1.msra.mxu0 0.0
      %2244 = vmatprep.subr.mxu0 0.0
      %2245 = vmatpush1.msra.mxu0 0.0
      %2246 = vmatprep.subr.mxu0 0.0
      %2247 = vmatpush1.msra.mxu0 0.0
      %2248 = vmatprep.subr.mxu0 0.0
      %2249 = vmatpush1.msra.mxu0 0.0
      %2250 = vmatprep.subr.mxu0 0.0
      %2251 = vmatpush1.msra.mxu0 0.0
      %2252 = vmatprep.subr.mxu0 0.0
      %2253 = vmatpush1.msra.mxu0 0.0
      %2254 = vmatprep.mubr.f32.mxu0 0.0
      %2255 = vmatmul.mubr.f32.gmra.mrb[0].mxu0 %v2188
      %v2256 = vpop.f32.mrb[0].mxu0
      %v2257 = vadd.f32 0.0, %v2256
      %v2258 = vpop.f32.mrb[0].mxu0
      %2259 = vdwg.mxu0
      %2260 = vrot.lane.b32.xlu0 %v2174, 32
      %v2261 = vpop.permute.xlu0 %2260
      %v2262 = vsel %vm441, %v2261, 0
      %2264 = vmatprep.subr.mxu0 0.0
      %2265 = vmatpush1.msra.mxu0 %v387
      %2266 = vmatprep.subr.mxu0 0.0
      %2267 = vmatpush1.msra.mxu0 %v388
      %2268 = vmatprep.subr.mxu0 0.0
      %2269 = vmatpush1.msra.mxu0 %v389
      %2270 = vmatprep.subr.mxu0 0.0
      %2271 = vmatpush1.msra.mxu0 %v390
      %2272 = vmatprep.subr.mxu0 0.0
      %2273 = vmatpush1.msra.mxu0 0.0
      %2274 = vmatprep.subr.mxu0 0.0
      %2275 = vmatpush1.msra.mxu0 0.0
      %2276 = vmatprep.subr.mxu0 0.0
      %2277 = vmatpush1.msra.mxu0 0.0
      %2278 = vmatprep.subr.mxu0 0.0
      %2279 = vmatpush1.msra.mxu0 0.0
      %2280 = vmatprep.subr.mxu0 0.0
      %2281 = vmatpush1.msra.mxu0 0.0
      %2282 = vmatprep.subr.mxu0 0.0
      %2283 = vmatpush1.msra.mxu0 0.0
      %2284 = vmatprep.subr.mxu0 0.0
      %2285 = vmatpush1.msra.mxu0 0.0
      %2286 = vmatprep.subr.mxu0 0.0
      %2287 = vmatpush1.msra.mxu0 0.0
      %2288 = vmatprep.subr.mxu0 0.0
      %2289 = vmatpush1.msra.mxu0 0.0
      %2290 = vmatprep.subr.mxu0 0.0
      %2291 = vmatpush1.msra.mxu0 0.0
      %2292 = vmatprep.subr.mxu0 0.0
      %2293 = vmatpush1.msra.mxu0 0.0
      %2294 = vmatprep.subr.mxu0 0.0
      %2295 = vmatpush1.msra.mxu0 0.0
      %2296 = vmatprep.subr.mxu0 0.0
      %2297 = vmatpush1.msra.mxu0 0.0
      %2298 = vmatprep.subr.mxu0 0.0
      %2299 = vmatpush1.msra.mxu0 0.0
      %2300 = vmatprep.subr.mxu0 0.0
      %2301 = vmatpush1.msra.mxu0 0.0
      %2302 = vmatprep.subr.mxu0 0.0
      %2303 = vmatpush1.msra.mxu0 0.0
      %2304 = vmatprep.subr.mxu0 0.0
      %2305 = vmatpush1.msra.mxu0 0.0
      %2306 = vmatprep.subr.mxu0 0.0
      %2307 = vmatpush1.msra.mxu0 0.0
      %2308 = vmatprep.subr.mxu0 0.0
      %2309 = vmatpush1.msra.mxu0 0.0
      %2310 = vmatprep.subr.mxu0 0.0
      %2311 = vmatpush1.msra.mxu0 0.0
      %2312 = vmatprep.subr.mxu0 0.0
      %2313 = vmatpush1.msra.mxu0 0.0
      %2314 = vmatprep.subr.mxu0 0.0
      %2315 = vmatpush1.msra.mxu0 0.0
      %2316 = vmatprep.subr.mxu0 0.0
      %2317 = vmatpush1.msra.mxu0 0.0
      %2318 = vmatprep.subr.mxu0 0.0
      %2319 = vmatpush1.msra.mxu0 0.0
      %2320 = vmatprep.subr.mxu0 0.0
      %2321 = vmatpush1.msra.mxu0 0.0
      %2322 = vmatprep.subr.mxu0 0.0
      %2323 = vmatpush1.msra.mxu0 0.0
      %2324 = vmatprep.subr.mxu0 0.0
      %2325 = vmatpush1.msra.mxu0 0.0
      %2326 = vmatprep.subr.mxu0 0.0
      %2327 = vmatpush1.msra.mxu0 0.0
      %2328 = vmatprep.mubr.f32.mxu0 0.0
      %2329 = vmatmul.mubr.f32.gmra.mrb[0].mxu0 %v2262
      %v2330 = vpop.f32.mrb[0].mxu0
      %v2331 = vadd.f32 0.0, %v2330
      %v2332 = vpop.f32.mrb[0].mxu0
      %2333 = vdwg.mxu0
      %v2334 = vadd.f32 %v2257, %v400
      %v2335 = vadd.f32 %v2331, %v587
      %v2337 = vrot.slane %v2185, 1
      %v2340 = vadd.f32 %v2334, %v2185
      %v2341 = vadd.f32 %v2335, %v2337
      %v2344 = vrot.slane %v2341, 7
      %v2345 = vsel %vm601, %v2344, %v2340
      %2347 = vmatprep.subr.mxu0 0.0
      %2348 = vmatpush1.msra.mxu0 %v367
      %2349 = vmatprep.subr.mxu0 0.0
      %2350 = vmatpush1.msra.mxu0 %v368
      %2351 = vmatprep.subr.mxu0 0.0
      %2352 = vmatpush1.msra.mxu0 %v369
      %2353 = vmatprep.subr.mxu0 0.0
      %2354 = vmatpush1.msra.mxu0 %v370
      %2355 = vmatprep.subr.mxu0 0.0
      %2356 = vmatpush1.msra.mxu0 %v371
      %2357 = vmatprep.subr.mxu0 0.0
      %2358 = vmatpush1.msra.mxu0 %v372
      %2359 = vmatprep.subr.mxu0 0.0
      %2360 = vmatpush1.msra.mxu0 %v373
      %2361 = vmatprep.subr.mxu0 0.0
      %2362 = vmatpush1.msra.mxu0 %v374
      %2363 = vmatprep.subr.mxu0 0.0
      %2364 = vmatpush1.msra.mxu0 %v375
      %2365 = vmatprep.subr.mxu0 0.0
      %2366 = vmatpush1.msra.mxu0 %v376
      %2367 = vmatprep.subr.mxu0 0.0
      %2368 = vmatpush1.msra.mxu0 %v377
      %2369 = vmatprep.subr.mxu0 0.0
      %2370 = vmatpush1.msra.mxu0 %v378
      %2371 = vmatprep.subr.mxu0 0.0
      %2372 = vmatpush1.msra.mxu0 %v379
      %2373 = vmatprep.subr.mxu0 0.0
      %2374 = vmatpush1.msra.mxu0 %v380
      %2375 = vmatprep.subr.mxu0 0.0
      %2376 = vmatpush1.msra.mxu0 %v381
      %2377 = vmatprep.subr.mxu0 0.0
      %2378 = vmatpush1.msra.mxu0 %v382
      %2379 = vmatprep.subr.mxu0 0.0
      %2380 = vmatpush1.msra.mxu0 0.0
      %2381 = vmatprep.subr.mxu0 0.0
      %2382 = vmatpush1.msra.mxu0 0.0
      %2383 = vmatprep.subr.mxu0 0.0
      %2384 = vmatpush1.msra.mxu0 0.0
      %2385 = vmatprep.subr.mxu0 0.0
      %2386 = vmatpush1.msra.mxu0 0.0
      %2387 = vmatprep.subr.mxu0 0.0
      %2388 = vmatpush1.msra.mxu0 0.0
      %2389 = vmatprep.subr.mxu0 0.0
      %2390 = vmatpush1.msra.mxu0 0.0
      %2391 = vmatprep.subr.mxu0 0.0
      %2392 = vmatpush1.msra.mxu0 0.0
      %2393 = vmatprep.subr.mxu0 0.0
      %2394 = vmatpush1.msra.mxu0 0.0
      %2395 = vmatprep.subr.mxu0 0.0
      %2396 = vmatpush1.msra.mxu0 0.0
      %2397 = vmatprep.subr.mxu0 0.0
      %2398 = vmatpush1.msra.mxu0 0.0
      %2399 = vmatprep.subr.mxu0 0.0
      %2400 = vmatpush1.msra.mxu0 0.0
      %2401 = vmatprep.subr.mxu0 0.0
      %2402 = vmatpush1.msra.mxu0 0.0
      %2403 = vmatprep.subr.mxu0 0.0
      %2404 = vmatpush1.msra.mxu0 0.0
      %2405 = vmatprep.subr.mxu0 0.0
      %2406 = vmatpush1.msra.mxu0 0.0
      %2407 = vmatprep.subr.mxu0 0.0
      %2408 = vmatpush1.msra.mxu0 0.0
      %2409 = vmatprep.subr.mxu0 0.0
      %2410 = vmatpush1.msra.mxu0 0.0
      %2411 = vmatprep.mubr.f32.mxu0 0.0
      %2412 = vmatmul.mubr.f32.gmra.mrb[0].mxu0 %v2345
      %v2413 = vpop.f32.mrb[0].mxu0
      %v2414 = vadd.f32 0.0, %v2413
      %v2415 = vpop.f32.mrb[0].mxu0
      %2416 = vdwg.mxu0
      %v2418 = vrot.slane %v2414, 1
      %v2421 = vsub.f32 %v2340, %v2414
      %v2422 = vsub.f32 %v2341, %v2418
      %v2423 = vmul.f32 %v2421, %v2421
      %v2424 = vmul.f32 %v2422, %v2422
      %v2427 = vrot.slane %v2424, 7
      %v2428 = vsel %vm601, %v2427, %v2423
      %2430 = vmatprep.subr.mxu0 0.0
      %2431 = vmatpush1.msra.mxu0 %v367
      %2432 = vmatprep.subr.mxu0 0.0
      %2433 = vmatpush1.msra.mxu0 %v368
      %2434 = vmatprep.subr.mxu0 0.0
      %2435 = vmatpush1.msra.mxu0 %v369
      %2436 = vmatprep.subr.mxu0 0.0
      %2437 = vmatpush1.msra.mxu0 %v370
      %2438 = vmatprep.subr.mxu0 0.0
      %2439 = vmatpush1.msra.mxu0 %v371
      %2440 = vmatprep.subr.mxu0 0.0
      %2441 = vmatpush1.msra.mxu0 %v372
      %2442 = vmatprep.subr.mxu0 0.0
      %2443 = vmatpush1.msra.mxu0 %v373
      %2444 = vmatprep.subr.mxu0 0.0
      %2445 = vmatpush1.msra.mxu0 %v374
      %2446 = vmatprep.subr.mxu0 0.0
      %2447 = vmatpush1.msra.mxu0 %v375
      %2448 = vmatprep.subr.mxu0 0.0
      %2449 = vmatpush1.msra.mxu0 %v376
      %2450 = vmatprep.subr.mxu0 0.0
      %2451 = vmatpush1.msra.mxu0 %v377
      %2452 = vmatprep.subr.mxu0 0.0
      %2453 = vmatpush1.msra.mxu0 %v378
      %2454 = vmatprep.subr.mxu0 0.0
      %2455 = vmatpush1.msra.mxu0 %v379
      %2456 = vmatprep.subr.mxu0 0.0
      %2457 = vmatpush1.msra.mxu0 %v380
      %2458 = vmatprep.subr.mxu0 0.0
      %2459 = vmatpush1.msra.mxu0 %v381
      %2460 = vmatprep.subr.mxu0 0.0
      %2461 = vmatpush1.msra.mxu0 %v382
      %2462 = vmatprep.subr.mxu0 0.0
      %2463 = vmatpush1.msra.mxu0 0.0
      %2464 = vmatprep.subr.mxu0 0.0
      %2465 = vmatpush1.msra.mxu0 0.0
      %2466 = vmatprep.subr.mxu0 0.0
      %2467 = vmatpush1.msra.mxu0 0.0
      %2468 = vmatprep.subr.mxu0 0.0
      %2469 = vmatpush1.msra.mxu0 0.0
      %2470 = vmatprep.subr.mxu0 0.0
      %2471 = vmatpush1.msra.mxu0 0.0
      %2472 = vmatprep.subr.mxu0 0.0
      %2473 = vmatpush1.msra.mxu0 0.0
      %2474 = vmatprep.subr.mxu0 0.0
      %2475 = vmatpush1.msra.mxu0 0.0
      %2476 = vmatprep.subr.mxu0 0.0
      %2477 = vmatpush1.msra.mxu0 0.0
      %2478 = vmatprep.subr.mxu0 0.0
      %2479 = vmatpush1.msra.mxu0 0.0
      %2480 = vmatprep.subr.mxu0 0.0
      %2481 = vmatpush1.msra.mxu0 0.0
      %2482 = vmatprep.subr.mxu0 0.0
      %2483 = vmatpush1.msra.mxu0 0.0
      %2484 = vmatprep.subr.mxu0 0.0
      %2485 = vmatpush1.msra.mxu0 0.0
      %2486 = vmatprep.subr.mxu0 0.0
      %2487 = vmatpush1.msra.mxu0 0.0
      %2488 = vmatprep.subr.mxu0 0.0
      %2489 = vmatpush1.msra.mxu0 0.0
      %2490 = vmatprep.subr.mxu0 0.0
      %2491 = vmatpush1.msra.mxu0 0.0
      %2492 = vmatprep.subr.mxu0 0.0
      %2493 = vmatpush1.msra.mxu0 0.0
      %2494 = vmatprep.mubr.f32.mxu0 0.0
      %2495 = vmatmul.mubr.f32.gmra.mrb[0].mxu0 %v2428
      %v2496 = vpop.f32.mrb[0].mxu0
      %v2497 = vadd.f32 1e-05, %v2496
      %v2498 = vpop.f32.mrb[0].mxu0
      %2499 = vdwg.mxu0
      %v2500 = vrsqrt.pop %v2497
      %v2502 = vrot.slane %v2500, 1
      %v2505 = vmul.f32 %v2421, %v2500
      %v2506 = vmul.f32 %v2422, %v2502
      %v2507 = vmul.f32 %v2505, %v768
      %v2508 = vmul.f32 %v2506, %v768
      %v2509 = vadd.f32 %v2507, %v776
      %v2510 = vadd.f32 %v2508, %v776
      %v2511 = vxor.u32 %v2509, 2147483648
      %v2512 = vxor.u32 %v2510, 2147483648
      %v2513 = vmul.f32 %v2511, 1.442695
      %v2514 = vpow.pop %v2513
      %v2515 = vmul.f32 %v2512, 1.442695
      %v2516 = vpow.pop %v2515
      %v2517 = vadd.f32 %v2514, 1.0
      %v2518 = vadd.f32 %v2516, 1.0
      %v2519 = vrcp.pop %v2517
      %v2520 = vmul.f32 1.0, %v2519
      %v2521 = vrcp.pop %v2518
      %v2522 = vmul.f32 1.0, %v2521
      %v2523 = vtanh.pop %v2509
      %v2524 = vtanh.pop %v2510
      %v2525 = vmul.f32 %v2520, %v2119
      %v2526 = vmul.f32 %v2522, %v2120
      %2529 = vrot.lane.b32.xlu0 %v2523, 64
      %v2530 = vpop.permute.xlu0 %2529
      %2531 = vrot.lane.b32.xlu0 %v2524, 64
      %v2532 = vpop.permute.xlu0 %2531
      %v2535 = vmul.f32 %v2520, %v2530
      %v2536 = vmul.f32 %v2522, %v2532
      %2539 = vrot.lane.b32.xlu0 %v2535, 32
      %v2540 = vpop.permute.xlu0 %2539
      %2541 = vrot.lane.b32.xlu0 %v2536, 32
      %v2542 = vpop.permute.xlu0 %2541
      %v2545 = vadd.f32 %v2525, %v2540
      %v2546 = vadd.f32 %v2526, %v2542
      %v2549 = vrot.slane %v2546, 7
      %v2550 = vsel %vm601, %v2549, %v2545
      %2551 = vrot.lane.b32.xlu0 %v2550, 96
      %v2552 = vpop.permute.xlu0 %2551
      %v2554 = vsel %vm831, %v2552, 0.0
      %2555 = vadd.xlane.f32.xlu0 %v2554
      %v2556 = vpop.xlane.xlu0 %2555
      %v2557 = vmul.f32 %v2556, %v835
      %v2559 = vrot.slane %v2557, 1
      %v2562 = vsub.f32 %v2545, %v2557
      %v2563 = vsub.f32 %v2546, %v2559
      %v2564 = vmul.f32 %v2562, %v2562
      %v2565 = vmul.f32 %v2563, %v2563
      %v2568 = vrot.slane %v2565, 7
      %v2569 = vsel %vm601, %v2568, %v2564
      %2570 = vrot.lane.b32.xlu0 %v2569, 96
      %v2571 = vpop.permute.xlu0 %2570
      %v2573 = vsel %vm831, %v2571, 0.0
      %2574 = vadd.xlane.f32.xlu0 %v2573
      %v2575 = vpop.xlane.xlu0 %2574
      %v2576 = vmul.f32 %v2575, %v835
      %v2577 = vadd.f32 %v2576, 1e-05
      %v2578 = vrsqrt.pop %v2577
      %v2580 = vrot.slane %v2578, 1
      %v2583 = vmul.f32 %v2562, %v2578
      %v2584 = vmul.f32 %v2563, %v2580
      %v2585 = vmul.f32 %v2583, %v870
      %v2586 = vmul.f32 %v2584, %v870
      %v2587 = vadd.f32 %v2585, %v880
      %v2588 = vadd.f32 %v2586, %v880
      %v2589 = vtanh.pop %v2587
      %v2590 = vtanh.pop %v2588
      %2593 = vrot.lane.b32.xlu0 %v2589, 64
      %v2594 = vpop.permute.xlu0 %2593
      %2595 = vrot.lane.b32.xlu0 %v2590, 64
      %v2596 = vpop.permute.xlu0 %2595
      %v2599 = vmul.f32 %v2520, %v2594
      %v2600 = vmul.f32 %v2522, %v2596
      %2602 = vrot.lane.b32.xlu0 %v2599, 32
      %v2603 = vpop.permute.xlu0 %2602
      %v2604 = vsel %vm441, %v2603, 0
      %2606 = vmatprep.subr.mxu0 0.0
      %2607 = vmatpush1.msra.mxu0 %v392
      %2608 = vmatprep.subr.mxu0 0.0
      %2609 = vmatpush1.msra.mxu0 %v393
      %2610 = vmatprep.subr.mxu0 0.0
      %2611 = vmatpush1.msra.mxu0 %v394
      %2612 = vmatprep.subr.mxu0 0.0
      %2613 = vmatpush1.msra.mxu0 %v395
      %2614 = vmatprep.subr.mxu0 0.0
      %2615 = vmatpush1.msra.mxu0 0.0
      %2616 = vmatprep.subr.mxu0 0.0
      %2617 = vmatpush1.msra.mxu0 0.0
      %2618 = vmatprep.subr.mxu0 0.0
      %2619 = vmatpush1.msra.mxu0 0.0
      %2620 = vmatprep.subr.mxu0 0.0
      %2621 = vmatpush1.msra.mxu0 0.0
      %2622 = vmatprep.subr.mxu0 0.0
      %2623 = vmatpush1.msra.mxu0 0.0
      %2624 = vmatprep.subr.mxu0 0.0
      %2625 = vmatpush1.msra.mxu0 0.0
      %2626 = vmatprep.subr.mxu0 0.0
      %2627 = vmatpush1.msra.mxu0 0.0
      %2628 = vmatprep.subr.mxu0 0.0
      %2629 = vmatpush1.msra.mxu0 0.0
      %2630 = vmatprep.subr.mxu0 0.0
      %2631 = vmatpush1.msra.mxu0 0.0
      %2632 = vmatprep.subr.mxu0 0.0
      %2633 = vmatpush1.msra.mxu0 0.0
      %2634 = vmatprep.subr.mxu0 0.0
      %2635 = vmatpush1.msra.mxu0 0.0
      %2636 = vmatprep.subr.mxu0 0.0
      %2637 = vmatpush1.msra.mxu0 0.0
      %2638 = vmatprep.subr.mxu0 0.0
      %2639 = vmatpush1.msra.mxu0 0.0
      %2640 = vmatprep.subr.mxu0 0.0
      %2641 = vmatpush1.msra.mxu0 0.0
      %2642 = vmatprep.subr.mxu0 0.0
      %2643 = vmatpush1.msra.mxu0 0.0
      %2644 = vmatprep.subr.mxu0 0.0
      %2645 = vmatpush1.msra.mxu0 0.0
      %2646 = vmatprep.subr.mxu0 0.0
      %2647 = vmatpush1.msra.mxu0 0.0
      %2648 = vmatprep.subr.mxu0 0.0
      %2649 = vmatpush1.msra.mxu0 0.0
      %2650 = vmatprep.subr.mxu0 0.0
      %2651 = vmatpush1.msra.mxu0 0.0
      %2652 = vmatprep.subr.mxu0 0.0
      %2653 = vmatpush1.msra.mxu0 0.0
      %2654 = vmatprep.subr.mxu0 0.0
      %2655 = vmatpush1.msra.mxu0 0.0
      %2656 = vmatprep.subr.mxu0 0.0
      %2657 = vmatpush1.msra.mxu0 0.0
      %2658 = vmatprep.subr.mxu0 0.0
      %2659 = vmatpush1.msra.mxu0 0.0
      %2660 = vmatprep.subr.mxu0 0.0
      %2661 = vmatpush1.msra.mxu0 0.0
      %2662 = vmatprep.subr.mxu0 0.0
      %2663 = vmatpush1.msra.mxu0 0.0
      %2664 = vmatprep.subr.mxu0 0.0
      %2665 = vmatpush1.msra.mxu0 0.0
      %2666 = vmatprep.subr.mxu0 0.0
      %2667 = vmatpush1.msra.mxu0 0.0
      %2668 = vmatprep.subr.mxu0 0.0
      %2669 = vmatpush1.msra.mxu0 0.0
      %2670 = vmatprep.mubr.f32.mxu0 0.0
      %2671 = vmatmul.mubr.f32.gmra.mrb[0].mxu0 %v2604
      %v2672 = vpop.f32.mrb[0].mxu0
      %v2673 = vadd.f32 0.0, %v2672
      %v2674 = vpop.f32.mrb[0].mxu0
      %2675 = vdwg.mxu0
      %2677 = vrot.lane.b32.xlu0 %v2600, 32
      %v2678 = vpop.permute.xlu0 %2677
      %v2679 = vsel %vm441, %v2678, 0
      %2681 = vmatprep.subr.mxu0 0.0
      %2682 = vmatpush1.msra.mxu0 %v396
      %2683 = vmatprep.subr.mxu0 0.0
      %2684 = vmatpush1.msra.mxu0 %v397
      %2685 = vmatprep.subr.mxu0 0.0
      %2686 = vmatpush1.msra.mxu0 %v398
      %2687 = vmatprep.subr.mxu0 0.0
      %2688 = vmatpush1.msra.mxu0 %v399
      %2689 = vmatprep.subr.mxu0 0.0
      %2690 = vmatpush1.msra.mxu0 0.0
      %2691 = vmatprep.subr.mxu0 0.0
      %2692 = vmatpush1.msra.mxu0 0.0
      %2693 = vmatprep.subr.mxu0 0.0
      %2694 = vmatpush1.msra.mxu0 0.0
      %2695 = vmatprep.subr.mxu0 0.0
      %2696 = vmatpush1.msra.mxu0 0.0
      %2697 = vmatprep.subr.mxu0 0.0
      %2698 = vmatpush1.msra.mxu0 0.0
      %2699 = vmatprep.subr.mxu0 0.0
      %2700 = vmatpush1.msra.mxu0 0.0
      %2701 = vmatprep.subr.mxu0 0.0
      %2702 = vmatpush1.msra.mxu0 0.0
      %2703 = vmatprep.subr.mxu0 0.0
      %2704 = vmatpush1.msra.mxu0 0.0
      %2705 = vmatprep.subr.mxu0 0.0
      %2706 = vmatpush1.msra.mxu0 0.0
      %2707 = vmatprep.subr.mxu0 0.0
      %2708 = vmatpush1.msra.mxu0 0.0
      %2709 = vmatprep.subr.mxu0 0.0
      %2710 = vmatpush1.msra.mxu0 0.0
      %2711 = vmatprep.subr.mxu0 0.0
      %2712 = vmatpush1.msra.mxu0 0.0
      %2713 = vmatprep.subr.mxu0 0.0
      %2714 = vmatpush1.msra.mxu0 0.0
      %2715 = vmatprep.subr.mxu0 0.0
      %2716 = vmatpush1.msra.mxu0 0.0
      %2717 = vmatprep.subr.mxu0 0.0
      %2718 = vmatpush1.msra.mxu0 0.0
      %2719 = vmatprep.subr.mxu0 0.0
      %2720 = vmatpush1.msra.mxu0 0.0
      %2721 = vmatprep.subr.mxu0 0.0
      %2722 = vmatpush1.msra.mxu0 0.0
      %2723 = vmatprep.subr.mxu0 0.0
      %2724 = vmatpush1.msra.mxu0 0.0
      %2725 = vmatprep.subr.mxu0 0.0
      %2726 = vmatpush1.msra.mxu0 0.0
      %2727 = vmatprep.subr.mxu0 0.0
      %2728 = vmatpush1.msra.mxu0 0.0
      %2729 = vmatprep.subr.mxu0 0.0
      %2730 = vmatpush1.msra.mxu0 0.0
      %2731 = vmatprep.subr.mxu0 0.0
      %2732 = vmatpush1.msra.mxu0 0.0
      %2733 = vmatprep.subr.mxu0 0.0
      %2734 = vmatpush1.msra.mxu0 0.0
      %2735 = vmatprep.subr.mxu0 0.0
      %2736 = vmatpush1.msra.mxu0 0.0
      %2737 = vmatprep.subr.mxu0 0.0
      %2738 = vmatpush1.msra.mxu0 0.0
      %2739 = vmatprep.subr.mxu0 0.0
      %2740 = vmatpush1.msra.mxu0 0.0
      %2741 = vmatprep.subr.mxu0 0.0
      %2742 = vmatpush1.msra.mxu0 0.0
      %2743 = vmatprep.subr.mxu0 0.0
      %2744 = vmatpush1.msra.mxu0 0.0
      %2745 = vmatprep.mubr.f32.mxu0 0.0
      %2746 = vmatmul.mubr.f32.gmra.mrb[0].mxu0 %v2679
      %v2747 = vpop.f32.mrb[0].mxu0
      %v2748 = vadd.f32 0.0, %v2747
      %v2749 = vpop.f32.mrb[0].mxu0
      %2750 = vdwg.mxu0
      %v2751 = vadd.f32 %v2673, %v402
      %v2752 = vadd.f32 %v2748, %v1047
      %v2755 = vrot.slane %v2752, 7
      %v2756 = vsel %vm601, %v2755, %v2751
      %2758 = vmatprep.subr.mxu0 0.0
      %2759 = vmatpush1.msra.mxu0 %v367
      %2760 = vmatprep.subr.mxu0 0.0
      %2761 = vmatpush1.msra.mxu0 %v368
      %2762 = vmatprep.subr.mxu0 0.0
      %2763 = vmatpush1.msra.mxu0 %v369
      %2764 = vmatprep.subr.mxu0 0.0
      %2765 = vmatpush1.msra.mxu0 %v370
      %2766 = vmatprep.subr.mxu0 0.0
      %2767 = vmatpush1.msra.mxu0 %v371
      %2768 = vmatprep.subr.mxu0 0.0
      %2769 = vmatpush1.msra.mxu0 %v372
      %2770 = vmatprep.subr.mxu0 0.0
      %2771 = vmatpush1.msra.mxu0 %v373
      %2772 = vmatprep.subr.mxu0 0.0
      %2773 = vmatpush1.msra.mxu0 %v374
      %2774 = vmatprep.subr.mxu0 0.0
      %2775 = vmatpush1.msra.mxu0 %v375
      %2776 = vmatprep.subr.mxu0 0.0
      %2777 = vmatpush1.msra.mxu0 %v376
      %2778 = vmatprep.subr.mxu0 0.0
      %2779 = vmatpush1.msra.mxu0 %v377
      %2780 = vmatprep.subr.mxu0 0.0
      %2781 = vmatpush1.msra.mxu0 %v378
      %2782 = vmatprep.subr.mxu0 0.0
      %2783 = vmatpush1.msra.mxu0 %v379
      %2784 = vmatprep.subr.mxu0 0.0
      %2785 = vmatpush1.msra.mxu0 %v380
      %2786 = vmatprep.subr.mxu0 0.0
      %2787 = vmatpush1.msra.mxu0 %v381
      %2788 = vmatprep.subr.mxu0 0.0
      %2789 = vmatpush1.msra.mxu0 %v382
      %2790 = vmatprep.subr.mxu0 0.0
      %2791 = vmatpush1.msra.mxu0 0.0
      %2792 = vmatprep.subr.mxu0 0.0
      %2793 = vmatpush1.msra.mxu0 0.0
      %2794 = vmatprep.subr.mxu0 0.0
      %2795 = vmatpush1.msra.mxu0 0.0
      %2796 = vmatprep.subr.mxu0 0.0
      %2797 = vmatpush1.msra.mxu0 0.0
      %2798 = vmatprep.subr.mxu0 0.0
      %2799 = vmatpush1.msra.mxu0 0.0
      %2800 = vmatprep.subr.mxu0 0.0
      %2801 = vmatpush1.msra.mxu0 0.0
      %2802 = vmatprep.subr.mxu0 0.0
      %2803 = vmatpush1.msra.mxu0 0.0
      %2804 = vmatprep.subr.mxu0 0.0
      %2805 = vmatpush1.msra.mxu0 0.0
      %2806 = vmatprep.subr.mxu0 0.0
      %2807 = vmatpush1.msra.mxu0 0.0
      %2808 = vmatprep.subr.mxu0 0.0
      %2809 = vmatpush1.msra.mxu0 0.0
      %2810 = vmatprep.subr.mxu0 0.0
      %2811 = vmatpush1.msra.mxu0 0.0
      %2812 = vmatprep.subr.mxu0 0.0
      %2813 = vmatpush1.msra.mxu0 0.0
      %2814 = vmatprep.subr.mxu0 0.0
      %2815 = vmatpush1.msra.mxu0 0.0
      %2816 = vmatprep.subr.mxu0 0.0
      %2817 = vmatpush1.msra.mxu0 0.0
      %2818 = vmatprep.subr.mxu0 0.0
      %2819 = vmatpush1.msra.mxu0 0.0
      %2820 = vmatprep.subr.mxu0 0.0
      %2821 = vmatpush1.msra.mxu0 0.0
      %2822 = vmatprep.mubr.f32.mxu0 0.0
      %2823 = vmatmul.mubr.f32.gmra.mrb[0].mxu0 %v2756
      %v2824 = vpop.f32.mrb[0].mxu0
      %v2825 = vadd.f32 0.0, %v2824
      %v2826 = vpop.f32.mrb[0].mxu0
      %2827 = vdwg.mxu0
      %v2829 = vrot.slane %v2825, 1
      %v2832 = vsub.f32 %v2751, %v2825
      %v2833 = vsub.f32 %v2752, %v2829
      %v2834 = vmul.f32 %v2832, %v2832
      %v2835 = vmul.f32 %v2833, %v2833
      %v2838 = vrot.slane %v2835, 7
      %v2839 = vsel %vm601, %v2838, %v2834
      %2841 = vmatprep.subr.mxu0 0.0
      %2842 = vmatpush1.msra.mxu0 %v367
      %2843 = vmatprep.subr.mxu0 0.0
      %2844 = vmatpush1.msra.mxu0 %v368
      %2845 = vmatprep.subr.mxu0 0.0
      %2846 = vmatpush1.msra.mxu0 %v369
      %2847 = vmatprep.subr.mxu0 0.0
      %2848 = vmatpush1.msra.mxu0 %v370
      %2849 = vmatprep.subr.mxu0 0.0
      %2850 = vmatpush1.msra.mxu0 %v371
      %2851 = vmatprep.subr.mxu0 0.0
      %2852 = vmatpush1.msra.mxu0 %v372
      %2853 = vmatprep.subr.mxu0 0.0
      %2854 = vmatpush1.msra.mxu0 %v373
      %2855 = vmatprep.subr.mxu0 0.0
      %2856 = vmatpush1.msra.mxu0 %v374
      %2857 = vmatprep.subr.mxu0 0.0
      %2858 = vmatpush1.msra.mxu0 %v375
      %2859 = vmatprep.subr.mxu0 0.0
      %2860 = vmatpush1.msra.mxu0 %v376
      %2861 = vmatprep.subr.mxu0 0.0
      %2862 = vmatpush1.msra.mxu0 %v377
      %2863 = vmatprep.subr.mxu0 0.0
      %2864 = vmatpush1.msra.mxu0 %v378
      %2865 = vmatprep.subr.mxu0 0.0
      %2866 = vmatpush1.msra.mxu0 %v379
      %2867 = vmatprep.subr.mxu0 0.0
      %2868 = vmatpush1.msra.mxu0 %v380
      %2869 = vmatprep.subr.mxu0 0.0
      %2870 = vmatpush1.msra.mxu0 %v381
      %2871 = vmatprep.subr.mxu0 0.0
      %2872 = vmatpush1.msra.mxu0 %v382
      %2873 = vmatprep.subr.mxu0 0.0
      %2874 = vmatpush1.msra.mxu0 0.0
      %2875 = vmatprep.subr.mxu0 0.0
      %2876 = vmatpush1.msra.mxu0 0.0
      %2877 = vmatprep.subr.mxu0 0.0
      %2878 = vmatpush1.msra.mxu0 0.0
      %2879 = vmatprep.subr.mxu0 0.0
      %2880 = vmatpush1.msra.mxu0 0.0
      %2881 = vmatprep.subr.mxu0 0.0
      %2882 = vmatpush1.msra.mxu0 0.0
      %2883 = vmatprep.subr.mxu0 0.0
      %2884 = vmatpush1.msra.mxu0 0.0
      %2885 = vmatprep.subr.mxu0 0.0
      %2886 = vmatpush1.msra.mxu0 0.0
      %2887 = vmatprep.subr.mxu0 0.0
      %2888 = vmatpush1.msra.mxu0 0.0
      %2889 = vmatprep.subr.mxu0 0.0
      %2890 = vmatpush1.msra.mxu0 0.0
      %2891 = vmatprep.subr.mxu0 0.0
      %2892 = vmatpush1.msra.mxu0 0.0
      %2893 = vmatprep.subr.mxu0 0.0
      %2894 = vmatpush1.msra.mxu0 0.0
      %2895 = vmatprep.subr.mxu0 0.0
      %2896 = vmatpush1.msra.mxu0 0.0
      %2897 = vmatprep.subr.mxu0 0.0
      %2898 = vmatpush1.msra.mxu0 0.0
      %2899 = vmatprep.subr.mxu0 0.0
      %2900 = vmatpush1.msra.mxu0 0.0
      %2901 = vmatprep.subr.mxu0 0.0
      %2902 = vmatpush1.msra.mxu0 0.0
      %2903 = vmatprep.subr.mxu0 0.0
      %2904 = vmatpush1.msra.mxu0 0.0
      %2905 = vmatprep.mubr.f32.mxu0 0.0
      %2906 = vmatmul.mubr.f32.gmra.mrb[0].mxu0 %v2839
      %v2907 = vpop.f32.mrb[0].mxu0
      %v2908 = vadd.f32 1e-05, %v2907
      %v2909 = vpop.f32.mrb[0].mxu0
      %2910 = vdwg.mxu0
      %v2911 = vrsqrt.pop %v2908
      %v2913 = vrot.slane %v2911, 1
      %v2916 = vmul.f32 %v2832, %v2911
      %v2917 = vmul.f32 %v2833, %v2913
      %v2918 = vmul.f32 %v2916, %v1221
      %v2919 = vmul.f32 %v2917, %v1221
      %v2920 = vadd.f32 %v2918, %v1229
      %v2921 = vadd.f32 %v2919, %v1229
      %v2922 = vxor.u32 %v2920, 2147483648
      %v2923 = vxor.u32 %v2921, 2147483648
      %v2924 = vmul.f32 %v2922, 1.442695
      %v2925 = vpow.pop %v2924
      %v2926 = vmul.f32 %v2923, 1.442695
      %v2927 = vpow.pop %v2926
      %v2928 = vadd.f32 %v2925, 1.0
      %v2929 = vadd.f32 %v2927, 1.0
      %v2930 = vrcp.pop %v2928
      %v2931 = vmul.f32 1.0, %v2930
      %v2932 = vrcp.pop %v2929
      %v2933 = vmul.f32 1.0, %v2932
      %v2934 = vtanh.pop %v2920
      %v2935 = vtanh.pop %v2921
      %v2936 = vmul.f32 %v2931, %v2545
      %v2937 = vmul.f32 %v2933, %v2546
      %2940 = vrot.lane.b32.xlu0 %v2934, 64
      %v2941 = vpop.permute.xlu0 %2940
      %2942 = vrot.lane.b32.xlu0 %v2935, 64
      %v2943 = vpop.permute.xlu0 %2942
      %v2946 = vmul.f32 %v2931, %v2941
      %v2947 = vmul.f32 %v2933, %v2943
      %2950 = vrot.lane.b32.xlu0 %v2946, 32
      %v2951 = vpop.permute.xlu0 %2950
      %2952 = vrot.lane.b32.xlu0 %v2947, 32
      %v2953 = vpop.permute.xlu0 %2952
      %v2956 = vadd.f32 %v2936, %v2951
      %v2957 = vadd.f32 %v2937, %v2953
      %v2960 = vrot.slane %v2957, 7
      %v2961 = vsel %vm601, %v2960, %v2956
      %2962 = vrot.lane.b32.xlu0 %v2961, 96
      %v2963 = vpop.permute.xlu0 %2962
      %v2965 = vsel %vm831, %v2963, 0.0
      %2966 = vadd.xlane.f32.xlu0 %v2965
      %v2967 = vpop.xlane.xlu0 %2966
      %v2968 = vmul.f32 %v2967, %v835
      %v2970 = vrot.slane %v2968, 1
      %v2973 = vsub.f32 %v2956, %v2968
      %v2974 = vsub.f32 %v2957, %v2970
      %v2975 = vmul.f32 %v2973, %v2973
      %v2976 = vmul.f32 %v2974, %v2974
      %v2979 = vrot.slane %v2976, 7
      %v2980 = vsel %vm601, %v2979, %v2975
      %2981 = vrot.lane.b32.xlu0 %v2980, 96
      %v2982 = vpop.permute.xlu0 %2981
      %v2984 = vsel %vm831, %v2982, 0.0
      %2985 = vadd.xlane.f32.xlu0 %v2984
      %v2986 = vpop.xlane.xlu0 %2985
      %v2987 = vmul.f32 %v2986, %v835
      %v2988 = vadd.f32 %v2987, 1e-05
      %v2989 = vrsqrt.pop %v2988
      %v2991 = vrot.slane %v2989, 1
      %v2994 = vmul.f32 %v2973, %v2989
      %v2995 = vmul.f32 %v2974, %v2991
      %v2996 = vmul.f32 %v2994, %v1313
      %v2997 = vmul.f32 %v2995, %v1313
      %v2998 = vadd.f32 %v2996, %v1323
      %v2999 = vadd.f32 %v2997, %v1323
      %v3000 = vtanh.pop %v2998
      %v3001 = vtanh.pop %v2999
      %3004 = vrot.lane.b32.xlu0 %v3000, 64
      %v3005 = vpop.permute.xlu0 %3004
      %3006 = vrot.lane.b32.xlu0 %v3001, 64
      %v3007 = vpop.permute.xlu0 %3006
      %v3010 = vmul.f32 %v2931, %v3005
      %v3011 = vmul.f32 %v2933, %v3007
      %v3014 = vrot.slane %v3011, 7
      %v3015 = vsel %vm601, %v3014, %v3010
      %3016 = vrot.lane.b32.xlu0 %v3015, 32
      %v3017 = vpop.permute.xlu0 %3016
      %s3019 = scalar_lea.vmem %s281, 4
      %3020 = vst.msk [vmem:[%s3019] sm:$0x3] %vm831, %v3017
      %s3021 = scalar_lea.vmem %s275, 6
      %v3022 = vld [vmem:[%s3021] sm:$0x3]
      %3023 = vrot.lane.b32.xlu0 %v3010, 32
      %v3024 = vpop.permute.xlu0 %3023
      %v3025 = vsel %vm441, %v3024, 0
      %3027 = vmatprep.subr.mxu0 0.0
      %3028 = vmatpush1.msra.mxu0 %v383
      %3029 = vmatprep.subr.mxu0 0.0
      %3030 = vmatpush1.msra.mxu0 %v384
      %3031 = vmatprep.subr.mxu0 0.0
      %3032 = vmatpush1.msra.mxu0 %v385
      %3033 = vmatprep.subr.mxu0 0.0
      %3034 = vmatpush1.msra.mxu0 %v386
      %3035 = vmatprep.subr.mxu0 0.0
      %3036 = vmatpush1.msra.mxu0 0.0
      %3037 = vmatprep.subr.mxu0 0.0
      %3038 = vmatpush1.msra.mxu0 0.0
      %3039 = vmatprep.subr.mxu0 0.0
      %3040 = vmatpush1.msra.mxu0 0.0
      %3041 = vmatprep.subr.mxu0 0.0
      %3042 = vmatpush1.msra.mxu0 0.0
      %3043 = vmatprep.subr.mxu0 0.0
      %3044 = vmatpush1.msra.mxu0 0.0
      %3045 = vmatprep.subr.mxu0 0.0
      %3046 = vmatpush1.msra.mxu0 0.0
      %3047 = vmatprep.subr.mxu0 0.0
      %3048 = vmatpush1.msra.mxu0 0.0
      %3049 = vmatprep.subr.mxu0 0.0
      %3050 = vmatpush1.msra.mxu0 0.0
      %3051 = vmatprep.subr.mxu0 0.0
      %3052 = vmatpush1.msra.mxu0 0.0
      %3053 = vmatprep.subr.mxu0 0.0
      %3054 = vmatpush1.msra.mxu0 0.0
      %3055 = vmatprep.subr.mxu0 0.0
      %3056 = vmatpush1.msra.mxu0 0.0
      %3057 = vmatprep.subr.mxu0 0.0
      %3058 = vmatpush1.msra.mxu0 0.0
      %3059 = vmatprep.subr.mxu0 0.0
      %3060 = vmatpush1.msra.mxu0 0.0
      %3061 = vmatprep.subr.mxu0 0.0
      %3062 = vmatpush1.msra.mxu0 0.0
      %3063 = vmatprep.subr.mxu0 0.0
      %3064 = vmatpush1.msra.mxu0 0.0
      %3065 = vmatprep.subr.mxu0 0.0
      %3066 = vmatpush1.msra.mxu0 0.0
      %3067 = vmatprep.subr.mxu0 0.0
      %3068 = vmatpush1.msra.mxu0 0.0
      %3069 = vmatprep.subr.mxu0 0.0
      %3070 = vmatpush1.msra.mxu0 0.0
      %3071 = vmatprep.subr.mxu0 0.0
      %3072 = vmatpush1.msra.mxu0 0.0
      %3073 = vmatprep.subr.mxu0 0.0
      %3074 = vmatpush1.msra.mxu0 0.0
      %3075 = vmatprep.subr.mxu0 0.0
      %3076 = vmatpush1.msra.mxu0 0.0
      %3077 = vmatprep.subr.mxu0 0.0
      %3078 = vmatpush1.msra.mxu0 0.0
      %3079 = vmatprep.subr.mxu0 0.0
      %3080 = vmatpush1.msra.mxu0 0.0
      %3081 = vmatprep.subr.mxu0 0.0
      %3082 = vmatpush1.msra.mxu0 0.0
      %3083 = vmatprep.subr.mxu0 0.0
      %3084 = vmatpush1.msra.mxu0 0.0
      %3085 = vmatprep.subr.mxu0 0.0
      %3086 = vmatpush1.msra.mxu0 0.0
      %3087 = vmatprep.subr.mxu0 0.0
      %3088 = vmatpush1.msra.mxu0 0.0
      %3089 = vmatprep.subr.mxu0 0.0
      %3090 = vmatpush1.msra.mxu0 0.0
      %3091 = vmatprep.mubr.f32.mxu0 0.0
      %3092 = vmatmul.mubr.f32.gmra.mrb[0].mxu0 %v3025
      %v3093 = vpop.f32.mrb[0].mxu0
      %v3094 = vadd.f32 0.0, %v3093
      %v3095 = vpop.f32.mrb[0].mxu0
      %3096 = vdwg.mxu0
      %3097 = vrot.lane.b32.xlu0 %v3011, 32
      %v3098 = vpop.permute.xlu0 %3097
      %v3099 = vsel %vm441, %v3098, 0
      %3101 = vmatprep.subr.mxu0 0.0
      %3102 = vmatpush1.msra.mxu0 %v387
      %3103 = vmatprep.subr.mxu0 0.0
      %3104 = vmatpush1.msra.mxu0 %v388
      %3105 = vmatprep.subr.mxu0 0.0
      %3106 = vmatpush1.msra.mxu0 %v389
      %3107 = vmatprep.subr.mxu0 0.0
      %3108 = vmatpush1.msra.mxu0 %v390
      %3109 = vmatprep.subr.mxu0 0.0
      %3110 = vmatpush1.msra.mxu0 0.0
      %3111 = vmatprep.subr.mxu0 0.0
      %3112 = vmatpush1.msra.mxu0 0.0
      %3113 = vmatprep.subr.mxu0 0.0
      %3114 = vmatpush1.msra.mxu0 0.0
      %3115 = vmatprep.subr.mxu0 0.0
      %3116 = vmatpush1.msra.mxu0 0.0
      %3117 = vmatprep.subr.mxu0 0.0
      %3118 = vmatpush1.msra.mxu0 0.0
      %3119 = vmatprep.subr.mxu0 0.0
      %3120 = vmatpush1.msra.mxu0 0.0
      %3121 = vmatprep.subr.mxu0 0.0
      %3122 = vmatpush1.msra.mxu0 0.0
      %3123 = vmatprep.subr.mxu0 0.0
      %3124 = vmatpush1.msra.mxu0 0.0
      %3125 = vmatprep.subr.mxu0 0.0
      %3126 = vmatpush1.msra.mxu0 0.0
      %3127 = vmatprep.subr.mxu0 0.0
      %3128 = vmatpush1.msra.mxu0 0.0
      %3129 = vmatprep.subr.mxu0 0.0
      %3130 = vmatpush1.msra.mxu0 0.0
      %3131 = vmatprep.subr.mxu0 0.0
      %3132 = vmatpush1.msra.mxu0 0.0
      %3133 = vmatprep.subr.mxu0 0.0
      %3134 = vmatpush1.msra.mxu0 0.0
      %3135 = vmatprep.subr.mxu0 0.0
      %3136 = vmatpush1.msra.mxu0 0.0
      %3137 = vmatprep.subr.mxu0 0.0
      %3138 = vmatpush1.msra.mxu0 0.0
      %3139 = vmatprep.subr.mxu0 0.0
      %3140 = vmatpush1.msra.mxu0 0.0
      %3141 = vmatprep.subr.mxu0 0.0
      %3142 = vmatpush1.msra.mxu0 0.0
      %3143 = vmatprep.subr.mxu0 0.0
      %3144 = vmatpush1.msra.mxu0 0.0
      %3145 = vmatprep.subr.mxu0 0.0
      %3146 = vmatpush1.msra.mxu0 0.0
      %3147 = vmatprep.subr.mxu0 0.0
      %3148 = vmatpush1.msra.mxu0 0.0
      %3149 = vmatprep.subr.mxu0 0.0
      %3150 = vmatpush1.msra.mxu0 0.0
      %3151 = vmatprep.subr.mxu0 0.0
      %3152 = vmatpush1.msra.mxu0 0.0
      %3153 = vmatprep.subr.mxu0 0.0
      %3154 = vmatpush1.msra.mxu0 0.0
      %3155 = vmatprep.subr.mxu0 0.0
      %3156 = vmatpush1.msra.mxu0 0.0
      %3157 = vmatprep.subr.mxu0 0.0
      %3158 = vmatpush1.msra.mxu0 0.0
      %3159 = vmatprep.subr.mxu0 0.0
      %3160 = vmatpush1.msra.mxu0 0.0
      %3161 = vmatprep.subr.mxu0 0.0
      %3162 = vmatpush1.msra.mxu0 0.0
      %3163 = vmatprep.subr.mxu0 0.0
      %3164 = vmatpush1.msra.mxu0 0.0
      %3165 = vmatprep.mubr.f32.mxu0 0.0
      %3166 = vmatmul.mubr.f32.gmra.mrb[0].mxu0 %v3099
      %v3167 = vpop.f32.mrb[0].mxu0
      %v3168 = vadd.f32 0.0, %v3167
      %v3169 = vpop.f32.mrb[0].mxu0
      %3170 = vdwg.mxu0
      %v3171 = vadd.f32 %v3094, %v400
      %v3172 = vadd.f32 %v3168, %v587
      %v3174 = vrot.slane %v3022, 1
      %v3177 = vadd.f32 %v3171, %v3022
      %v3178 = vadd.f32 %v3172, %v3174
      %v3181 = vrot.slane %v3178, 7
      %v3182 = vsel %vm601, %v3181, %v3177
      %3184 = vmatprep.subr.mxu0 0.0
      %3185 = vmatpush1.msra.mxu0 %v367
      %3186 = vmatprep.subr.mxu0 0.0
      %3187 = vmatpush1.msra.mxu0 %v368
      %3188 = vmatprep.subr.mxu0 0.0
      %3189 = vmatpush1.msra.mxu0 %v369
      %3190 = vmatprep.subr.mxu0 0.0
      %3191 = vmatpush1.msra.mxu0 %v370
      %3192 = vmatprep.subr.mxu0 0.0
      %3193 = vmatpush1.msra.mxu0 %v371
      %3194 = vmatprep.subr.mxu0 0.0
      %3195 = vmatpush1.msra.mxu0 %v372
      %3196 = vmatprep.subr.mxu0 0.0
      %3197 = vmatpush1.msra.mxu0 %v373
      %3198 = vmatprep.subr.mxu0 0.0
      %3199 = vmatpush1.msra.mxu0 %v374
      %3200 = vmatprep.subr.mxu0 0.0
      %3201 = vmatpush1.msra.mxu0 %v375
      %3202 = vmatprep.subr.mxu0 0.0
      %3203 = vmatpush1.msra.mxu0 %v376
      %3204 = vmatprep.subr.mxu0 0.0
      %3205 = vmatpush1.msra.mxu0 %v377
      %3206 = vmatprep.subr.mxu0 0.0
      %3207 = vmatpush1.msra.mxu0 %v378
      %3208 = vmatprep.subr.mxu0 0.0
      %3209 = vmatpush1.msra.mxu0 %v379
      %3210 = vmatprep.subr.mxu0 0.0
      %3211 = vmatpush1.msra.mxu0 %v380
      %3212 = vmatprep.subr.mxu0 0.0
      %3213 = vmatpush1.msra.mxu0 %v381
      %3214 = vmatprep.subr.mxu0 0.0
      %3215 = vmatpush1.msra.mxu0 %v382
      %3216 = vmatprep.subr.mxu0 0.0
      %3217 = vmatpush1.msra.mxu0 0.0
      %3218 = vmatprep.subr.mxu0 0.0
      %3219 = vmatpush1.msra.mxu0 0.0
      %3220 = vmatprep.subr.mxu0 0.0
      %3221 = vmatpush1.msra.mxu0 0.0
      %3222 = vmatprep.subr.mxu0 0.0
      %3223 = vmatpush1.msra.mxu0 0.0
      %3224 = vmatprep.subr.mxu0 0.0
      %3225 = vmatpush1.msra.mxu0 0.0
      %3226 = vmatprep.subr.mxu0 0.0
      %3227 = vmatpush1.msra.mxu0 0.0
      %3228 = vmatprep.subr.mxu0 0.0
      %3229 = vmatpush1.msra.mxu0 0.0
      %3230 = vmatprep.subr.mxu0 0.0
      %3231 = vmatpush1.msra.mxu0 0.0
      %3232 = vmatprep.subr.mxu0 0.0
      %3233 = vmatpush1.msra.mxu0 0.0
      %3234 = vmatprep.subr.mxu0 0.0
      %3235 = vmatpush1.msra.mxu0 0.0
      %3236 = vmatprep.subr.mxu0 0.0
      %3237 = vmatpush1.msra.mxu0 0.0
      %3238 = vmatprep.subr.mxu0 0.0
      %3239 = vmatpush1.msra.mxu0 0.0
      %3240 = vmatprep.subr.mxu0 0.0
      %3241 = vmatpush1.msra.mxu0 0.0
      %3242 = vmatprep.subr.mxu0 0.0
      %3243 = vmatpush1.msra.mxu0 0.0
      %3244 = vmatprep.subr.mxu0 0.0
      %3245 = vmatpush1.msra.mxu0 0.0
      %3246 = vmatprep.subr.mxu0 0.0
      %3247 = vmatpush1.msra.mxu0 0.0
      %3248 = vmatprep.mubr.f32.mxu0 0.0
      %3249 = vmatmul.mubr.f32.gmra.mrb[0].mxu0 %v3182
      %v3250 = vpop.f32.mrb[0].mxu0
      %v3251 = vadd.f32 0.0, %v3250
      %v3252 = vpop.f32.mrb[0].mxu0
      %3253 = vdwg.mxu0
      %v3255 = vrot.slane %v3251, 1
      %v3258 = vsub.f32 %v3177, %v3251
      %v3259 = vsub.f32 %v3178, %v3255
      %v3260 = vmul.f32 %v3258, %v3258
      %v3261 = vmul.f32 %v3259, %v3259
      %v3264 = vrot.slane %v3261, 7
      %v3265 = vsel %vm601, %v3264, %v3260
      %3267 = vmatprep.subr.mxu0 0.0
      %3268 = vmatpush1.msra.mxu0 %v367
      %3269 = vmatprep.subr.mxu0 0.0
      %3270 = vmatpush1.msra.mxu0 %v368
      %3271 = vmatprep.subr.mxu0 0.0
      %3272 = vmatpush1.msra.mxu0 %v369
      %3273 = vmatprep.subr.mxu0 0.0
      %3274 = vmatpush1.msra.mxu0 %v370
      %3275 = vmatprep.subr.mxu0 0.0
      %3276 = vmatpush1.msra.mxu0 %v371
      %3277 = vmatprep.subr.mxu0 0.0
      %3278 = vmatpush1.msra.mxu0 %v372
      %3279 = vmatprep.subr.mxu0 0.0
      %3280 = vmatpush1.msra.mxu0 %v373
      %3281 = vmatprep.subr.mxu0 0.0
      %3282 = vmatpush1.msra.mxu0 %v374
      %3283 = vmatprep.subr.mxu0 0.0
      %3284 = vmatpush1.msra.mxu0 %v375
      %3285 = vmatprep.subr.mxu0 0.0
      %3286 = vmatpush1.msra.mxu0 %v376
      %3287 = vmatprep.subr.mxu0 0.0
      %3288 = vmatpush1.msra.mxu0 %v377
      %3289 = vmatprep.subr.mxu0 0.0
      %3290 = vmatpush1.msra.mxu0 %v378
      %3291 = vmatprep.subr.mxu0 0.0
      %3292 = vmatpush1.msra.mxu0 %v379
      %3293 = vmatprep.subr.mxu0 0.0
      %3294 = vmatpush1.msra.mxu0 %v380
      %3295 = vmatprep.subr.mxu0 0.0
      %3296 = vmatpush1.msra.mxu0 %v381
      %3297 = vmatprep.subr.mxu0 0.0
      %3298 = vmatpush1.msra.mxu0 %v382
      %3299 = vmatprep.subr.mxu0 0.0
      %3300 = vmatpush1.msra.mxu0 0.0
      %3301 = vmatprep.subr.mxu0 0.0
      %3302 = vmatpush1.msra.mxu0 0.0
      %3303 = vmatprep.subr.mxu0 0.0
      %3304 = vmatpush1.msra.mxu0 0.0
      %3305 = vmatprep.subr.mxu0 0.0
      %3306 = vmatpush1.msra.mxu0 0.0
      %3307 = vmatprep.subr.mxu0 0.0
      %3308 = vmatpush1.msra.mxu0 0.0
      %3309 = vmatprep.subr.mxu0 0.0
      %3310 = vmatpush1.msra.mxu0 0.0
      %3311 = vmatprep.subr.mxu0 0.0
      %3312 = vmatpush1.msra.mxu0 0.0
      %3313 = vmatprep.subr.mxu0 0.0
      %3314 = vmatpush1.msra.mxu0 0.0
      %3315 = vmatprep.subr.mxu0 0.0
      %3316 = vmatpush1.msra.mxu0 0.0
      %3317 = vmatprep.subr.mxu0 0.0
      %3318 = vmatpush1.msra.mxu0 0.0
      %3319 = vmatprep.subr.mxu0 0.0
      %3320 = vmatpush1.msra.mxu0 0.0
      %3321 = vmatprep.subr.mxu0 0.0
      %3322 = vmatpush1.msra.mxu0 0.0
      %3323 = vmatprep.subr.mxu0 0.0
      %3324 = vmatpush1.msra.mxu0 0.0
      %3325 = vmatprep.subr.mxu0 0.0
      %3326 = vmatpush1.msra.mxu0 0.0
      %3327 = vmatprep.subr.mxu0 0.0
      %3328 = vmatpush1.msra.mxu0 0.0
      %3329 = vmatprep.subr.mxu0 0.0
      %3330 = vmatpush1.msra.mxu0 0.0
      %3331 = vmatprep.mubr.f32.mxu0 0.0
      %3332 = vmatmul.mubr.f32.gmra.mrb[0].mxu0 %v3265
      %v3333 = vpop.f32.mrb[0].mxu0
      %v3334 = vadd.f32 1e-05, %v3333
      %v3335 = vpop.f32.mrb[0].mxu0
      %3336 = vdwg.mxu0
      %v3337 = vrsqrt.pop %v3334
      %v3339 = vrot.slane %v3337, 1
      %v3342 = vmul.f32 %v3258, %v3337
      %v3343 = vmul.f32 %v3259, %v3339
      %v3344 = vmul.f32 %v3342, %v768
      %v3345 = vmul.f32 %v3343, %v768
      %v3346 = vadd.f32 %v3344, %v776
      %v3347 = vadd.f32 %v3345, %v776
      %v3348 = vxor.u32 %v3346, 2147483648
      %v3349 = vxor.u32 %v3347, 2147483648
      %v3350 = vmul.f32 %v3348, 1.442695
      %v3351 = vpow.pop %v3350
      %v3352 = vmul.f32 %v3349, 1.442695
      %v3353 = vpow.pop %v3352
      %v3354 = vadd.f32 %v3351, 1.0
      %v3355 = vadd.f32 %v3353, 1.0
      %v3356 = vrcp.pop %v3354
      %v3357 = vmul.f32 1.0, %v3356
      %v3358 = vrcp.pop %v3355
      %v3359 = vmul.f32 1.0, %v3358
      %v3360 = vtanh.pop %v3346
      %v3361 = vtanh.pop %v3347
      %v3362 = vmul.f32 %v3357, %v2956
      %v3363 = vmul.f32 %v3359, %v2957
      %3366 = vrot.lane.b32.xlu0 %v3360, 64
      %v3367 = vpop.permute.xlu0 %3366
      %3368 = vrot.lane.b32.xlu0 %v3361, 64
      %v3369 = vpop.permute.xlu0 %3368
      %v3372 = vmul.f32 %v3357, %v3367
      %v3373 = vmul.f32 %v3359, %v3369
      %3376 = vrot.lane.b32.xlu0 %v3372, 32
      %v3377 = vpop.permute.xlu0 %3376
      %3378 = vrot.lane.b32.xlu0 %v3373, 32
      %v3379 = vpop.permute.xlu0 %3378
      %v3382 = vadd.f32 %v3362, %v3377
      %v3383 = vadd.f32 %v3363, %v3379
      %v3386 = vrot.slane %v3383, 7
      %v3387 = vsel %vm601, %v3386, %v3382
      %3388 = vrot.lane.b32.xlu0 %v3387, 96
      %v3389 = vpop.permute.xlu0 %3388
      %v3391 = vsel %vm831, %v3389, 0.0
      %3392 = vadd.xlane.f32.xlu0 %v3391
      %v3393 = vpop.xlane.xlu0 %3392
      %v3394 = vmul.f32 %v3393, %v835
      %v3396 = vrot.slane %v3394, 1
      %v3399 = vsub.f32 %v3382, %v3394
      %v3400 = vsub.f32 %v3383, %v3396
      %v3401 = vmul.f32 %v3399, %v3399
      %v3402 = vmul.f32 %v3400, %v3400
      %v3405 = vrot.slane %v3402, 7
      %v3406 = vsel %vm601, %v3405, %v3401
      %3407 = vrot.lane.b32.xlu0 %v3406, 96
      %v3408 = vpop.permute.xlu0 %3407
      %v3410 = vsel %vm831, %v3408, 0.0
      %3411 = vadd.xlane.f32.xlu0 %v3410
      %v3412 = vpop.xlane.xlu0 %3411
      %v3413 = vmul.f32 %v3412, %v835
      %v3414 = vadd.f32 %v3413, 1e-05
      %v3415 = vrsqrt.pop %v3414
      %v3417 = vrot.slane %v3415, 1
      %v3420 = vmul.f32 %v3399, %v3415
      %v3421 = vmul.f32 %v3400, %v3417
      %v3422 = vmul.f32 %v3420, %v870
      %v3423 = vmul.f32 %v3421, %v870
      %v3424 = vadd.f32 %v3422, %v880
      %v3425 = vadd.f32 %v3423, %v880
      %v3426 = vtanh.pop %v3424
      %v3427 = vtanh.pop %v3425
      %3430 = vrot.lane.b32.xlu0 %v3426, 64
      %v3431 = vpop.permute.xlu0 %3430
      %3432 = vrot.lane.b32.xlu0 %v3427, 64
      %v3433 = vpop.permute.xlu0 %3432
      %v3436 = vmul.f32 %v3357, %v3431
      %v3437 = vmul.f32 %v3359, %v3433
      %3439 = vrot.lane.b32.xlu0 %v3436, 32
      %v3440 = vpop.permute.xlu0 %3439
      %v3441 = vsel %vm441, %v3440, 0
      %3443 = vmatprep.subr.mxu0 0.0
      %3444 = vmatpush1.msra.mxu0 %v392
      %3445 = vmatprep.subr.mxu0 0.0
      %3446 = vmatpush1.msra.mxu0 %v393
      %3447 = vmatprep.subr.mxu0 0.0
      %3448 = vmatpush1.msra.mxu0 %v394
      %3449 = vmatprep.subr.mxu0 0.0
      %3450 = vmatpush1.msra.mxu0 %v395
      %3451 = vmatprep.subr.mxu0 0.0
      %3452 = vmatpush1.msra.mxu0 0.0
      %3453 = vmatprep.subr.mxu0 0.0
      %3454 = vmatpush1.msra.mxu0 0.0
      %3455 = vmatprep.subr.mxu0 0.0
      %3456 = vmatpush1.msra.mxu0 0.0
      %3457 = vmatprep.subr.mxu0 0.0
      %3458 = vmatpush1.msra.mxu0 0.0
      %3459 = vmatprep.subr.mxu0 0.0
      %3460 = vmatpush1.msra.mxu0 0.0
      %3461 = vmatprep.subr.mxu0 0.0
      %3462 = vmatpush1.msra.mxu0 0.0
      %3463 = vmatprep.subr.mxu0 0.0
      %3464 = vmatpush1.msra.mxu0 0.0
      %3465 = vmatprep.subr.mxu0 0.0
      %3466 = vmatpush1.msra.mxu0 0.0
      %3467 = vmatprep.subr.mxu0 0.0
      %3468 = vmatpush1.msra.mxu0 0.0
      %3469 = vmatprep.subr.mxu0 0.0
      %3470 = vmatpush1.msra.mxu0 0.0
      %3471 = vmatprep.subr.mxu0 0.0
      %3472 = vmatpush1.msra.mxu0 0.0
      %3473 = vmatprep.subr.mxu0 0.0
      %3474 = vmatpush1.msra.mxu0 0.0
      %3475 = vmatprep.subr.mxu0 0.0
      %3476 = vmatpush1.msra.mxu0 0.0
      %3477 = vmatprep.subr.mxu0 0.0
      %3478 = vmatpush1.msra.mxu0 0.0
      %3479 = vmatprep.subr.mxu0 0.0
      %3480 = vmatpush1.msra.mxu0 0.0
      %3481 = vmatprep.subr.mxu0 0.0
      %3482 = vmatpush1.msra.mxu0 0.0
      %3483 = vmatprep.subr.mxu0 0.0
      %3484 = vmatpush1.msra.mxu0 0.0
      %3485 = vmatprep.subr.mxu0 0.0
      %3486 = vmatpush1.msra.mxu0 0.0
      %3487 = vmatprep.subr.mxu0 0.0
      %3488 = vmatpush1.msra.mxu0 0.0
      %3489 = vmatprep.subr.mxu0 0.0
      %3490 = vmatpush1.msra.mxu0 0.0
      %3491 = vmatprep.subr.mxu0 0.0
      %3492 = vmatpush1.msra.mxu0 0.0
      %3493 = vmatprep.subr.mxu0 0.0
      %3494 = vmatpush1.msra.mxu0 0.0
      %3495 = vmatprep.subr.mxu0 0.0
      %3496 = vmatpush1.msra.mxu0 0.0
      %3497 = vmatprep.subr.mxu0 0.0
      %3498 = vmatpush1.msra.mxu0 0.0
      %3499 = vmatprep.subr.mxu0 0.0
      %3500 = vmatpush1.msra.mxu0 0.0
      %3501 = vmatprep.subr.mxu0 0.0
      %3502 = vmatpush1.msra.mxu0 0.0
      %3503 = vmatprep.subr.mxu0 0.0
      %3504 = vmatpush1.msra.mxu0 0.0
      %3505 = vmatprep.subr.mxu0 0.0
      %3506 = vmatpush1.msra.mxu0 0.0
      %3507 = vmatprep.mubr.f32.mxu0 0.0
      %3508 = vmatmul.mubr.f32.gmra.mrb[0].mxu0 %v3441
      %v3509 = vpop.f32.mrb[0].mxu0
      %v3510 = vadd.f32 0.0, %v3509
      %v3511 = vpop.f32.mrb[0].mxu0
      %3512 = vdwg.mxu0
      %3514 = vrot.lane.b32.xlu0 %v3437, 32
      %v3515 = vpop.permute.xlu0 %3514
      %v3516 = vsel %vm441, %v3515, 0
      %3518 = vmatprep.subr.mxu0 0.0
      %3519 = vmatpush1.msra.mxu0 %v396
      %3520 = vmatprep.subr.mxu0 0.0
      %3521 = vmatpush1.msra.mxu0 %v397
      %3522 = vmatprep.subr.mxu0 0.0
      %3523 = vmatpush1.msra.mxu0 %v398
      %3524 = vmatprep.subr.mxu0 0.0
      %3525 = vmatpush1.msra.mxu0 %v399
      %3526 = vmatprep.subr.mxu0 0.0
      %3527 = vmatpush1.msra.mxu0 0.0
      %3528 = vmatprep.subr.mxu0 0.0
      %3529 = vmatpush1.msra.mxu0 0.0
      %3530 = vmatprep.subr.mxu0 0.0
      %3531 = vmatpush1.msra.mxu0 0.0
      %3532 = vmatprep.subr.mxu0 0.0
      %3533 = vmatpush1.msra.mxu0 0.0
      %3534 = vmatprep.subr.mxu0 0.0
      %3535 = vmatpush1.msra.mxu0 0.0
      %3536 = vmatprep.subr.mxu0 0.0
      %3537 = vmatpush1.msra.mxu0 0.0
      %3538 = vmatprep.subr.mxu0 0.0
      %3539 = vmatpush1.msra.mxu0 0.0
      %3540 = vmatprep.subr.mxu0 0.0
      %3541 = vmatpush1.msra.mxu0 0.0
      %3542 = vmatprep.subr.mxu0 0.0
      %3543 = vmatpush1.msra.mxu0 0.0
      %3544 = vmatprep.subr.mxu0 0.0
      %3545 = vmatpush1.msra.mxu0 0.0
      %3546 = vmatprep.subr.mxu0 0.0
      %3547 = vmatpush1.msra.mxu0 0.0
      %3548 = vmatprep.subr.mxu0 0.0
      %3549 = vmatpush1.msra.mxu0 0.0
      %3550 = vmatprep.subr.mxu0 0.0
      %3551 = vmatpush1.msra.mxu0 0.0
      %3552 = vmatprep.subr.mxu0 0.0
      %3553 = vmatpush1.msra.mxu0 0.0
      %3554 = vmatprep.subr.mxu0 0.0
      %3555 = vmatpush1.msra.mxu0 0.0
      %3556 = vmatprep.subr.mxu0 0.0
      %3557 = vmatpush1.msra.mxu0 0.0
      %3558 = vmatprep.subr.mxu0 0.0
      %3559 = vmatpush1.msra.mxu0 0.0
      %3560 = vmatprep.subr.mxu0 0.0
      %3561 = vmatpush1.msra.mxu0 0.0
      %3562 = vmatprep.subr.mxu0 0.0
      %3563 = vmatpush1.msra.mxu0 0.0
      %3564 = vmatprep.subr.mxu0 0.0
      %3565 = vmatpush1.msra.mxu0 0.0
      %3566 = vmatprep.subr.mxu0 0.0
      %3567 = vmatpush1.msra.mxu0 0.0
      %3568 = vmatprep.subr.mxu0 0.0
      %3569 = vmatpush1.msra.mxu0 0.0
      %3570 = vmatprep.subr.mxu0 0.0
      %3571 = vmatpush1.msra.mxu0 0.0
      %3572 = vmatprep.subr.mxu0 0.0
      %3573 = vmatpush1.msra.mxu0 0.0
      %3574 = vmatprep.subr.mxu0 0.0
      %3575 = vmatpush1.msra.mxu0 0.0
      %3576 = vmatprep.subr.mxu0 0.0
      %3577 = vmatpush1.msra.mxu0 0.0
      %3578 = vmatprep.subr.mxu0 0.0
      %3579 = vmatpush1.msra.mxu0 0.0
      %3580 = vmatprep.subr.mxu0 0.0
      %3581 = vmatpush1.msra.mxu0 0.0
      %3582 = vmatprep.mubr.f32.mxu0 0.0
      %3583 = vmatmul.mubr.f32.gmra.mrb[0].mxu0 %v3516
      %v3584 = vpop.f32.mrb[0].mxu0
      %v3585 = vadd.f32 0.0, %v3584
      %v3586 = vpop.f32.mrb[0].mxu0
      %3587 = vdwg.mxu0
      %v3588 = vadd.f32 %v3510, %v402
      %v3589 = vadd.f32 %v3585, %v1047
      %v3592 = vrot.slane %v3589, 7
      %v3593 = vsel %vm601, %v3592, %v3588
      %3595 = vmatprep.subr.mxu0 0.0
      %3596 = vmatpush1.msra.mxu0 %v367
      %3597 = vmatprep.subr.mxu0 0.0
      %3598 = vmatpush1.msra.mxu0 %v368
      %3599 = vmatprep.subr.mxu0 0.0
      %3600 = vmatpush1.msra.mxu0 %v369
      %3601 = vmatprep.subr.mxu0 0.0
      %3602 = vmatpush1.msra.mxu0 %v370
      %3603 = vmatprep.subr.mxu0 0.0
      %3604 = vmatpush1.msra.mxu0 %v371
      %3605 = vmatprep.subr.mxu0 0.0
      %3606 = vmatpush1.msra.mxu0 %v372
      %3607 = vmatprep.subr.mxu0 0.0
      %3608 = vmatpush1.msra.mxu0 %v373
      %3609 = vmatprep.subr.mxu0 0.0
      %3610 = vmatpush1.msra.mxu0 %v374
      %3611 = vmatprep.subr.mxu0 0.0
      %3612 = vmatpush1.msra.mxu0 %v375
      %3613 = vmatprep.subr.mxu0 0.0
      %3614 = vmatpush1.msra.mxu0 %v376
      %3615 = vmatprep.subr.mxu0 0.0
      %3616 = vmatpush1.msra.mxu0 %v377
      %3617 = vmatprep.subr.mxu0 0.0
      %3618 = vmatpush1.msra.mxu0 %v378
      %3619 = vmatprep.subr.mxu0 0.0
      %3620 = vmatpush1.msra.mxu0 %v379
      %3621 = vmatprep.subr.mxu0 0.0
      %3622 = vmatpush1.msra.mxu0 %v380
      %3623 = vmatprep.subr.mxu0 0.0
      %3624 = vmatpush1.msra.mxu0 %v381
      %3625 = vmatprep.subr.mxu0 0.0
      %3626 = vmatpush1.msra.mxu0 %v382
      %3627 = vmatprep.subr.mxu0 0.0
      %3628 = vmatpush1.msra.mxu0 0.0
      %3629 = vmatprep.subr.mxu0 0.0
      %3630 = vmatpush1.msra.mxu0 0.0
      %3631 = vmatprep.subr.mxu0 0.0
      %3632 = vmatpush1.msra.mxu0 0.0
      %3633 = vmatprep.subr.mxu0 0.0
      %3634 = vmatpush1.msra.mxu0 0.0
      %3635 = vmatprep.subr.mxu0 0.0
      %3636 = vmatpush1.msra.mxu0 0.0
      %3637 = vmatprep.subr.mxu0 0.0
      %3638 = vmatpush1.msra.mxu0 0.0
      %3639 = vmatprep.subr.mxu0 0.0
      %3640 = vmatpush1.msra.mxu0 0.0
      %3641 = vmatprep.subr.mxu0 0.0
      %3642 = vmatpush1.msra.mxu0 0.0
      %3643 = vmatprep.subr.mxu0 0.0
      %3644 = vmatpush1.msra.mxu0 0.0
      %3645 = vmatprep.subr.mxu0 0.0
      %3646 = vmatpush1.msra.mxu0 0.0
      %3647 = vmatprep.subr.mxu0 0.0
      %3648 = vmatpush1.msra.mxu0 0.0
      %3649 = vmatprep.subr.mxu0 0.0
      %3650 = vmatpush1.msra.mxu0 0.0
      %3651 = vmatprep.subr.mxu0 0.0
      %3652 = vmatpush1.msra.mxu0 0.0
      %3653 = vmatprep.subr.mxu0 0.0
      %3654 = vmatpush1.msra.mxu0 0.0
      %3655 = vmatprep.subr.mxu0 0.0
      %3656 = vmatpush1.msra.mxu0 0.0
      %3657 = vmatprep.subr.mxu0 0.0
      %3658 = vmatpush1.msra.mxu0 0.0
      %3659 = vmatprep.mubr.f32.mxu0 0.0
      %3660 = vmatmul.mubr.f32.gmra.mrb[0].mxu0 %v3593
      %v3661 = vpop.f32.mrb[0].mxu0
      %v3662 = vadd.f32 0.0, %v3661
      %v3663 = vpop.f32.mrb[0].mxu0
      %3664 = vdwg.mxu0
      %v3666 = vrot.slane %v3662, 1
      %v3669 = vsub.f32 %v3588, %v3662
      %v3670 = vsub.f32 %v3589, %v3666
      %v3671 = vmul.f32 %v3669, %v3669
      %v3672 = vmul.f32 %v3670, %v3670
      %v3675 = vrot.slane %v3672, 7
      %v3676 = vsel %vm601, %v3675, %v3671
      %3678 = vmatprep.subr.mxu0 0.0
      %3679 = vmatpush1.msra.mxu0 %v367
      %3680 = vmatprep.subr.mxu0 0.0
      %3681 = vmatpush1.msra.mxu0 %v368
      %3682 = vmatprep.subr.mxu0 0.0
      %3683 = vmatpush1.msra.mxu0 %v369
      %3684 = vmatprep.subr.mxu0 0.0
      %3685 = vmatpush1.msra.mxu0 %v370
      %3686 = vmatprep.subr.mxu0 0.0
      %3687 = vmatpush1.msra.mxu0 %v371
      %3688 = vmatprep.subr.mxu0 0.0
      %3689 = vmatpush1.msra.mxu0 %v372
      %3690 = vmatprep.subr.mxu0 0.0
      %3691 = vmatpush1.msra.mxu0 %v373
      %3692 = vmatprep.subr.mxu0 0.0
      %3693 = vmatpush1.msra.mxu0 %v374
      %3694 = vmatprep.subr.mxu0 0.0
      %3695 = vmatpush1.msra.mxu0 %v375
      %3696 = vmatprep.subr.mxu0 0.0
      %3697 = vmatpush1.msra.mxu0 %v376
      %3698 = vmatprep.subr.mxu0 0.0
      %3699 = vmatpush1.msra.mxu0 %v377
      %3700 = vmatprep.subr.mxu0 0.0
      %3701 = vmatpush1.msra.mxu0 %v378
      %3702 = vmatprep.subr.mxu0 0.0
      %3703 = vmatpush1.msra.mxu0 %v379
      %3704 = vmatprep.subr.mxu0 0.0
      %3705 = vmatpush1.msra.mxu0 %v380
      %3706 = vmatprep.subr.mxu0 0.0
      %3707 = vmatpush1.msra.mxu0 %v381
      %3708 = vmatprep.subr.mxu0 0.0
      %3709 = vmatpush1.msra.mxu0 %v382
      %3710 = vmatprep.subr.mxu0 0.0
      %3711 = vmatpush1.msra.mxu0 0.0
      %3712 = vmatprep.subr.mxu0 0.0
      %3713 = vmatpush1.msra.mxu0 0.0
      %3714 = vmatprep.subr.mxu0 0.0
      %3715 = vmatpush1.msra.mxu0 0.0
      %3716 = vmatprep.subr.mxu0 0.0
      %3717 = vmatpush1.msra.mxu0 0.0
      %3718 = vmatprep.subr.mxu0 0.0
      %3719 = vmatpush1.msra.mxu0 0.0
      %3720 = vmatprep.subr.mxu0 0.0
      %3721 = vmatpush1.msra.mxu0 0.0
      %3722 = vmatprep.subr.mxu0 0.0
      %3723 = vmatpush1.msra.mxu0 0.0
      %3724 = vmatprep.subr.mxu0 0.0
      %3725 = vmatpush1.msra.mxu0 0.0
      %3726 = vmatprep.subr.mxu0 0.0
      %3727 = vmatpush1.msra.mxu0 0.0
      %3728 = vmatprep.subr.mxu0 0.0
      %3729 = vmatpush1.msra.mxu0 0.0
      %3730 = vmatprep.subr.mxu0 0.0
      %3731 = vmatpush1.msra.mxu0 0.0
      %3732 = vmatprep.subr.mxu0 0.0
      %3733 = vmatpush1.msra.mxu0 0.0
      %3734 = vmatprep.subr.mxu0 0.0
      %3735 = vmatpush1.msra.mxu0 0.0
      %3736 = vmatprep.subr.mxu0 0.0
      %3737 = vmatpush1.msra.mxu0 0.0
      %3738 = vmatprep.subr.mxu0 0.0
      %3739 = vmatpush1.msra.mxu0 0.0
      %3740 = vmatprep.subr.mxu0 0.0
      %3741 = vmatpush1.msra.mxu0 0.0
      %3742 = vmatprep.mubr.f32.mxu0 0.0
      %3743 = vmatmul.mubr.f32.gmra.mrb[0].mxu0 %v3676
      %v3744 = vpop.f32.mrb[0].mxu0
      %v3745 = vadd.f32 1e-05, %v3744
      %v3746 = vpop.f32.mrb[0].mxu0
      %3747 = vdwg.mxu0
      %v3748 = vrsqrt.pop %v3745
      %v3750 = vrot.slane %v3748, 1
      %v3753 = vmul.f32 %v3669, %v3748
      %v3754 = vmul.f32 %v3670, %v3750
      %v3755 = vmul.f32 %v3753, %v1221
      %v3756 = vmul.f32 %v3754, %v1221
      %v3757 = vadd.f32 %v3755, %v1229
      %v3758 = vadd.f32 %v3756, %v1229
      %v3759 = vxor.u32 %v3757, 2147483648
      %v3760 = vxor.u32 %v3758, 2147483648
      %v3761 = vmul.f32 %v3759, 1.442695
      %v3762 = vpow.pop %v3761
      %v3763 = vmul.f32 %v3760, 1.442695
      %v3764 = vpow.pop %v3763
      %v3765 = vadd.f32 %v3762, 1.0
      %v3766 = vadd.f32 %v3764, 1.0
      %v3767 = vrcp.pop %v3765
      %v3768 = vmul.f32 1.0, %v3767
      %v3769 = vrcp.pop %v3766
      %v3770 = vmul.f32 1.0, %v3769
      %v3771 = vtanh.pop %v3757
      %v3772 = vtanh.pop %v3758
      %v3773 = vmul.f32 %v3768, %v3382
      %v3774 = vmul.f32 %v3770, %v3383
      %3777 = vrot.lane.b32.xlu0 %v3771, 64
      %v3778 = vpop.permute.xlu0 %3777
      %3779 = vrot.lane.b32.xlu0 %v3772, 64
      %v3780 = vpop.permute.xlu0 %3779
      %v3783 = vmul.f32 %v3768, %v3778
      %v3784 = vmul.f32 %v3770, %v3780
      %3787 = vrot.lane.b32.xlu0 %v3783, 32
      %v3788 = vpop.permute.xlu0 %3787
      %3789 = vrot.lane.b32.xlu0 %v3784, 32
      %v3790 = vpop.permute.xlu0 %3789
      %v3793 = vadd.f32 %v3773, %v3788
      %v3794 = vadd.f32 %v3774, %v3790
      %v3797 = vrot.slane %v3794, 7
      %v3798 = vsel %vm601, %v3797, %v3793
      %3799 = vrot.lane.b32.xlu0 %v3798, 96
      %v3800 = vpop.permute.xlu0 %3799
      %v3802 = vsel %vm831, %v3800, 0.0
      %3803 = vadd.xlane.f32.xlu0 %v3802
      %v3804 = vpop.xlane.xlu0 %3803
      %v3805 = vmul.f32 %v3804, %v835
      %v3807 = vrot.slane %v3805, 1
      %v3810 = vsub.f32 %v3793, %v3805
      %v3811 = vsub.f32 %v3794, %v3807
      %v3812 = vmul.f32 %v3810, %v3810
      %v3813 = vmul.f32 %v3811, %v3811
      %v3816 = vrot.slane %v3813, 7
      %v3817 = vsel %vm601, %v3816, %v3812
      %3818 = vrot.lane.b32.xlu0 %v3817, 96
      %v3819 = vpop.permute.xlu0 %3818
      %v3821 = vsel %vm831, %v3819, 0.0
      %3822 = vadd.xlane.f32.xlu0 %v3821
      %v3823 = vpop.xlane.xlu0 %3822
      %v3824 = vmul.f32 %v3823, %v835
      %v3825 = vadd.f32 %v3824, 1e-05
      %v3826 = vrsqrt.pop %v3825
      %v3828 = vrot.slane %v3826, 1
      %v3831 = vmul.f32 %v3810, %v3826
      %v3832 = vmul.f32 %v3811, %v3828
      %v3833 = vmul.f32 %v3831, %v1313
      %v3834 = vmul.f32 %v3832, %v1313
      %v3835 = vadd.f32 %v3833, %v1323
      %v3836 = vadd.f32 %v3834, %v1323
      %v3837 = vtanh.pop %v3835
      %v3838 = vtanh.pop %v3836
      %3841 = vrot.lane.b32.xlu0 %v3837, 64
      %v3842 = vpop.permute.xlu0 %3841
      %3843 = vrot.lane.b32.xlu0 %v3838, 64
      %v3844 = vpop.permute.xlu0 %3843
      %v3847 = vmul.f32 %v3768, %v3842
      %v3848 = vmul.f32 %v3770, %v3844
      %v3851 = vrot.slane %v3848, 7
      %v3852 = vsel %vm601, %v3851, %v3847
      %3853 = vrot.lane.b32.xlu0 %v3852, 32
      %v3854 = vpop.permute.xlu0 %3853
      %s3856 = scalar_lea.vmem %s281, 6
      %3857 = vst.msk [vmem:[%s3856] sm:$0x3] %vm831, %v3854
      %3858 = vst.msk [vmem:[#allocation3] sm:$0x3] %vm831, %v3854
      %3859 = vst.msk [vmem:[#allocation4] sm:$0x3] %vm831, %v3800
      %s3860 = smul.u32 4, %s19
      %p3861 = scmp.lt.s32.totalorder %s3860, 7
      %s3862 = scalar_select %p3861, %s3860, 7
      %s3863 = smul.addr %s3862, 2
      %s3864 = scalar_lea.vmem %s8, %s3863
      // Predicated region
      $region87: #{custom_lstm_forward.1} parent=47 // pred_check
        %p3865 = pneg %p189
      $region88: #{custom_lstm_forward.1} parent=47 // pred_check_branch
        %3867 = sbr.rel (%p3865) target = $region90
      $region89: #{custom_lstm_forward.1} parent=47 // pred_region
        %s3868 = smul.u32 4, %s19
      $region90: #{custom_lstm_forward.1} parent=47 // pred_fallthru
        _
    $region48: #{custom_lstm_forward.1} parent=5 // pred_fallthru
      _
    %p3869 = scmp.le.s32.totalorder 2, %s14
    // Predicated region
    $region91: #{custom_lstm_forward.1} parent=5 // pred_check
      %p3870 = pneg %p3869
    $region92: #{custom_lstm_forward.1} parent=5 // pred_check_branch
      %3872 = sbr.rel (%p3870) target = $region94
    $region93: #{custom_lstm_forward.1} parent=5 // pred_region
      %s3873 = ssub.s32 %s14, 2
      // Predicated region
      $region95: #{custom_lstm_forward.1} parent=93 // pred_check
        %p3874 = pneg %p195
      $region96: #{custom_lstm_forward.1} parent=93 // pred_check_branch
        %3876 = sbr.rel (%p3874) target = $region98
      $region97: #{custom_lstm_forward.1} parent=93 // pred_region
        %s3877 = smul.u32 4, %s20
        %p3878 = scmp.lt.s32.totalorder %s3877, 7
        %s3879 = scalar_select %p3878, %s3877, 7
        %s3880 = smul.addr %s3879, 2
        %s3881 = scalar_lea.vmem %s8, %s3880
      $region98: #{custom_lstm_forward.1} parent=93 // pred_fallthru
        _
    $region94: #{custom_lstm_forward.1} parent=5 // pred_fallthru
      _
  $region6: #{custom_lstm_forward.1} parent=0 // loop_footer
    %s18 = sadd.s32 1, %s14
  $region7: #{custom_lstm_forward.1} parent=0 // loop_footer_branch
    %13 = sbr.rel target = $region3
  $region8: #{custom_lstm_forward.1} parent=0 // loop_exit
    _
  %3882 = vsyncmov [#allocation5]
  %s3883 = vpop.sfrf %3882
  %p3884 = scmp.eq.s32.totalorder %s3883, 0
  %p3885 = pneg %p3884
  %3887 = shalt.err (%p3885)

</llo_original>
